<compile_context>
chip_gen: v7x
topology: tpu7x:2x2x1
jax: 0.10.0
libtpu: 0.0.40
codegen_flags: <defaults>
</compile_context>

<pallas_src>
import jax
import jax.numpy as jnp
from jax.experimental import pallas as pl
from jax.experimental.pallas import tpu as pltpu

BN_EPS = 1e-5


def _round_up(v, m):
    return (v + m - 1) // m * m


def _pick_node_tile(n, tile_n):
    n128 = _round_up(n, 128)
    # Keep >= 2 destination tiles when the graph allows it (v7x has 2 TensorCores and the dst
    # grid axis is "parallel"); keep the tile a multiple of 128 so adjacency lane dims stay
    # aligned.  v5e/v6e (1 TC) simply get slightly smaller tiles at tiny N, which is harmless.
    tn = min(tile_n, max(128, n128 // 2))
    return max(128, (tn // 128) * 128)


# --------------------------------------------------------------------------------------
# Kernel 1: agg = A @ x (accumulated over src tiles) -> Linear1 -> ReLU, + BN1 partial stats
# Grid: (dst tiles [parallel], src tiles [arbitrary]).  Accumulator lives in VMEM scratch.
# --------------------------------------------------------------------------------------
def _agg_linear1_kernel(adj_ref, x_ref, mask_ref, w1_ref, b1_ref,
                        h1_ref, stat_ref, acc_ref):
    # program_id / num_programs only at kernel top level (never inside pl.when bodies).
    k = pl.program_id(1)
    nk = pl.num_programs(1)

    @pl.when(k == 0)
    def _():
        acc_ref[...] = jnp.zeros_like(acc_ref)

    # f32 adjacency tile straight into the MXU (no dtype conversion, f32 accumulation).
    acc_ref[...] += jnp.dot(adj_ref[...], x_ref[...],
                            preferred_element_type=jnp.float32)

    @pl.when(k == nk - 1)
    def _():
        h1 = jnp.dot(acc_ref[...], w1_ref[...],
                     preferred_element_type=jnp.float32) + b1_ref[...]
        h1 = jnp.maximum(h1, 0.0)
        h1_ref[...] = h1

        # Padded destination rows are removed from the BN statistics via the precomputed mask.
        h1m = h1 * mask_ref[...]
        s = jnp.sum(h1m, axis=0, keepdims=True)
        sq = jnp.sum(h1m * h1m, axis=0, keepdims=True)
        stat_ref[...] = jnp.concatenate([s, sq], axis=0)[None]      # [1, 2, Co]


# --------------------------------------------------------------------------------------
# Kernel 2: apply BN1 (precomputed scale/shift) -> Linear2 -> ReLU, + BN2 partial stats
# Output h2 is written in place over h1 (input_output_aliases).
# --------------------------------------------------------------------------------------
def _bn1_linear2_kernel(h1_ref, mask_ref, sc1_ref, sh1_ref, w2_ref, b2_ref,
                        h2_ref, stat_ref):
    y1 = h1_ref[...] * sc1_ref[...] + sh1_ref[...]
    h2 = jnp.dot(y1, w2_ref[...], preferred_element_type=jnp.float32) + b2_ref[...]
    h2 = jnp.maximum(h2, 0.0)
    h2_ref[...] = h2

    h2m = h2 * mask_ref[...]
    s = jnp.sum(h2m, axis=0, keepdims=True)
    sq = jnp.sum(h2m * h2m, axis=0, keepdims=True)
    stat_ref[...] = jnp.concatenate([s, sq], axis=0)[None]


# --------------------------------------------------------------------------------------
# Kernel 3: apply BN2 (scale/shift), in place over h2.
# --------------------------------------------------------------------------------------
def _bn2_kernel(h2_ref, sc2_ref, sh2_ref, o_ref):
    o_ref[...] = h2_ref[...] * sc2_ref[...] + sh2_ref[...]


def gin_block_forward(x, edge_index, params, *, eps_gin, tile_n=512):
    """x: [N, Cin] f32, edge_index: [2, E] int32 (row 0 = source, row 1 = target)."""
    n, c_in = x.shape
    c_out = params["w1"].shape[1]
    f32 = jnp.float32

    ci = _round_up(max(c_in, 1), 128)       # padded input width  (lane-dense)
    co = _round_up(max(c_out, 1), 128)      # padded output width (lane-dense)

    tn = _pick_node_tile(n, tile_n)         # one node tile for dst, src and kernels 2/3
    n_pad = _round_up(n, tn)
    nm = n_pad // tn                        # dst tiles ("parallel")
    nk = n_pad // tn                        # src tiles ("arbitrary", contraction -> last axis)

    # ---- glue: dense adjacency A[dst, src] built once, directly in f32, with the
    #      (1 + eps) self term folded into the diagonal (exact in f32 for any eps). ----
    src, dst = edge_index[0], edge_index[1]
    adj = jnp.zeros((n_pad, n_pad), f32).at[dst, src].add(1.0)
    adj = adj.at[jnp.arange(n), jnp.arange(n)].add(1.0 + eps_gin)

    # ---- glue: zero-pad activations / parameters, row-validity mask for BN statistics. ----
    xp = jnp.zeros((n_pad, ci), f32).at[:n, :c_in].set(x)
    mask = (jnp.arange(n_pad) < n).astype(f32)[:, None]             # [n_pad, 1]

    w1 = jnp.zeros((ci, co), f32).at[:c_in, :c_out].set(params["w1"])
    b1 = jnp.zeros((1, co), f32).at[:, :c_out].set(params["b1"])
    g1 = jnp.zeros((1, co), f32).at[:, :c_out].set(params["g1"])
    be1 = jnp.zeros((1, co), f32).at[:, :c_out].set(params["be1"])
    w2 = jnp.zeros((co, co), f32).at[:c_out, :c_out].set(params["w2"])
    b2 = jnp.zeros((1, co), f32).at[:, :c_out].set(params["b2"])
    g2 = jnp.zeros((1, co), f32).at[:, :c_out].set(params["g2"])
    be2 = jnp.zeros((1, co), f32).at[:, :c_out].set(params["be2"])

    # ============ kernel 1: tiled A @ x + Linear1 + ReLU + BN1 partial stats ============
    flops1 = 2 * n_pad * n_pad * ci + 2 * n_pad * ci * co
    bytes1 = 4 * (n_pad * n_pad + n_pad * ci + n_pad * co + ci * co + 2 * co + n_pad)
    h1, stats1 = pl.pallas_call(
        _agg_linear1_kernel,
        out_shape=(jax.ShapeDtypeStruct((n_pad, co), f32),
                   jax.ShapeDtypeStruct((nm, 2, co), f32)),
        grid_spec=pltpu.PrefetchScalarGridSpec(
            num_scalar_prefetch=0,
            grid=(nm, nk),
            in_specs=[
                pl.BlockSpec((tn, tn), lambda i, k: (i, k)),     # adjacency tile
                pl.BlockSpec((tn, ci), lambda i, k: (k, 0)),     # source-node features
                pl.BlockSpec((tn, 1), lambda i, k: (i, 0)),      # dst row-validity mask
                pl.BlockSpec((ci, co), lambda i, k: (0, 0)),     # w1 (resident across grid)
                pl.BlockSpec((1, co), lambda i, k: (0, 0)),      # b1 (resident)
            ],
            out_specs=[
                pl.BlockSpec((tn, co), lambda i, k: (i, 0)),      # h1 tile (resident over k)
                pl.BlockSpec((1, 2, co), lambda i, k: (i, 0, 0)), # per-tile (sum, sumsq)
            ],
            scratch_shapes=[pltpu.VMEM((tn, ci), f32)],           # A@x accumulator (width ci)
        ),
        compiler_params=pltpu.CompilerParams(
            dimension_semantics=("parallel", "arbitrary")),
        cost_estimate=pl.CostEstimate(flops=flops1, transcendentals=0,
                                      bytes_accessed=bytes1),
    )(adj, xp, mask, w1, b1)

    # ---- tiny glue (O(tiles * C)): finalize exact BN1 batch stats into scale/shift. ----
    s1 = jnp.sum(stats1[:, 0, :], axis=0, keepdims=True)
    q1 = jnp.sum(stats1[:, 1, :], axis=0, keepdims=True)
    mean1 = s1 / n
    var1 = jnp.maximum(q1 / n - mean1 * mean1, 0.0)
    scale1 = g1 * jax.lax.rsqrt(var1 + BN_EPS)
    shift1 = be1 - mean1 * scale1

    # ============ kernel 2: BN1 apply + Linear2 + ReLU + BN2 partials (in place over h1) ============
    h2, stats2 = pl.pallas_call(
        _bn1_linear2_kernel,
        out_shape=(jax.ShapeDtypeStruct((n_pad, co), f32),
                   jax.ShapeDtypeStruct((nm, 2, co), f32)),
        grid_spec=pltpu.PrefetchScalarGridSpec(
            num_scalar_prefetch=0,
            grid=(nm,),
            in_specs=[
                pl.BlockSpec((tn, co), lambda i: (i, 0)),        # h1 tile
                pl.BlockSpec((tn, 1), lambda i: (i, 0)),         # row-validity mask
                pl.BlockSpec((1, co), lambda i: (0, 0)),         # scale1 (resident)
                pl.BlockSpec((1, co), lambda i: (0, 0)),         # shift1 (resident)
                pl.BlockSpec((co, co), lambda i: (0, 0)),        # w2 (resident)
                pl.BlockSpec((1, co), lambda i: (0, 0)),         # b2 (resident)
            ],
            out_specs=[
                pl.BlockSpec((tn, co), lambda i: (i, 0)),
                pl.BlockSpec((1, 2, co), lambda i: (i, 0, 0)),
            ],
        ),
        compiler_params=pltpu.CompilerParams(dimension_semantics=("parallel",)),
        input_output_aliases={0: 0},                              # h2 overwrites h1
    )(h1, mask, scale1, shift1, w2, b2)

    s2 = jnp.sum(stats2[:, 0, :], axis=0, keepdims=True)
    q2 = jnp.sum(stats2[:, 1, :], axis=0, keepdims=True)
    mean2 = s2 / n
    var2 = jnp.maximum(q2 / n - mean2 * mean2, 0.0)
    scale2 = g2 * jax.lax.rsqrt(var2 + BN_EPS)
    shift2 = be2 - mean2 * scale2

    # ============ kernel 3: BN2 apply (in place over h2) ============
    out = pl.pallas_call(
        _bn2_kernel,
        out_shape=jax.ShapeDtypeStruct((n_pad, co), f32),
        grid_spec=pltpu.PrefetchScalarGridSpec(
            num_scalar_prefetch=0,
            grid=(nm,),
            in_specs=[
                pl.BlockSpec((tn, co), lambda i: (i, 0)),
                pl.BlockSpec((1, co), lambda i: (0, 0)),
                pl.BlockSpec((1, co), lambda i: (0, 0)),
            ],
            out_specs=pl.BlockSpec((tn, co), lambda i: (i, 0)),
        ),
        compiler_params=pltpu.CompilerParams(dimension_semantics=("parallel",)),
        input_output_aliases={0: 0},                              # out overwrites h2
    )(h2, scale2, shift2)

    return out[:n, :c_out]


def reference_forward(x, edge_index, params, *, eps_gin):
    n = x.shape[0]
    src, dst = edge_index[0], edge_index[1]
    adj = jnp.zeros((n, n), dtype=jnp.float32).at[dst, src].add(1.0)
    h = (1.0 + eps_gin) * x + adj @ x
    h1 = jnp.maximum(h @ params["w1"] + params["b1"], 0.0)
    m1 = jnp.mean(h1, axis=0, keepdims=True)
    v1 = jnp.mean((h1 - m1) ** 2, axis=0, keepdims=True)
    y1 = params["g1"] * (h1 - m1) / jnp.sqrt(v1 + BN_EPS) + params["be1"]
    h2 = jnp.maximum(y1 @ params["w2"] + params["b2"], 0.0)
    m2 = jnp.mean(h2, axis=0, keepdims=True)
    v2 = jnp.mean((h2 - m2) ** 2, axis=0, keepdims=True)
    return params["g2"] * (h2 - m2) / jnp.sqrt(v2 + BN_EPS) + params["be2"]


if __name__ == "__main__":
    # Full-precision f32 matmuls in both the Pallas kernels and the reference so the 1e-4
    # comparison is meaningful on real TPU MXUs (default precision would use bf16 passes).
    jax.config.update("jax_default_matmul_precision", "highest")

    key = jax.random.PRNGKey(0)
    N, E = 200, 600                       # N_pad = 256 -> 2x2 kernel-1 grid (exercises tiling)
    in_channels, out_channels = 8, 16
    # Literal reproduction of `GINConv(nn, in_channels)`: second positional arg is eps.
    eps_gin = float(in_channels)

    k_x, k_src, k_dst, k_w1, k_b1, k_w2, k_b2 = jax.random.split(key, 7)

    x = jax.random.normal(k_x, (N, in_channels), dtype=jnp.float32)
    edge_index = jnp.stack([
        jax.random.randint(k_src, (E,), 0, N, dtype=jnp.int32),
        jax.random.randint(k_dst, (E,), 0, N, dtype=jnp.int32),
    ], axis=0)

    # Deterministic parameter init (weights stored as [in, out]; PyTorch applies x @ W.T + b).
    lim1 = 1.0 / jnp.sqrt(in_channels)
    lim2 = 1.0 / jnp.sqrt(out_channels)
    params = {
        "w1": jax.random.uniform(k_w1, (in_channels, out_channels), jnp.float32, -lim1, lim1),
        "b1": jax.random.uniform(k_b1, (1, out_channels), jnp.float32, -lim1, lim1),
        "g1": jnp.ones((1, out_channels), jnp.float32),
        "be1": jnp.zeros((1, out_channels), jnp.float32),
        "w2": jax.random.uniform(k_w2, (out_channels, out_channels), jnp.float32, -lim2, lim2),
        "b2": jax.random.uniform(k_b2, (1, out_channels), jnp.float32, -lim2, lim2),
        "g2": jnp.ones((1, out_channels), jnp.float32),
        "be2": jnp.zeros((1, out_channels), jnp.float32),
    }

    fwd = jax.jit(lambda xx, ei, pp: gin_block_forward(xx, ei, pp, eps_gin=eps_gin))
    out = jax.block_until_ready(fwd(x, edge_index, params))

    ref = reference_forward(x, edge_index, params, eps_gin=eps_gin)
    assert out.shape == (N, out_channels)
    assert jnp.allclose(out, ref, rtol=1e-4, atol=1e-4), "Pallas output mismatch vs reference"

    print("KERNEL_OK")
</pallas_src>

<mosaic_0001>
module attributes {stable_mosaic.version = 11 : i64} {
  func.func @_agg_linear1_kernel(%arg0: i32, %arg1: i32, %arg2: memref<128x128xf32, #tpu.memory_space<vmem>>, %arg3: memref<128x128xf32, #tpu.memory_space<vmem>>, %arg4: memref<128x1xf32, #tpu.memory_space<vmem>>, %arg5: memref<128x128xf32, #tpu.memory_space<vmem>>, %arg6: memref<1x128xf32, #tpu.memory_space<vmem>>, %arg7: memref<128x128xf32, #tpu.memory_space<vmem>>, %arg8: memref<1x2x128xf32, #tpu.memory_space<vmem>>, %arg9: memref<128x128xf32, #tpu.memory_space<vmem>>) attributes {dimension_semantics = [#tpu.dimension_semantics<parallel>, #tpu.dimension_semantics<arbitrary>], iteration_bounds = array<i64: 2, 2>, scalar_prefetch = 0 : i64, scratch_operands = 1 : i64, tpu.core_type = #tpu.core_type<tc>, window_params = [{transform_indices = @transform_0, window_bounds = array<i64: 128, 128>}, {transform_indices = @transform_1, window_bounds = array<i64: 128, 128>}, {transform_indices = @transform_2, window_bounds = array<i64: 128, 1>}, {pipeline_mode = #tpu.pipeline_mode<synchronous>, transform_indices = @transform_3, window_bounds = array<i64: 128, 128>}, {pipeline_mode = #tpu.pipeline_mode<synchronous>, transform_indices = @transform_4, window_bounds = array<i64: 1, 128>}, {transform_indices = @transform_5, window_bounds = array<i64: 128, 128>}, {transform_indices = @transform_6, window_bounds = array<i64: 1, 2, 128>}]} {
    %c0_i32 = arith.constant 0 : i32
    %0 = arith.cmpi eq, %arg1, %c0_i32 : i32
    %1 = arith.extui %0 : i1 to i32
    %c0_i32_0 = arith.constant 0 : i32
    %2 = arith.cmpi ne, %1, %c0_i32_0 : i32
    scf.if %2 {
      %cst_9 = arith.constant 0.000000e+00 : f32
      %12 = vector.broadcast %cst_9 : f32 to vector<128x128xf32>
      %c0_10 = arith.constant 0 : index
      %c0_11 = arith.constant 0 : index
      %13 = vector.load %arg9[%c0_10, %c0_11] : memref<128x128xf32, #tpu.memory_space<vmem>>, vector<128x128xf32>
      tpu.vector_store %arg9[%c0_10, %c0_11], %12 {strides = array<i32>} : memref<128x128xf32, #tpu.memory_space<vmem>>, vector<128x128xf32>,
    } else {
    }
    %c0 = arith.constant 0 : index
    %c0_1 = arith.constant 0 : index
    %3 = vector.load %arg9[%c0, %c0_1] : memref<128x128xf32, #tpu.memory_space<vmem>>, vector<128x128xf32>
    %c0_2 = arith.constant 0 : index
    %c0_3 = arith.constant 0 : index
    %4 = vector.load %arg2[%c0_2, %c0_3] : memref<128x128xf32, #tpu.memory_space<vmem>>, vector<128x128xf32>
    %c0_4 = arith.constant 0 : index
    %c0_5 = arith.constant 0 : index
    %5 = vector.load %arg3[%c0_4, %c0_5] : memref<128x128xf32, #tpu.memory_space<vmem>>, vector<128x128xf32>
    %cst = arith.constant dense<0.000000e+00> : vector<128x128xf32>
    %6 = tpu.matmul %4, %5, %cst {dimension_numbers = #tpu.dot_dimension_numbers<[1], [0], [0], [1], [0, 0, 1, 1], [], []>, precision = #tpu.contract_precision<fp32>} : vector<128x128xf32>, vector<128x128xf32>, vector<128x128xf32> -> vector<128x128xf32>
    %7 = arith.addf %3, %6 : vector<128x128xf32>
    %c0_6 = arith.constant 0 : index
    %c0_7 = arith.constant 0 : index
    %8 = vector.load %arg9[%c0_6, %c0_7] : memref<128x128xf32, #tpu.memory_space<vmem>>, vector<128x128xf32>
    tpu.vector_store %arg9[%c0_6, %c0_7], %7 {strides = array<i32>} : memref<128x128xf32, #tpu.memory_space<vmem>>, vector<128x128xf32>,
    %c1_i32 = arith.constant 1 : i32
    %9 = arith.cmpi eq, %arg1, %c1_i32 : i32
    %10 = arith.extui %9 : i1 to i32
    %c0_i32_8 = arith.constant 0 : i32
    %11 = arith.cmpi ne, %10, %c0_i32_8 : i32
    scf.if %11 {
      %c0_9 = arith.constant 0 : index
      %c0_10 = arith.constant 0 : index
      %12 = vector.load %arg9[%c0_9, %c0_10] : memref<128x128xf32, #tpu.memory_space<vmem>>, vector<128x128xf32>
      %c0_11 = arith.constant 0 : index
      %c0_12 = arith.constant 0 : index
      %13 = vector.load %arg5[%c0_11, %c0_12] : memref<128x128xf32, #tpu.memory_space<vmem>>, vector<128x128xf32>
      %cst_13 = arith.constant dense<0.000000e+00> : vector<128x128xf32>
      %14 = tpu.matmul %12, %13, %cst_13 {dimension_numbers = #tpu.dot_dimension_numbers<[1], [0], [0], [1], [0, 0, 1, 1], [], []>, precision = #tpu.contract_precision<fp32>} : vector<128x128xf32>, vector<128x128xf32>, vector<128x128xf32> -> vector<128x128xf32>
      %c0_14 = arith.constant 0 : index
      %c0_15 = arith.constant 0 : index
      %15 = vector.load %arg6[%c0_14, %c0_15] : memref<1x128xf32, #tpu.memory_space<vmem>>, vector<1x128xf32>
      %16 = vector.broadcast %15 : vector<1x128xf32> to vector<128x128xf32>
      %17 = arith.addf %14, %16 : vector<128x128xf32>
      %cst_16 = arith.constant 0.000000e+00 : f32
      %18 = vector.broadcast %cst_16 : f32 to vector<128x128xf32>
      %19 = arith.maximumf %17, %18 : vector<128x128xf32>
      %c0_17 = arith.constant 0 : index
      %c0_18 = arith.constant 0 : index
      %20 = vector.load %arg7[%c0_17, %c0_18] : memref<128x128xf32, #tpu.memory_space<vmem>>, vector<128x128xf32>
      tpu.vector_store %arg7[%c0_17, %c0_18], %19 {strides = array<i32>} : memref<128x128xf32, #tpu.memory_space<vmem>>, vector<128x128xf32>,
      %c0_19 = arith.constant 0 : index
      %c0_20 = arith.constant 0 : index
      %21 = vector.load %arg4[%c0_19, %c0_20] : memref<128x1xf32, #tpu.memory_space<vmem>>, vector<128x1xf32>
      %22 = vector.broadcast %21 : vector<128x1xf32> to vector<128x128xf32>
      %23 = arith.mulf %19, %22 : vector<128x128xf32>
      %cst_21 = arith.constant dense<0.000000e+00> : vector<128xf32>
      %24 = vector.multi_reduction <add>, %23, %cst_21 [0] : vector<128x128xf32> to vector<128xf32>
      %25 = vector.shape_cast %24 : vector<128xf32> to vector<1x128xf32>
      %26 = arith.mulf %23, %23 : vector<128x128xf32>
      %cst_22 = arith.constant dense<0.000000e+00> : vector<128xf32>
      %27 = vector.multi_reduction <add>, %26, %cst_22 [0] : vector<128x128xf32> to vector<128xf32>
      %28 = vector.shape_cast %27 : vector<128xf32> to vector<1x128xf32>
      %29 = tpu.concatenate %25, %28 in 0 : vector<1x128xf32>, vector<1x128xf32> -> vector<2x128xf32>
      %30 = vector.shape_cast %29 : vector<2x128xf32> to vector<1x2x128xf32>
      %c0_23 = arith.constant 0 : index
      %c0_24 = arith.constant 0 : index
      %c0_25 = arith.constant 0 : index
      %31 = vector.load %arg8[%c0_23, %c0_24, %c0_25] : memref<1x2x128xf32, #tpu.memory_space<vmem>>, vector<1x2x128xf32>
      tpu.vector_store %arg8[%c0_23, %c0_24, %c0_25], %30 {strides = array<i32>} : memref<1x2x128xf32, #tpu.memory_space<vmem>>, vector<1x2x128xf32>,
    } else {
    }
    return
  }
  func.func @transform_0(%arg0: i32, %arg1: i32) -> (i32, i32) {
    %c0_i32 = arith.constant 0 : i32
    return %arg0, %arg1 : i32, i32
  }
  func.func @transform_1(%arg0: i32, %arg1: i32) -> (i32, i32) {
    %c0_i32 = arith.constant 0 : i32
    %c0_i32_0 = arith.constant 0 : i32
    return %arg1, %c0_i32 : i32, i32
  }
  func.func @transform_2(%arg0: i32, %arg1: i32) -> (i32, i32) {
    %c0_i32 = arith.constant 0 : i32
    %c0_i32_0 = arith.constant 0 : i32
    return %arg0, %c0_i32 : i32, i32
  }
  func.func @transform_3(%arg0: i32, %arg1: i32) -> (i32, i32) {
    %c0_i32 = arith.constant 0 : i32
    %c0_i32_0 = arith.constant 0 : i32
    %c0_i32_1 = arith.constant 0 : i32
    return %c0_i32, %c0_i32_0 : i32, i32
  }
  func.func @transform_4(%arg0: i32, %arg1: i32) -> (i32, i32) {
    %c0_i32 = arith.constant 0 : i32
    %c0_i32_0 = arith.constant 0 : i32
    %c0_i32_1 = arith.constant 0 : i32
    return %c0_i32, %c0_i32_0 : i32, i32
  }
  func.func @transform_5(%arg0: i32, %arg1: i32) -> (i32, i32) {
    %c0_i32 = arith.constant 0 : i32
    %c0_i32_0 = arith.constant 0 : i32
    return %arg0, %c0_i32 : i32, i32
  }
  func.func @transform_6(%arg0: i32, %arg1: i32) -> (i32, i32, i32) {
    %c0_i32 = arith.constant 0 : i32
    %c0_i32_0 = arith.constant 0 : i32
    %c0_i32_1 = arith.constant 0 : i32
    return %arg0, %c0_i32, %c0_i32_0 : i32, i32, i32
  }
}

module attributes {stable_mosaic.version = 11 : i64} {
  func.func @_bn1_linear2_kernel(%arg0: i32, %arg1: memref<128x128xf32, #tpu.memory_space<vmem>>, %arg2: memref<128x1xf32, #tpu.memory_space<vmem>>, %arg3: memref<1x128xf32, #tpu.memory_space<vmem>>, %arg4: memref<1x128xf32, #tpu.memory_space<vmem>>, %arg5: memref<128x128xf32, #tpu.memory_space<vmem>>, %arg6: memref<1x128xf32, #tpu.memory_space<vmem>>, %arg7: memref<128x128xf32, #tpu.memory_space<vmem>>, %arg8: memref<1x2x128xf32, #tpu.memory_space<vmem>>) attributes {dimension_semantics = [#tpu.dimension_semantics<parallel>], iteration_bounds = array<i64: 2>, scalar_prefetch = 0 : i64, scratch_operands = 0 : i64, tpu.core_type = #tpu.core_type<tc>, window_params = [{transform_indices = @transform_0, window_bounds = array<i64: 128, 128>}, {transform_indices = @transform_1, window_bounds = array<i64: 128, 1>}, {pipeline_mode = #tpu.pipeline_mode<synchronous>, transform_indices = @transform_2, window_bounds = array<i64: 1, 128>}, {pipeline_mode = #tpu.pipeline_mode<synchronous>, transform_indices = @transform_3, window_bounds = array<i64: 1, 128>}, {pipeline_mode = #tpu.pipeline_mode<synchronous>, transform_indices = @transform_4, window_bounds = array<i64: 128, 128>}, {pipeline_mode = #tpu.pipeline_mode<synchronous>, transform_indices = @transform_5, window_bounds = array<i64: 1, 128>}, {transform_indices = @transform_6, window_bounds = array<i64: 128, 128>}, {transform_indices = @transform_7, window_bounds = array<i64: 1, 2, 128>}]} {
    %c0 = arith.constant 0 : index
    %c0_0 = arith.constant 0 : index
    %0 = vector.load %arg1[%c0, %c0_0] : memref<128x128xf32, #tpu.memory_space<vmem>>, vector<128x128xf32>
    %c0_1 = arith.constant 0 : index
    %c0_2 = arith.constant 0 : index
    %1 = vector.load %arg3[%c0_1, %c0_2] : memref<1x128xf32, #tpu.memory_space<vmem>>, vector<1x128xf32>
    %2 = vector.broadcast %1 : vector<1x128xf32> to vector<128x128xf32>
    %3 = arith.mulf %0, %2 : vector<128x128xf32>
    %c0_3 = arith.constant 0 : index
    %c0_4 = arith.constant 0 : index
    %4 = vector.load %arg4[%c0_3, %c0_4] : memref<1x128xf32, #tpu.memory_space<vmem>>, vector<1x128xf32>
    %5 = vector.broadcast %4 : vector<1x128xf32> to vector<128x128xf32>
    %6 = arith.addf %3, %5 : vector<128x128xf32>
    %c0_5 = arith.constant 0 : index
    %c0_6 = arith.constant 0 : index
    %7 = vector.load %arg5[%c0_5, %c0_6] : memref<128x128xf32, #tpu.memory_space<vmem>>, vector<128x128xf32>
    %cst = arith.constant dense<0.000000e+00> : vector<128x128xf32>
    %8 = tpu.matmul %6, %7, %cst {dimension_numbers = #tpu.dot_dimension_numbers<[1], [0], [0], [1], [0, 0, 1, 1], [], []>, precision = #tpu.contract_precision<fp32>} : vector<128x128xf32>, vector<128x128xf32>, vector<128x128xf32> -> vector<128x128xf32>
    %c0_7 = arith.constant 0 : index
    %c0_8 = arith.constant 0 : index
    %9 = vector.load %arg6[%c0_7, %c0_8] : memref<1x128xf32, #tpu.memory_space<vmem>>, vector<1x128xf32>
    %10 = vector.broadcast %9 : vector<1x128xf32> to vector<128x128xf32>
    %11 = arith.addf %8, %10 : vector<128x128xf32>
    %cst_9 = arith.constant 0.000000e+00 : f32
    %12 = vector.broadcast %cst_9 : f32 to vector<128x128xf32>
    %13 = arith.maximumf %11, %12 : vector<128x128xf32>
    %c0_10 = arith.constant 0 : index
    %c0_11 = arith.constant 0 : index
    %14 = vector.load %arg7[%c0_10, %c0_11] : memref<128x128xf32, #tpu.memory_space<vmem>>, vector<128x128xf32>
    tpu.vector_store %arg7[%c0_10, %c0_11], %13 {strides = array<i32>} : memref<128x128xf32, #tpu.memory_space<vmem>>, vector<128x128xf32>,
    %c0_12 = arith.constant 0 : index
    %c0_13 = arith.constant 0 : index
    %15 = vector.load %arg2[%c0_12, %c0_13] : memref<128x1xf32, #tpu.memory_space<vmem>>, vector<128x1xf32>
    %16 = vector.broadcast %15 : vector<128x1xf32> to vector<128x128xf32>
    %17 = arith.mulf %13, %16 : vector<128x128xf32>
    %cst_14 = arith.constant dense<0.000000e+00> : vector<128xf32>
    %18 = vector.multi_reduction <add>, %17, %cst_14 [0] : vector<128x128xf32> to vector<128xf32>
    %19 = vector.shape_cast %18 : vector<128xf32> to vector<1x128xf32>
    %20 = arith.mulf %17, %17 : vector<128x128xf32>
    %cst_15 = arith.constant dense<0.000000e+00> : vector<128xf32>
    %21 = vector.multi_reduction <add>, %20, %cst_15 [0] : vector<128x128xf32> to vector<128xf32>
    %22 = vector.shape_cast %21 : vector<128xf32> to vector<1x128xf32>
    %23 = tpu.concatenate %19, %22 in 0 : vector<1x128xf32>, vector<1x128xf32> -> vector<2x128xf32>
    %24 = vector.shape_cast %23 : vector<2x128xf32> to vector<1x2x128xf32>
    %c0_16 = arith.constant 0 : index
    %c0_17 = arith.constant 0 : index
    %c0_18 = arith.constant 0 : index
    %25 = vector.load %arg8[%c0_16, %c0_17, %c0_18] : memref<1x2x128xf32, #tpu.memory_space<vmem>>, vector<1x2x128xf32>
    tpu.vector_store %arg8[%c0_16, %c0_17, %c0_18], %24 {strides = array<i32>} : memref<1x2x128xf32, #tpu.memory_space<vmem>>, vector<1x2x128xf32>,
    return
  }
  func.func @transform_0(%arg0: i32) -> (i32, i32) {
    %c0_i32 = arith.constant 0 : i32
    %c0_i32_0 = arith.constant 0 : i32
    return %arg0, %c0_i32 : i32, i32
  }
  func.func @transform_1(%arg0: i32) -> (i32, i32) {
    %c0_i32 = arith.constant 0 : i32
    %c0_i32_0 = arith.constant 0 : i32
    return %arg0, %c0_i32 : i32, i32
  }
  func.func @transform_2(%arg0: i32) -> (i32, i32) {
    %c0_i32 = arith.constant 0 : i32
    %c0_i32_0 = arith.constant 0 : i32
    %c0_i32_1 = arith.constant 0 : i32
    return %c0_i32, %c0_i32_0 : i32, i32
  }
  func.func @transform_3(%arg0: i32) -> (i32, i32) {
    %c0_i32 = arith.constant 0 : i32
    %c0_i32_0 = arith.constant 0 : i32
    %c0_i32_1 = arith.constant 0 : i32
    return %c0_i32, %c0_i32_0 : i32, i32
  }
  func.func @transform_4(%arg0: i32) -> (i32, i32) {
    %c0_i32 = arith.constant 0 : i32
    %c0_i32_0 = arith.constant 0 : i32
    %c0_i32_1 = arith.constant 0 : i32
    return %c0_i32, %c0_i32_0 : i32, i32
  }
  func.func @transform_5(%arg0: i32) -> (i32, i32) {
    %c0_i32 = arith.constant 0 : i32
    %c0_i32_0 = arith.constant 0 : i32
    %c0_i32_1 = arith.constant 0 : i32
    return %c0_i32, %c0_i32_0 : i32, i32
  }
  func.func @transform_6(%arg0: i32) -> (i32, i32) {
    %c0_i32 = arith.constant 0 : i32
    %c0_i32_0 = arith.constant 0 : i32
    return %arg0, %c0_i32 : i32, i32
  }
  func.func @transform_7(%arg0: i32) -> (i32, i32, i32) {
    %c0_i32 = arith.constant 0 : i32
    %c0_i32_0 = arith.constant 0 : i32
    %c0_i32_1 = arith.constant 0 : i32
    return %arg0, %c0_i32, %c0_i32_0 : i32, i32, i32
  }
}

module attributes {stable_mosaic.version = 11 : i64} {
  func.func @_bn2_kernel(%arg0: i32, %arg1: memref<128x128xf32, #tpu.memory_space<vmem>>, %arg2: memref<1x128xf32, #tpu.memory_space<vmem>>, %arg3: memref<1x128xf32, #tpu.memory_space<vmem>>, %arg4: memref<128x128xf32, #tpu.memory_space<vmem>>) attributes {dimension_semantics = [#tpu.dimension_semantics<parallel>], iteration_bounds = array<i64: 2>, scalar_prefetch = 0 : i64, scratch_operands = 0 : i64, tpu.core_type = #tpu.core_type<tc>, window_params = [{transform_indices = @transform_0, window_bounds = array<i64: 128, 128>}, {pipeline_mode = #tpu.pipeline_mode<synchronous>, transform_indices = @transform_1, window_bounds = array<i64: 1, 128>}, {pipeline_mode = #tpu.pipeline_mode<synchronous>, transform_indices = @transform_2, window_bounds = array<i64: 1, 128>}, {transform_indices = @transform_3, window_bounds = array<i64: 128, 128>}]} {
    %c0 = arith.constant 0 : index
    %c0_0 = arith.constant 0 : index
    %0 = vector.load %arg1[%c0, %c0_0] : memref<128x128xf32, #tpu.memory_space<vmem>>, vector<128x128xf32>
    %c0_1 = arith.constant 0 : index
    %c0_2 = arith.constant 0 : index
    %1 = vector.load %arg2[%c0_1, %c0_2] : memref<1x128xf32, #tpu.memory_space<vmem>>, vector<1x128xf32>
    %2 = vector.broadcast %1 : vector<1x128xf32> to vector<128x128xf32>
    %3 = arith.mulf %0, %2 : vector<128x128xf32>
    %c0_3 = arith.constant 0 : index
    %c0_4 = arith.constant 0 : index
    %4 = vector.load %arg3[%c0_3, %c0_4] : memref<1x128xf32, #tpu.memory_space<vmem>>, vector<1x128xf32>
    %5 = vector.broadcast %4 : vector<1x128xf32> to vector<128x128xf32>
    %6 = arith.addf %3, %5 : vector<128x128xf32>
    %c0_5 = arith.constant 0 : index
    %c0_6 = arith.constant 0 : index
    %7 = vector.load %arg4[%c0_5, %c0_6] : memref<128x128xf32, #tpu.memory_space<vmem>>, vector<128x128xf32>
    tpu.vector_store %arg4[%c0_5, %c0_6], %6 {strides = array<i32>} : memref<128x128xf32, #tpu.memory_space<vmem>>, vector<128x128xf32>,
    return
  }
  func.func @transform_0(%arg0: i32) -> (i32, i32) {
    %c0_i32 = arith.constant 0 : i32
    %c0_i32_0 = arith.constant 0 : i32
    return %arg0, %c0_i32 : i32, i32
  }
  func.func @transform_1(%arg0: i32) -> (i32, i32) {
    %c0_i32 = arith.constant 0 : i32
    %c0_i32_0 = arith.constant 0 : i32
    %c0_i32_1 = arith.constant 0 : i32
    return %c0_i32, %c0_i32_0 : i32, i32
  }
  func.func @transform_2(%arg0: i32) -> (i32, i32) {
    %c0_i32 = arith.constant 0 : i32
    %c0_i32_0 = arith.constant 0 : i32
    %c0_i32_1 = arith.constant 0 : i32
    return %c0_i32, %c0_i32_0 : i32, i32
  }
  func.func @transform_3(%arg0: i32) -> (i32, i32) {
    %c0_i32 = arith.constant 0 : i32
    %c0_i32_0 = arith.constant 0 : i32
    return %arg0, %c0_i32 : i32, i32
  }
}

</mosaic_0001>

<llo_original>
// kernel: _lambda_.4
$region0: #{_lambda_.4}
  #allocation0 [shape = 'u32[]', space=smem, size = 0x4, offset = 0x4, fixed_abs, tag = 'smem constant byte address 0x4 - core index']
  #allocation1 [shape = 'u32[144,128]{1,0:T(1,128)}', space=vmem, size = 0x12000, scoped, tag = 'internal scratch']
  %s0 = inlined_call_operand.vmem [shape: f32[256,128], index: 0, kind: input, shape index: {}, may-alias: {0,6}]
  %s1 = inlined_call_operand.vmem [shape: f32[256,1], index: 1, kind: input, shape index: {}]
  %s2 = inlined_call_operand.vmem [shape: f32[1,128], index: 2, kind: input, shape index: {}]
  %s3 = inlined_call_operand.vmem [shape: f32[1,128], index: 3, kind: input, shape index: {}]
  %s4 = inlined_call_operand.vmem [shape: f32[128,128], index: 4, kind: input, shape index: {}]
  %s5 = inlined_call_operand.vmem [shape: f32[1,128], index: 5, kind: input, shape index: {}]
  %s6 = inlined_call_operand.vmem [shape: f32[256,128], index: 6, kind: output, shape index: {0}, may-alias: {0,6}]
  %s7 = inlined_call_operand.vmem [shape: f32[2,2,128], index: 7, kind: output, shape index: {1}]
  %8 = xla_tuple %s6, %s7
  %s9 = sld [smem:[#allocation0]]
  $region65: #{_lambda_.4} parent=0
    _
  %s11 = ssub.s32 1, %s9
  %s12 = scalar_select 0, %s11, %s9
  loop: start=0, step=1, limit=4
  $region2: #{_lambda_.4} parent=0 // loop_pre_header
    _
  $region3: #{_lambda_.4} parent=0 // loop_header
    %s14 = sphi 0, %s18
    %p15 = scmp.ge.s32.totalorder %s14, 4
    %s24 = sphi 0, %s26
    %s27 = sphi 0, %s24
    %s28 = sphi 0, %s27
    %s44 = sphi 0, %s28
    %s50 = sphi 0, %s52
    %s53 = sphi 0, %s50
    %s54 = sphi 0, %s53
    %s70 = sphi 0, %s54
    %s74 = sphi 0, %s74
    %s76 = sphi 0, %s74
    %s77 = sphi 0, %s76
    %s91 = sphi 0, %s77
    %s95 = sphi 0, %s95
    %s97 = sphi 0, %s95
    %s98 = sphi 0, %s97
    %s112 = sphi 0, %s98
    %s116 = sphi 0, %s116
    %s118 = sphi 0, %s116
    %s119 = sphi 0, %s118
    %s133 = sphi 0, %s119
    %s137 = sphi 0, %s137
    %s139 = sphi 0, %s137
    %s140 = sphi 0, %s139
    %s154 = sphi 0, %s140
    %s160 = sphi 0, %s162
    %s163 = sphi 0, %s160
    %s164 = sphi 0, %s163
    %s180 = sphi 0, %s164
    %s186 = sphi 0, %s188
    %s189 = sphi 0, %s186
    %s190 = sphi 0, %s189
    %s206 = sphi 0, %s190
  $region4: #{_lambda_.4} parent=0 // loop_header_branch
    %17 = sbr.rel (%p15) target = $region8
  $region5: #{_lambda_.4} parent=0 // loop_body
    %s19 = ssub.s32 %s14, 1
    %s20 = ssub.s32 %s14, 2
    %s21 = sadd.s32 %s14, 1
    %s22 = ssub.s32 %s14, %s21
    %p23 = scmp.eq.s32.totalorder %s22, 0
    %s25 = sadd.s32 %s24, 1
    %s26 = scalar_select %p23, %s24, %s25
    %p29 = pneg %p23
    %p30 = scmp.eq.s32.totalorder %s14, 1
    %p31 = por %p29, %p30
    %p32 = scmp.ne.s32.totalorder %s24, %s27
    %p33 = scmp.eq.s32.totalorder %s14, 0
    %p34 = por %p32, %p33
    %p35 = scmp.ne.s32.totalorder %s24, %s27
    %p36 = scmp.eq.s32.totalorder %s19, 1
    %p37 = por %p35, %p36
    %p38 = scmp.ne.s32.totalorder %s27, %s28
    %p39 = scmp.eq.s32.totalorder %s19, 0
    %p40 = por %p38, %p39
    %p41 = scmp.ne.s32.totalorder %s27, %s28
    %p42 = scmp.eq.s32.totalorder %s20, 1
    %p43 = por %p41, %p42
    %p45 = scmp.ne.s32.totalorder %s28, %s44
    %p46 = scmp.eq.s32.totalorder %s20, 0
    %p47 = por %p45, %p46
    %s48 = ssub.s32 %s14, %s21
    %p49 = scmp.eq.s32.totalorder %s48, 0
    %s51 = sadd.s32 %s50, 1
    %s52 = scalar_select %p49, %s50, %s51
    %p55 = pneg %p49
    %p56 = scmp.eq.s32.totalorder %s14, 1
    %p57 = por %p55, %p56
    %p58 = scmp.ne.s32.totalorder %s50, %s53
    %p59 = scmp.eq.s32.totalorder %s14, 0
    %p60 = por %p58, %p59
    %p61 = scmp.ne.s32.totalorder %s50, %s53
    %p62 = scmp.eq.s32.totalorder %s19, 1
    %p63 = por %p61, %p62
    %p64 = scmp.ne.s32.totalorder %s53, %s54
    %p65 = scmp.eq.s32.totalorder %s19, 0
    %p66 = por %p64, %p65
    %p67 = scmp.ne.s32.totalorder %s53, %s54
    %p68 = scmp.eq.s32.totalorder %s20, 1
    %p69 = por %p67, %p68
    %p71 = scmp.ne.s32.totalorder %s54, %s70
    %p72 = scmp.eq.s32.totalorder %s20, 0
    %p73 = por %p71, %p72
    %s75 = sadd.s32 %s74, 1
    %p78 = scmp.eq.s32.totalorder %s14, 1
    %p79 = scmp.ne.s32.totalorder %s74, %s76
    %p80 = scmp.eq.s32.totalorder %s14, 0
    %p81 = por %p79, %p80
    %p82 = scmp.ne.s32.totalorder %s74, %s76
    %p83 = scmp.eq.s32.totalorder %s19, 1
    %p84 = por %p82, %p83
    %p85 = scmp.ne.s32.totalorder %s76, %s77
    %p86 = scmp.eq.s32.totalorder %s19, 0
    %p87 = por %p85, %p86
    %p88 = scmp.ne.s32.totalorder %s76, %s77
    %p89 = scmp.eq.s32.totalorder %s20, 1
    %p90 = por %p88, %p89
    %p92 = scmp.ne.s32.totalorder %s77, %s91
    %p93 = scmp.eq.s32.totalorder %s20, 0
    %p94 = por %p92, %p93
    %s96 = sadd.s32 %s95, 1
    %p99 = scmp.eq.s32.totalorder %s14, 1
    %p100 = scmp.ne.s32.totalorder %s95, %s97
    %p101 = scmp.eq.s32.totalorder %s14, 0
    %p102 = por %p100, %p101
    %p103 = scmp.ne.s32.totalorder %s95, %s97
    %p104 = scmp.eq.s32.totalorder %s19, 1
    %p105 = por %p103, %p104
    %p106 = scmp.ne.s32.totalorder %s97, %s98
    %p107 = scmp.eq.s32.totalorder %s19, 0
    %p108 = por %p106, %p107
    %p109 = scmp.ne.s32.totalorder %s97, %s98
    %p110 = scmp.eq.s32.totalorder %s20, 1
    %p111 = por %p109, %p110
    %p113 = scmp.ne.s32.totalorder %s98, %s112
    %p114 = scmp.eq.s32.totalorder %s20, 0
    %p115 = por %p113, %p114
    %s117 = sadd.s32 %s116, 1
    %p120 = scmp.eq.s32.totalorder %s14, 1
    %p121 = scmp.ne.s32.totalorder %s116, %s118
    %p122 = scmp.eq.s32.totalorder %s14, 0
    %p123 = por %p121, %p122
    %p124 = scmp.ne.s32.totalorder %s116, %s118
    %p125 = scmp.eq.s32.totalorder %s19, 1
    %p126 = por %p124, %p125
    %p127 = scmp.ne.s32.totalorder %s118, %s119
    %p128 = scmp.eq.s32.totalorder %s19, 0
    %p129 = por %p127, %p128
    %p130 = scmp.ne.s32.totalorder %s118, %s119
    %p131 = scmp.eq.s32.totalorder %s20, 1
    %p132 = por %p130, %p131
    %p134 = scmp.ne.s32.totalorder %s119, %s133
    %p135 = scmp.eq.s32.totalorder %s20, 0
    %p136 = por %p134, %p135
    %s138 = sadd.s32 %s137, 1
    %p141 = scmp.eq.s32.totalorder %s14, 1
    %p142 = scmp.ne.s32.totalorder %s137, %s139
    %p143 = scmp.eq.s32.totalorder %s14, 0
    %p144 = por %p142, %p143
    %p145 = scmp.ne.s32.totalorder %s137, %s139
    %p146 = scmp.eq.s32.totalorder %s19, 1
    %p147 = por %p145, %p146
    %p148 = scmp.ne.s32.totalorder %s139, %s140
    %p149 = scmp.eq.s32.totalorder %s19, 0
    %p150 = por %p148, %p149
    %p151 = scmp.ne.s32.totalorder %s139, %s140
    %p152 = scmp.eq.s32.totalorder %s20, 1
    %p153 = por %p151, %p152
    %p155 = scmp.ne.s32.totalorder %s140, %s154
    %p156 = scmp.eq.s32.totalorder %s20, 0
    %p157 = por %p155, %p156
    %s158 = ssub.s32 %s14, %s21
    %p159 = scmp.eq.s32.totalorder %s158, 0
    %s161 = sadd.s32 %s160, 1
    %s162 = scalar_select %p159, %s160, %s161
    %p165 = pneg %p159
    %p166 = scmp.eq.s32.totalorder %s14, 1
    %p167 = por %p165, %p166
    %p168 = scmp.ne.s32.totalorder %s160, %s163
    %p169 = scmp.eq.s32.totalorder %s14, 0
    %p170 = por %p168, %p169
    %p171 = scmp.ne.s32.totalorder %s160, %s163
    %p172 = scmp.eq.s32.totalorder %s19, 1
    %p173 = por %p171, %p172
    %p174 = scmp.ne.s32.totalorder %s163, %s164
    %p175 = scmp.eq.s32.totalorder %s19, 0
    %p176 = por %p174, %p175
    %p177 = scmp.ne.s32.totalorder %s163, %s164
    %p178 = scmp.eq.s32.totalorder %s20, 1
    %p179 = por %p177, %p178
    %p181 = scmp.ne.s32.totalorder %s164, %s180
    %p182 = scmp.eq.s32.totalorder %s20, 0
    %p183 = por %p181, %p182
    %s184 = ssub.s32 %s14, %s21
    %p185 = scmp.eq.s32.totalorder %s184, 0
    %s187 = sadd.s32 %s186, 1
    %s188 = scalar_select %p185, %s186, %s187
    %p191 = pneg %p185
    %p192 = scmp.eq.s32.totalorder %s14, 1
    %p193 = por %p191, %p192
    %p194 = scmp.ne.s32.totalorder %s186, %s189
    %p195 = scmp.eq.s32.totalorder %s14, 0
    %p196 = por %p194, %p195
    %p197 = scmp.ne.s32.totalorder %s186, %s189
    %p198 = scmp.eq.s32.totalorder %s19, 1
    %p199 = por %p197, %p198
    %p200 = scmp.ne.s32.totalorder %s189, %s190
    %p201 = scmp.eq.s32.totalorder %s19, 0
    %p202 = por %p200, %p201
    %p203 = scmp.ne.s32.totalorder %s189, %s190
    %p204 = scmp.eq.s32.totalorder %s20, 1
    %p205 = por %p203, %p204
    %p207 = scmp.ne.s32.totalorder %s190, %s206
    %p208 = scmp.eq.s32.totalorder %s20, 0
    %p209 = por %p207, %p208
    %p210 = scmp.le.s32.totalorder 1, %s14
    %p211 = scmp.lt.s32.totalorder %s14, 3
    %p212 = pnand %p210, %p211
    %p213 = pneg %p212
    // Predicated region
    $region9: #{_lambda_.4} parent=5 // pred_check
      _
    $region10: #{_lambda_.4} parent=5 // pred_check_branch
      %215 = sbr.rel (%p212) target = $region12
    $region11: #{_lambda_.4} parent=5 // pred_region
      %s216 = ssub.s32 %s14, 1
      // Predicated region
      $region13: #{_lambda_.4} parent=11 // pred_check
        %p217 = pneg %p87
      $region14: #{_lambda_.4} parent=11 // pred_check_branch
        %219 = sbr.rel (%p217) target = $region16
      $region15: #{_lambda_.4} parent=11 // pred_region
        _
      $region16: #{_lambda_.4} parent=11 // pred_fallthru
        _
      // Predicated region
      $region17: #{_lambda_.4} parent=11 // pred_check
        %p220 = pneg %p108
      $region18: #{_lambda_.4} parent=11 // pred_check_branch
        %222 = sbr.rel (%p220) target = $region20
      $region19: #{_lambda_.4} parent=11 // pred_region
        _
      $region20: #{_lambda_.4} parent=11 // pred_fallthru
        _
      // Predicated region
      $region21: #{_lambda_.4} parent=11 // pred_check
        %p223 = pneg %p129
      $region22: #{_lambda_.4} parent=11 // pred_check_branch
        %225 = sbr.rel (%p223) target = $region24
      $region23: #{_lambda_.4} parent=11 // pred_region
        _
      $region24: #{_lambda_.4} parent=11 // pred_fallthru
        _
      // Predicated region
      $region25: #{_lambda_.4} parent=11 // pred_check
        %p226 = pneg %p150
      $region26: #{_lambda_.4} parent=11 // pred_check_branch
        %228 = sbr.rel (%p226) target = $region28
      $region27: #{_lambda_.4} parent=11 // pred_region
        _
      $region28: #{_lambda_.4} parent=11 // pred_fallthru
        _
    $region12: #{_lambda_.4} parent=5 // pred_fallthru
      _
    %p229 = scmp.lt.s32.totalorder %s14, 2
    // Predicated region
    $region29: #{_lambda_.4} parent=5 // pred_check
      %p230 = pneg %p229
    $region30: #{_lambda_.4} parent=5 // pred_check_branch
      %232 = sbr.rel (%p230) target = $region32
    $region31: #{_lambda_.4} parent=5 // pred_region
      // Predicated region
      $region33: #{_lambda_.4} parent=31 // pred_check
        %p233 = pneg %p34
      $region34: #{_lambda_.4} parent=31 // pred_check_branch
        %235 = sbr.rel (%p233) target = $region36
      $region35: #{_lambda_.4} parent=31 // pred_region
        %s236 = smul.u32 16, %s14
        %p237 = scmp.lt.s32.totalorder %s236, 31
        %s238 = scalar_select %p237, %s236, 31
        %s239 = smul.addr %s238, 8
        %s240 = scalar_lea.vmem %s0, %s239
        %s241 = smul.u32 16, %s14
      $region36: #{_lambda_.4} parent=31 // pred_fallthru
        _
      // Predicated region
      $region37: #{_lambda_.4} parent=31 // pred_check
        %p242 = pneg %p60
      $region38: #{_lambda_.4} parent=31 // pred_check_branch
        %244 = sbr.rel (%p242) target = $region40
      $region39: #{_lambda_.4} parent=31 // pred_region
        %s245 = smul.u32 16, %s14
        %p246 = scmp.lt.s32.totalorder %s245, 31
        %s247 = scalar_select %p246, %s245, 31
        %s248 = smul.addr %s247, 8
        %s249 = scalar_lea.vmem %s1, %s248
        %s250 = smul.u32 16, %s14
      $region40: #{_lambda_.4} parent=31 // pred_fallthru
        _
    $region32: #{_lambda_.4} parent=5 // pred_fallthru
      _
    %p251 = scmp.le.s32.totalorder 1, %s14
    %p252 = scmp.lt.s32.totalorder %s14, 3
    %p253 = pnand %p251, %p252
    %p254 = pneg %p253
    // Predicated region
    $region41: #{_lambda_.4} parent=5 // pred_check
      _
    $region42: #{_lambda_.4} parent=5 // pred_check_branch
      %256 = sbr.rel (%p253) target = $region44
    $region43: #{_lambda_.4} parent=5 // pred_region
      %s257 = ssub.s32 %s14, 1
      %s258 = smul.u32 16, %s19
      %p259 = scmp.lt.s32.totalorder %s258, 31
      %s260 = scalar_select %p259, %s258, 31
      %s261 = smul.addr %s260, 8
      %s262 = scalar_lea.vmem %s0, %s261
      %p263 = pneg %p40
      %p264 = pneg %p37
      %s265 = smul.u32 16, %s19
      %p266 = scmp.lt.s32.totalorder %s265, 31
      %s267 = scalar_select %p266, %s265, 31
      %s268 = smul.addr %s267, 8
      %s269 = scalar_lea.vmem %s1, %s268
      %p270 = pneg %p66
      %p271 = pneg %p63
      %p272 = pneg %p87
      %p273 = pneg %p84
      %p274 = pneg %p108
      %p275 = pneg %p105
      %p276 = pneg %p129
      %p277 = pneg %p126
      %p278 = pneg %p150
      %p279 = pneg %p147
      %p280 = pneg %p176
      %p281 = pneg %p173
      %s282 = smul.u32 16, %s19
      %p283 = scmp.lt.s32.totalorder %s282, 31
      %s284 = scalar_select %p283, %s282, 31
      %s285 = smul.addr %s284, 8
      %s286 = scalar_lea.vmem %s6, %s285
      %p287 = pneg %p202
      %p288 = pneg %p199
      %p289 = scmp.lt.s32.totalorder %s19, 1
      %s290 = scalar_select %p289, %s19, 1
      %s291 = smul.addr %s290, 2
      %s292 = scalar_lea.vmem %s7, %s291
      %s293 = smul.u32 16, %s19
      %p294 = scmp.lt.s32.totalorder %s293, 31
      %s295 = scalar_select %p294, %s293, 31
      %s296 = smul.addr %s295, 8
      %s297 = scalar_lea.vmem %s0, %s296
      %s298 = smul.u32 16, %s19
      %s299 = smul.u32 16, %s19
      %p300 = scmp.lt.s32.totalorder %s299, 31
      %s301 = scalar_select %p300, %s299, 31
      %s302 = smul.addr %s301, 8
      %s303 = scalar_lea.vmem %s1, %s302
      %s304 = smul.u32 16, %s19
      %s305 = smul.u32 16, %s19
      %p306 = scmp.lt.s32.totalorder %s305, 31
      %s307 = scalar_select %p306, %s305, 31
      %s308 = smul.addr %s307, 8
      %s309 = scalar_lea.vmem %s6, %s308
      %s310 = smul.u32 16, %s19
      %p311 = scmp.lt.s32.totalorder %s19, 1
      %s312 = scalar_select %p311, %s19, 1
      %s313 = smul.addr %s312, 2
      %s314 = scalar_lea.vmem %s7, %s313
      %v315 = vld [vmem:[%s297] sm:$0xff]
      %v316 = vld [vmem:[%s297 + $0x8] sm:$0xff]
      %v317 = vld [vmem:[%s297 + $0x10] sm:$0xff]
      %v318 = vld [vmem:[%s297 + $0x18] sm:$0xff]
      %v319 = vld [vmem:[%s297 + $0x20] sm:$0xff]
      %v320 = vld [vmem:[%s297 + $0x28] sm:$0xff]
      %v321 = vld [vmem:[%s297 + $0x30] sm:$0xff]
      %v322 = vld [vmem:[%s297 + $0x38] sm:$0xff]
      %v323 = vld [vmem:[%s297 + $0x40] sm:$0xff]
      %v324 = vld [vmem:[%s297 + $0x48] sm:$0xff]
      %v325 = vld [vmem:[%s297 + $0x50] sm:$0xff]
      %v326 = vld [vmem:[%s297 + $0x58] sm:$0xff]
      %v327 = vld [vmem:[%s297 + $0x60] sm:$0xff]
      %v328 = vld [vmem:[%s297 + $0x68] sm:$0xff]
      %v329 = vld [vmem:[%s297 + $0x70] sm:$0xff]
      %v330 = vld [vmem:[%s297 + $0x78] sm:$0xff]
      %v331 = vld [vmem:[%s2] sm:$0x1]
      %v333 = vlaneseq
      %v334 = vshrl.u32 %v333, 7
      %v335 = vsub.s32 0, %v334
      %v336 = vrot.slane %v331, %v335
      %v338 = vmul.f32 %v315, %v336
      %v339 = vmul.f32 %v316, %v336
      %v340 = vmul.f32 %v317, %v336
      %v341 = vmul.f32 %v318, %v336
      %v342 = vmul.f32 %v319, %v336
      %v343 = vmul.f32 %v320, %v336
      %v344 = vmul.f32 %v321, %v336
      %v345 = vmul.f32 %v322, %v336
      %v346 = vmul.f32 %v323, %v336
      %v347 = vmul.f32 %v324, %v336
      %v348 = vmul.f32 %v325, %v336
      %v349 = vmul.f32 %v326, %v336
      %v350 = vmul.f32 %v327, %v336
      %v351 = vmul.f32 %v328, %v336
      %v352 = vmul.f32 %v329, %v336
      %v353 = vmul.f32 %v330, %v336
      %v354 = vld [vmem:[%s3] sm:$0x1]
      %v356 = vlaneseq
      %v357 = vshrl.u32 %v356, 7
      %v358 = vsub.s32 0, %v357
      %v359 = vrot.slane %v354, %v358
      %v361 = vadd.f32 %v338, %v359
      %v362 = vadd.f32 %v339, %v359
      %v363 = vadd.f32 %v340, %v359
      %v364 = vadd.f32 %v341, %v359
      %v365 = vadd.f32 %v342, %v359
      %v366 = vadd.f32 %v343, %v359
      %v367 = vadd.f32 %v344, %v359
      %v368 = vadd.f32 %v345, %v359
      %v369 = vadd.f32 %v346, %v359
      %v370 = vadd.f32 %v347, %v359
      %v371 = vadd.f32 %v348, %v359
      %v372 = vadd.f32 %v349, %v359
      %v373 = vadd.f32 %v350, %v359
      %v374 = vadd.f32 %v351, %v359
      %v375 = vadd.f32 %v352, %v359
      %v376 = vadd.f32 %v353, %v359
      %v377 = vld [vmem:[%s4] sm:$0xff]
      %v378 = vld [vmem:[%s4 + $0x8] sm:$0xff]
      %v379 = vld [vmem:[%s4 + $0x10] sm:$0xff]
      %v380 = vld [vmem:[%s4 + $0x18] sm:$0xff]
      %v381 = vld [vmem:[%s4 + $0x20] sm:$0xff]
      %v382 = vld [vmem:[%s4 + $0x28] sm:$0xff]
      %v383 = vld [vmem:[%s4 + $0x30] sm:$0xff]
      %v384 = vld [vmem:[%s4 + $0x38] sm:$0xff]
      %v385 = vld [vmem:[%s4 + $0x40] sm:$0xff]
      %v386 = vld [vmem:[%s4 + $0x48] sm:$0xff]
      %v387 = vld [vmem:[%s4 + $0x50] sm:$0xff]
      %v388 = vld [vmem:[%s4 + $0x58] sm:$0xff]
      %v389 = vld [vmem:[%s4 + $0x60] sm:$0xff]
      %v390 = vld [vmem:[%s4 + $0x68] sm:$0xff]
      %v391 = vld [vmem:[%s4 + $0x70] sm:$0xff]
      %v392 = vld [vmem:[%s4 + $0x78] sm:$0xff]
      %v393 = vld [vmem:[%s5] sm:$0x1]
      %v395 = vlaneseq
      %v396 = vshrl.u32 %v395, 7
      %v397 = vsub.s32 0, %v396
      %v398 = vrot.slane %v393, %v397
      %400 = vmatprep.subr.mxu0 0.0
      %v401 = vand.u32 %v377, 4294901760
      %402 = vmatpush1.msra.mxu0 %v401
      %403 = vmatprep.subr.mxu0 0.0
      %v404 = vand.u32 %v378, 4294901760
      %405 = vmatpush1.msra.mxu0 %v404
      %406 = vmatprep.subr.mxu0 0.0
      %v407 = vand.u32 %v379, 4294901760
      %408 = vmatpush1.msra.mxu0 %v407
      %409 = vmatprep.subr.mxu0 0.0
      %v410 = vand.u32 %v380, 4294901760
      %411 = vmatpush1.msra.mxu0 %v410
      %412 = vmatprep.subr.mxu0 0.0
      %v413 = vand.u32 %v381, 4294901760
      %414 = vmatpush1.msra.mxu0 %v413
      %415 = vmatprep.subr.mxu0 0.0
      %v416 = vand.u32 %v382, 4294901760
      %417 = vmatpush1.msra.mxu0 %v416
      %418 = vmatprep.subr.mxu0 0.0
      %v419 = vand.u32 %v383, 4294901760
      %420 = vmatpush1.msra.mxu0 %v419
      %421 = vmatprep.subr.mxu0 0.0
      %v422 = vand.u32 %v384, 4294901760
      %423 = vmatpush1.msra.mxu0 %v422
      %424 = vmatprep.subr.mxu0 0.0
      %v425 = vand.u32 %v385, 4294901760
      %426 = vmatpush1.msra.mxu0 %v425
      %427 = vmatprep.subr.mxu0 0.0
      %v428 = vand.u32 %v386, 4294901760
      %429 = vmatpush1.msra.mxu0 %v428
      %430 = vmatprep.subr.mxu0 0.0
      %v431 = vand.u32 %v387, 4294901760
      %432 = vmatpush1.msra.mxu0 %v431
      %433 = vmatprep.subr.mxu0 0.0
      %v434 = vand.u32 %v388, 4294901760
      %435 = vmatpush1.msra.mxu0 %v434
      %436 = vmatprep.subr.mxu0 0.0
      %v437 = vand.u32 %v389, 4294901760
      %438 = vmatpush1.msra.mxu0 %v437
      %439 = vmatprep.subr.mxu0 0.0
      %v440 = vand.u32 %v390, 4294901760
      %441 = vmatpush1.msra.mxu0 %v440
      %442 = vmatprep.subr.mxu0 0.0
      %v443 = vand.u32 %v391, 4294901760
      %444 = vmatpush1.msra.mxu0 %v443
      %445 = vmatprep.subr.mxu0 0.0
      %v446 = vand.u32 %v392, 4294901760
      %447 = vmatpush1.msra.mxu0 %v446
      %448 = vmatprep.subr.mxu0 0.0
      %449 = vmatpush1.msra.mxu0 0.0
      %450 = vmatprep.subr.mxu0 0.0
      %451 = vmatpush1.msra.mxu0 0.0
      %452 = vmatprep.subr.mxu0 0.0
      %453 = vmatpush1.msra.mxu0 0.0
      %454 = vmatprep.subr.mxu0 0.0
      %455 = vmatpush1.msra.mxu0 0.0
      %456 = vmatprep.subr.mxu0 0.0
      %457 = vmatpush1.msra.mxu0 0.0
      %458 = vmatprep.subr.mxu0 0.0
      %459 = vmatpush1.msra.mxu0 0.0
      %460 = vmatprep.subr.mxu0 0.0
      %461 = vmatpush1.msra.mxu0 0.0
      %462 = vmatprep.subr.mxu0 0.0
      %463 = vmatpush1.msra.mxu0 0.0
      %464 = vmatprep.subr.mxu0 0.0
      %465 = vmatpush1.msra.mxu0 0.0
      %466 = vmatprep.subr.mxu0 0.0
      %467 = vmatpush1.msra.mxu0 0.0
      %468 = vmatprep.subr.mxu0 0.0
      %469 = vmatpush1.msra.mxu0 0.0
      %470 = vmatprep.subr.mxu0 0.0
      %471 = vmatpush1.msra.mxu0 0.0
      %472 = vmatprep.subr.mxu0 0.0
      %473 = vmatpush1.msra.mxu0 0.0
      %474 = vmatprep.subr.mxu0 0.0
      %475 = vmatpush1.msra.mxu0 0.0
      %476 = vmatprep.subr.mxu0 0.0
      %477 = vmatpush1.msra.mxu0 0.0
      %478 = vmatprep.subr.mxu0 0.0
      %479 = vmatpush1.msra.mxu0 0.0
      %480 = vmatprep.mubr.f32.mxu0 0.0
      %v481 = vand.u32 %v361, 4294901760
      %v482 = vsub.f32 %v361, %v481
      %v483 = vand.u32 %v482, 4294901760
      %v484 = vsub.f32 %v482, %v483
      %v485 = vand.u32 %v484, 4294901760
      %486 = vmatmul.mubr.f32.gmra.mrb[0].mxu0 %v485
      %v487 = vpop.f32.mrb[0].mxu0
      %v488 = vadd.f32 %v398, %v487
      %v489 = vpop.f32.mrb[0].mxu0
      %490 = vmatprep.mubr.f32.mxu0 0.0
      %v491 = vand.u32 %v362, 4294901760
      %v492 = vsub.f32 %v362, %v491
      %v493 = vand.u32 %v492, 4294901760
      %v494 = vsub.f32 %v492, %v493
      %v495 = vand.u32 %v494, 4294901760
      %496 = vmatmul.mubr.f32.gmra.mrb[0].mxu0 %v495
      %v497 = vpop.f32.mrb[0].mxu0
      %v498 = vadd.f32 %v398, %v497
      %v499 = vpop.f32.mrb[0].mxu0
      %500 = vmatprep.mubr.f32.mxu0 0.0
      %v501 = vand.u32 %v363, 4294901760
      %v502 = vsub.f32 %v363, %v501
      %v503 = vand.u32 %v502, 4294901760
      %v504 = vsub.f32 %v502, %v503
      %v505 = vand.u32 %v504, 4294901760
      %506 = vmatmul.mubr.f32.gmra.mrb[0].mxu0 %v505
      %v507 = vpop.f32.mrb[0].mxu0
      %v508 = vadd.f32 %v398, %v507
      %v509 = vpop.f32.mrb[0].mxu0
      %510 = vmatprep.mubr.f32.mxu0 0.0
      %v511 = vand.u32 %v364, 4294901760
      %v512 = vsub.f32 %v364, %v511
      %v513 = vand.u32 %v512, 4294901760
      %v514 = vsub.f32 %v512, %v513
      %v515 = vand.u32 %v514, 4294901760
      %516 = vmatmul.mubr.f32.gmra.mrb[0].mxu0 %v515
      %v517 = vpop.f32.mrb[0].mxu0
      %v518 = vadd.f32 %v398, %v517
      %v519 = vpop.f32.mrb[0].mxu0
      %520 = vmatprep.mubr.f32.mxu0 0.0
      %v521 = vand.u32 %v365, 4294901760
      %v522 = vsub.f32 %v365, %v521
      %v523 = vand.u32 %v522, 4294901760
      %v524 = vsub.f32 %v522, %v523
      %v525 = vand.u32 %v524, 4294901760
      %526 = vmatmul.mubr.f32.gmra.mrb[0].mxu0 %v525
      %v527 = vpop.f32.mrb[0].mxu0
      %v528 = vadd.f32 %v398, %v527
      %v529 = vpop.f32.mrb[0].mxu0
      %530 = vmatprep.mubr.f32.mxu0 0.0
      %v531 = vand.u32 %v366, 4294901760
      %v532 = vsub.f32 %v366, %v531
      %v533 = vand.u32 %v532, 4294901760
      %v534 = vsub.f32 %v532, %v533
      %v535 = vand.u32 %v534, 4294901760
      %536 = vmatmul.mubr.f32.gmra.mrb[0].mxu0 %v535
      %v537 = vpop.f32.mrb[0].mxu0
      %v538 = vadd.f32 %v398, %v537
      %v539 = vpop.f32.mrb[0].mxu0
      %540 = vmatprep.mubr.f32.mxu0 0.0
      %v541 = vand.u32 %v367, 4294901760
      %v542 = vsub.f32 %v367, %v541
      %v543 = vand.u32 %v542, 4294901760
      %v544 = vsub.f32 %v542, %v543
      %v545 = vand.u32 %v544, 4294901760
      %546 = vmatmul.mubr.f32.gmra.mrb[0].mxu0 %v545
      %v547 = vpop.f32.mrb[0].mxu0
      %v548 = vadd.f32 %v398, %v547
      %v549 = vpop.f32.mrb[0].mxu0
      %550 = vmatprep.mubr.f32.mxu0 0.0
      %v551 = vand.u32 %v368, 4294901760
      %v552 = vsub.f32 %v368, %v551
      %v553 = vand.u32 %v552, 4294901760
      %v554 = vsub.f32 %v552, %v553
      %v555 = vand.u32 %v554, 4294901760
      %556 = vmatmul.mubr.f32.gmra.mrb[0].mxu0 %v555
      %v557 = vpop.f32.mrb[0].mxu0
      %v558 = vadd.f32 %v398, %v557
      %v559 = vpop.f32.mrb[0].mxu0
      %560 = vmatprep.mubr.f32.mxu0 0.0
      %v561 = vand.u32 %v369, 4294901760
      %v562 = vsub.f32 %v369, %v561
      %v563 = vand.u32 %v562, 4294901760
      %v564 = vsub.f32 %v562, %v563
      %v565 = vand.u32 %v564, 4294901760
      %566 = vmatmul.mubr.f32.gmra.mrb[0].mxu0 %v565
      %v567 = vpop.f32.mrb[0].mxu0
      %v568 = vadd.f32 %v398, %v567
      %v569 = vpop.f32.mrb[0].mxu0
      %570 = vmatprep.mubr.f32.mxu0 0.0
      %v571 = vand.u32 %v370, 4294901760
      %v572 = vsub.f32 %v370, %v571
      %v573 = vand.u32 %v572, 4294901760
      %v574 = vsub.f32 %v572, %v573
      %v575 = vand.u32 %v574, 4294901760
      %576 = vmatmul.mubr.f32.gmra.mrb[0].mxu0 %v575
      %v577 = vpop.f32.mrb[0].mxu0
      %v578 = vadd.f32 %v398, %v577
      %v579 = vpop.f32.mrb[0].mxu0
      %580 = vmatprep.mubr.f32.mxu0 0.0
      %v581 = vand.u32 %v371, 4294901760
      %v582 = vsub.f32 %v371, %v581
      %v583 = vand.u32 %v582, 4294901760
      %v584 = vsub.f32 %v582, %v583
      %v585 = vand.u32 %v584, 4294901760
      %586 = vmatmul.mubr.f32.gmra.mrb[0].mxu0 %v585
      %v587 = vpop.f32.mrb[0].mxu0
      %v588 = vadd.f32 %v398, %v587
      %v589 = vpop.f32.mrb[0].mxu0
      %590 = vmatprep.mubr.f32.mxu0 0.0
      %v591 = vand.u32 %v372, 4294901760
      %v592 = vsub.f32 %v372, %v591
      %v593 = vand.u32 %v592, 4294901760
      %v594 = vsub.f32 %v592, %v593
      %v595 = vand.u32 %v594, 4294901760
      %596 = vmatmul.mubr.f32.gmra.mrb[0].mxu0 %v595
      %v597 = vpop.f32.mrb[0].mxu0
      %v598 = vadd.f32 %v398, %v597
      %v599 = vpop.f32.mrb[0].mxu0
      %600 = vmatprep.mubr.f32.mxu0 0.0
      %v601 = vand.u32 %v373, 4294901760
      %v602 = vsub.f32 %v373, %v601
      %v603 = vand.u32 %v602, 4294901760
      %v604 = vsub.f32 %v602, %v603
      %v605 = vand.u32 %v604, 4294901760
      %606 = vmatmul.mubr.f32.gmra.mrb[0].mxu0 %v605
      %v607 = vpop.f32.mrb[0].mxu0
      %v608 = vadd.f32 %v398, %v607
      %v609 = vpop.f32.mrb[0].mxu0
      %610 = vmatprep.mubr.f32.mxu0 0.0
      %v611 = vand.u32 %v374, 4294901760
      %v612 = vsub.f32 %v374, %v611
      %v613 = vand.u32 %v612, 4294901760
      %v614 = vsub.f32 %v612, %v613
      %v615 = vand.u32 %v614, 4294901760
      %616 = vmatmul.mubr.f32.gmra.mrb[0].mxu0 %v615
      %v617 = vpop.f32.mrb[0].mxu0
      %v618 = vadd.f32 %v398, %v617
      %v619 = vpop.f32.mrb[0].mxu0
      %620 = vmatprep.mubr.f32.mxu0 0.0
      %v621 = vand.u32 %v375, 4294901760
      %v622 = vsub.f32 %v375, %v621
      %v623 = vand.u32 %v622, 4294901760
      %v624 = vsub.f32 %v622, %v623
      %v625 = vand.u32 %v624, 4294901760
      %626 = vmatmul.mubr.f32.gmra.mrb[0].mxu0 %v625
      %v627 = vpop.f32.mrb[0].mxu0
      %v628 = vadd.f32 %v398, %v627
      %v629 = vpop.f32.mrb[0].mxu0
      %630 = vmatprep.mubr.f32.mxu0 0.0
      %v631 = vand.u32 %v376, 4294901760
      %v632 = vsub.f32 %v376, %v631
      %v633 = vand.u32 %v632, 4294901760
      %v634 = vsub.f32 %v632, %v633
      %v635 = vand.u32 %v634, 4294901760
      %636 = vmatmul.mubr.f32.gmra.mrb[0].mxu0 %v635
      %v637 = vpop.f32.mrb[0].mxu0
      %v638 = vadd.f32 %v398, %v637
      %v639 = vpop.f32.mrb[0].mxu0
      %640 = vdwg.mxu0
      %641 = vmatprep.subr.mxu0 0.0
      %v642 = vand.u32 %v377, 4294901760
      %v643 = vsub.f32 %v377, %v642
      %v644 = vand.u32 %v643, 4294901760
      %v645 = vsub.f32 %v643, %v644
      %v646 = vand.u32 %v645, 4294901760
      %647 = vmatpush1.msra.mxu0 %v646
      %648 = vmatprep.subr.mxu0 0.0
      %v649 = vand.u32 %v378, 4294901760
      %v650 = vsub.f32 %v378, %v649
      %v651 = vand.u32 %v650, 4294901760
      %v652 = vsub.f32 %v650, %v651
      %v653 = vand.u32 %v652, 4294901760
      %654 = vmatpush1.msra.mxu0 %v653
      %655 = vmatprep.subr.mxu0 0.0
      %v656 = vand.u32 %v379, 4294901760
      %v657 = vsub.f32 %v379, %v656
      %v658 = vand.u32 %v657, 4294901760
      %v659 = vsub.f32 %v657, %v658
      %v660 = vand.u32 %v659, 4294901760
      %661 = vmatpush1.msra.mxu0 %v660
      %662 = vmatprep.subr.mxu0 0.0
      %v663 = vand.u32 %v380, 4294901760
      %v664 = vsub.f32 %v380, %v663
      %v665 = vand.u32 %v664, 4294901760
      %v666 = vsub.f32 %v664, %v665
      %v667 = vand.u32 %v666, 4294901760
      %668 = vmatpush1.msra.mxu0 %v667
      %669 = vmatprep.subr.mxu0 0.0
      %v670 = vand.u32 %v381, 4294901760
      %v671 = vsub.f32 %v381, %v670
      %v672 = vand.u32 %v671, 4294901760
      %v673 = vsub.f32 %v671, %v672
      %v674 = vand.u32 %v673, 4294901760
      %675 = vmatpush1.msra.mxu0 %v674
      %676 = vmatprep.subr.mxu0 0.0
      %v677 = vand.u32 %v382, 4294901760
      %v678 = vsub.f32 %v382, %v677
      %v679 = vand.u32 %v678, 4294901760
      %v680 = vsub.f32 %v678, %v679
      %v681 = vand.u32 %v680, 4294901760
      %682 = vmatpush1.msra.mxu0 %v681
      %683 = vmatprep.subr.mxu0 0.0
      %v684 = vand.u32 %v383, 4294901760
      %v685 = vsub.f32 %v383, %v684
      %v686 = vand.u32 %v685, 4294901760
      %v687 = vsub.f32 %v685, %v686
      %v688 = vand.u32 %v687, 4294901760
      %689 = vmatpush1.msra.mxu0 %v688
      %690 = vmatprep.subr.mxu0 0.0
      %v691 = vand.u32 %v384, 4294901760
      %v692 = vsub.f32 %v384, %v691
      %v693 = vand.u32 %v692, 4294901760
      %v694 = vsub.f32 %v692, %v693
      %v695 = vand.u32 %v694, 4294901760
      %696 = vmatpush1.msra.mxu0 %v695
      %697 = vmatprep.subr.mxu0 0.0
      %v698 = vand.u32 %v385, 4294901760
      %v699 = vsub.f32 %v385, %v698
      %v700 = vand.u32 %v699, 4294901760
      %v701 = vsub.f32 %v699, %v700
      %v702 = vand.u32 %v701, 4294901760
      %703 = vmatpush1.msra.mxu0 %v702
      %704 = vmatprep.subr.mxu0 0.0
      %v705 = vand.u32 %v386, 4294901760
      %v706 = vsub.f32 %v386, %v705
      %v707 = vand.u32 %v706, 4294901760
      %v708 = vsub.f32 %v706, %v707
      %v709 = vand.u32 %v708, 4294901760
      %710 = vmatpush1.msra.mxu0 %v709
      %711 = vmatprep.subr.mxu0 0.0
      %v712 = vand.u32 %v387, 4294901760
      %v713 = vsub.f32 %v387, %v712
      %v714 = vand.u32 %v713, 4294901760
      %v715 = vsub.f32 %v713, %v714
      %v716 = vand.u32 %v715, 4294901760
      %717 = vmatpush1.msra.mxu0 %v716
      %718 = vmatprep.subr.mxu0 0.0
      %v719 = vand.u32 %v388, 4294901760
      %v720 = vsub.f32 %v388, %v719
      %v721 = vand.u32 %v720, 4294901760
      %v722 = vsub.f32 %v720, %v721
      %v723 = vand.u32 %v722, 4294901760
      %724 = vmatpush1.msra.mxu0 %v723
      %725 = vmatprep.subr.mxu0 0.0
      %v726 = vand.u32 %v389, 4294901760
      %v727 = vsub.f32 %v389, %v726
      %v728 = vand.u32 %v727, 4294901760
      %v729 = vsub.f32 %v727, %v728
      %v730 = vand.u32 %v729, 4294901760
      %731 = vmatpush1.msra.mxu0 %v730
      %732 = vmatprep.subr.mxu0 0.0
      %v733 = vand.u32 %v390, 4294901760
      %v734 = vsub.f32 %v390, %v733
      %v735 = vand.u32 %v734, 4294901760
      %v736 = vsub.f32 %v734, %v735
      %v737 = vand.u32 %v736, 4294901760
      %738 = vmatpush1.msra.mxu0 %v737
      %739 = vmatprep.subr.mxu0 0.0
      %v740 = vand.u32 %v391, 4294901760
      %v741 = vsub.f32 %v391, %v740
      %v742 = vand.u32 %v741, 4294901760
      %v743 = vsub.f32 %v741, %v742
      %v744 = vand.u32 %v743, 4294901760
      %745 = vmatpush1.msra.mxu0 %v744
      %746 = vmatprep.subr.mxu0 0.0
      %v747 = vand.u32 %v392, 4294901760
      %v748 = vsub.f32 %v392, %v747
      %v749 = vand.u32 %v748, 4294901760
      %v750 = vsub.f32 %v748, %v749
      %v751 = vand.u32 %v750, 4294901760
      %752 = vmatpush1.msra.mxu0 %v751
      %753 = vmatprep.subr.mxu0 0.0
      %754 = vmatpush1.msra.mxu0 0.0
      %755 = vmatprep.subr.mxu0 0.0
      %756 = vmatpush1.msra.mxu0 0.0
      %757 = vmatprep.subr.mxu0 0.0
      %758 = vmatpush1.msra.mxu0 0.0
      %759 = vmatprep.subr.mxu0 0.0
      %760 = vmatpush1.msra.mxu0 0.0
      %761 = vmatprep.subr.mxu0 0.0
      %762 = vmatpush1.msra.mxu0 0.0
      %763 = vmatprep.subr.mxu0 0.0
      %764 = vmatpush1.msra.mxu0 0.0
      %765 = vmatprep.subr.mxu0 0.0
      %766 = vmatpush1.msra.mxu0 0.0
      %767 = vmatprep.subr.mxu0 0.0
      %768 = vmatpush1.msra.mxu0 0.0
      %769 = vmatprep.subr.mxu0 0.0
      %770 = vmatpush1.msra.mxu0 0.0
      %771 = vmatprep.subr.mxu0 0.0
      %772 = vmatpush1.msra.mxu0 0.0
      %773 = vmatprep.subr.mxu0 0.0
      %774 = vmatpush1.msra.mxu0 0.0
      %775 = vmatprep.subr.mxu0 0.0
      %776 = vmatpush1.msra.mxu0 0.0
      %777 = vmatprep.subr.mxu0 0.0
      %778 = vmatpush1.msra.mxu0 0.0
      %779 = vmatprep.subr.mxu0 0.0
      %780 = vmatpush1.msra.mxu0 0.0
      %781 = vmatprep.subr.mxu0 0.0
      %782 = vmatpush1.msra.mxu0 0.0
      %783 = vmatprep.subr.mxu0 0.0
      %784 = vmatpush1.msra.mxu0 0.0
      %785 = vmatprep.mubr.f32.mxu0 0.0
      %v786 = vand.u32 %v361, 4294901760
      %787 = vmatmul.mubr.f32.gmra.mrb[0].mxu0 %v786
      %v788 = vpop.f32.mrb[0].mxu0
      %v789 = vadd.f32 %v488, %v788
      %v790 = vpop.f32.mrb[0].mxu0
      %791 = vmatprep.mubr.f32.mxu0 0.0
      %v792 = vand.u32 %v362, 4294901760
      %793 = vmatmul.mubr.f32.gmra.mrb[0].mxu0 %v792
      %v794 = vpop.f32.mrb[0].mxu0
      %v795 = vadd.f32 %v498, %v794
      %v796 = vpop.f32.mrb[0].mxu0
      %797 = vmatprep.mubr.f32.mxu0 0.0
      %v798 = vand.u32 %v363, 4294901760
      %799 = vmatmul.mubr.f32.gmra.mrb[0].mxu0 %v798
      %v800 = vpop.f32.mrb[0].mxu0
      %v801 = vadd.f32 %v508, %v800
      %v802 = vpop.f32.mrb[0].mxu0
      %803 = vmatprep.mubr.f32.mxu0 0.0
      %v804 = vand.u32 %v364, 4294901760
      %805 = vmatmul.mubr.f32.gmra.mrb[0].mxu0 %v804
      %v806 = vpop.f32.mrb[0].mxu0
      %v807 = vadd.f32 %v518, %v806
      %v808 = vpop.f32.mrb[0].mxu0
      %809 = vmatprep.mubr.f32.mxu0 0.0
      %v810 = vand.u32 %v365, 4294901760
      %811 = vmatmul.mubr.f32.gmra.mrb[0].mxu0 %v810
      %v812 = vpop.f32.mrb[0].mxu0
      %v813 = vadd.f32 %v528, %v812
      %v814 = vpop.f32.mrb[0].mxu0
      %815 = vmatprep.mubr.f32.mxu0 0.0
      %v816 = vand.u32 %v366, 4294901760
      %817 = vmatmul.mubr.f32.gmra.mrb[0].mxu0 %v816
      %v818 = vpop.f32.mrb[0].mxu0
      %v819 = vadd.f32 %v538, %v818
      %v820 = vpop.f32.mrb[0].mxu0
      %821 = vmatprep.mubr.f32.mxu0 0.0
      %v822 = vand.u32 %v367, 4294901760
      %823 = vmatmul.mubr.f32.gmra.mrb[0].mxu0 %v822
      %v824 = vpop.f32.mrb[0].mxu0
      %v825 = vadd.f32 %v548, %v824
      %v826 = vpop.f32.mrb[0].mxu0
      %827 = vmatprep.mubr.f32.mxu0 0.0
      %v828 = vand.u32 %v368, 4294901760
      %829 = vmatmul.mubr.f32.gmra.mrb[0].mxu0 %v828
      %v830 = vpop.f32.mrb[0].mxu0
      %v831 = vadd.f32 %v558, %v830
      %v832 = vpop.f32.mrb[0].mxu0
      %833 = vmatprep.mubr.f32.mxu0 0.0
      %v834 = vand.u32 %v369, 4294901760
      %835 = vmatmul.mubr.f32.gmra.mrb[0].mxu0 %v834
      %v836 = vpop.f32.mrb[0].mxu0
      %v837 = vadd.f32 %v568, %v836
      %v838 = vpop.f32.mrb[0].mxu0
      %839 = vmatprep.mubr.f32.mxu0 0.0
      %v840 = vand.u32 %v370, 4294901760
      %841 = vmatmul.mubr.f32.gmra.mrb[0].mxu0 %v840
      %v842 = vpop.f32.mrb[0].mxu0
      %v843 = vadd.f32 %v578, %v842
      %v844 = vpop.f32.mrb[0].mxu0
      %845 = vmatprep.mubr.f32.mxu0 0.0
      %v846 = vand.u32 %v371, 4294901760
      %847 = vmatmul.mubr.f32.gmra.mrb[0].mxu0 %v846
      %v848 = vpop.f32.mrb[0].mxu0
      %v849 = vadd.f32 %v588, %v848
      %v850 = vpop.f32.mrb[0].mxu0
      %851 = vmatprep.mubr.f32.mxu0 0.0
      %v852 = vand.u32 %v372, 4294901760
      %853 = vmatmul.mubr.f32.gmra.mrb[0].mxu0 %v852
      %v854 = vpop.f32.mrb[0].mxu0
      %v855 = vadd.f32 %v598, %v854
      %v856 = vpop.f32.mrb[0].mxu0
      %857 = vmatprep.mubr.f32.mxu0 0.0
      %v858 = vand.u32 %v373, 4294901760
      %859 = vmatmul.mubr.f32.gmra.mrb[0].mxu0 %v858
      %v860 = vpop.f32.mrb[0].mxu0
      %v861 = vadd.f32 %v608, %v860
      %v862 = vpop.f32.mrb[0].mxu0
      %863 = vmatprep.mubr.f32.mxu0 0.0
      %v864 = vand.u32 %v374, 4294901760
      %865 = vmatmul.mubr.f32.gmra.mrb[0].mxu0 %v864
      %v866 = vpop.f32.mrb[0].mxu0
      %v867 = vadd.f32 %v618, %v866
      %v868 = vpop.f32.mrb[0].mxu0
      %869 = vmatprep.mubr.f32.mxu0 0.0
      %v870 = vand.u32 %v375, 4294901760
      %871 = vmatmul.mubr.f32.gmra.mrb[0].mxu0 %v870
      %v872 = vpop.f32.mrb[0].mxu0
      %v873 = vadd.f32 %v628, %v872
      %v874 = vpop.f32.mrb[0].mxu0
      %875 = vmatprep.mubr.f32.mxu0 0.0
      %v876 = vand.u32 %v376, 4294901760
      %877 = vmatmul.mubr.f32.gmra.mrb[0].mxu0 %v876
      %v878 = vpop.f32.mrb[0].mxu0
      %v879 = vadd.f32 %v638, %v878
      %v880 = vpop.f32.mrb[0].mxu0
      %881 = vdwg.mxu0
      %882 = vmatprep.subr.mxu0 0.0
      %v883 = vand.u32 %v377, 4294901760
      %v884 = vsub.f32 %v377, %v883
      %885 = vmatpush1.msra.mxu0 %v884
      %886 = vmatprep.subr.mxu0 0.0
      %v887 = vand.u32 %v378, 4294901760
      %v888 = vsub.f32 %v378, %v887
      %889 = vmatpush1.msra.mxu0 %v888
      %890 = vmatprep.subr.mxu0 0.0
      %v891 = vand.u32 %v379, 4294901760
      %v892 = vsub.f32 %v379, %v891
      %893 = vmatpush1.msra.mxu0 %v892
      %894 = vmatprep.subr.mxu0 0.0
      %v895 = vand.u32 %v380, 4294901760
      %v896 = vsub.f32 %v380, %v895
      %897 = vmatpush1.msra.mxu0 %v896
      %898 = vmatprep.subr.mxu0 0.0
      %v899 = vand.u32 %v381, 4294901760
      %v900 = vsub.f32 %v381, %v899
      %901 = vmatpush1.msra.mxu0 %v900
      %902 = vmatprep.subr.mxu0 0.0
      %v903 = vand.u32 %v382, 4294901760
      %v904 = vsub.f32 %v382, %v903
      %905 = vmatpush1.msra.mxu0 %v904
      %906 = vmatprep.subr.mxu0 0.0
      %v907 = vand.u32 %v383, 4294901760
      %v908 = vsub.f32 %v383, %v907
      %909 = vmatpush1.msra.mxu0 %v908
      %910 = vmatprep.subr.mxu0 0.0
      %v911 = vand.u32 %v384, 4294901760
      %v912 = vsub.f32 %v384, %v911
      %913 = vmatpush1.msra.mxu0 %v912
      %914 = vmatprep.subr.mxu0 0.0
      %v915 = vand.u32 %v385, 4294901760
      %v916 = vsub.f32 %v385, %v915
      %917 = vmatpush1.msra.mxu0 %v916
      %918 = vmatprep.subr.mxu0 0.0
      %v919 = vand.u32 %v386, 4294901760
      %v920 = vsub.f32 %v386, %v919
      %921 = vmatpush1.msra.mxu0 %v920
      %922 = vmatprep.subr.mxu0 0.0
      %v923 = vand.u32 %v387, 4294901760
      %v924 = vsub.f32 %v387, %v923
      %925 = vmatpush1.msra.mxu0 %v924
      %926 = vmatprep.subr.mxu0 0.0
      %v927 = vand.u32 %v388, 4294901760
      %v928 = vsub.f32 %v388, %v927
      %929 = vmatpush1.msra.mxu0 %v928
      %930 = vmatprep.subr.mxu0 0.0
      %v931 = vand.u32 %v389, 4294901760
      %v932 = vsub.f32 %v389, %v931
      %933 = vmatpush1.msra.mxu0 %v932
      %934 = vmatprep.subr.mxu0 0.0
      %v935 = vand.u32 %v390, 4294901760
      %v936 = vsub.f32 %v390, %v935
      %937 = vmatpush1.msra.mxu0 %v936
      %938 = vmatprep.subr.mxu0 0.0
      %v939 = vand.u32 %v391, 4294901760
      %v940 = vsub.f32 %v391, %v939
      %941 = vmatpush1.msra.mxu0 %v940
      %942 = vmatprep.subr.mxu0 0.0
      %v943 = vand.u32 %v392, 4294901760
      %v944 = vsub.f32 %v392, %v943
      %945 = vmatpush1.msra.mxu0 %v944
      %946 = vmatprep.subr.mxu0 0.0
      %947 = vmatpush1.msra.mxu0 0.0
      %948 = vmatprep.subr.mxu0 0.0
      %949 = vmatpush1.msra.mxu0 0.0
      %950 = vmatprep.subr.mxu0 0.0
      %951 = vmatpush1.msra.mxu0 0.0
      %952 = vmatprep.subr.mxu0 0.0
      %953 = vmatpush1.msra.mxu0 0.0
      %954 = vmatprep.subr.mxu0 0.0
      %955 = vmatpush1.msra.mxu0 0.0
      %956 = vmatprep.subr.mxu0 0.0
      %957 = vmatpush1.msra.mxu0 0.0
      %958 = vmatprep.subr.mxu0 0.0
      %959 = vmatpush1.msra.mxu0 0.0
      %960 = vmatprep.subr.mxu0 0.0
      %961 = vmatpush1.msra.mxu0 0.0
      %962 = vmatprep.subr.mxu0 0.0
      %963 = vmatpush1.msra.mxu0 0.0
      %964 = vmatprep.subr.mxu0 0.0
      %965 = vmatpush1.msra.mxu0 0.0
      %966 = vmatprep.subr.mxu0 0.0
      %967 = vmatpush1.msra.mxu0 0.0
      %968 = vmatprep.subr.mxu0 0.0
      %969 = vmatpush1.msra.mxu0 0.0
      %970 = vmatprep.subr.mxu0 0.0
      %971 = vmatpush1.msra.mxu0 0.0
      %972 = vmatprep.subr.mxu0 0.0
      %973 = vmatpush1.msra.mxu0 0.0
      %974 = vmatprep.subr.mxu0 0.0
      %975 = vmatpush1.msra.mxu0 0.0
      %976 = vmatprep.subr.mxu0 0.0
      %977 = vmatpush1.msra.mxu0 0.0
      %978 = vmatprep.mubr.f32.mxu0 0.0
      %v979 = vand.u32 %v361, 4294901760
      %v980 = vsub.f32 %v361, %v979
      %981 = vmatmul.mubr.f32.gmra.mrb[0].mxu0 %v980
      %v982 = vpop.f32.mrb[0].mxu0
      %v983 = vadd.f32 %v789, %v982
      %v984 = vpop.f32.mrb[0].mxu0
      %985 = vmatprep.mubr.f32.mxu0 0.0
      %v986 = vand.u32 %v362, 4294901760
      %v987 = vsub.f32 %v362, %v986
      %988 = vmatmul.mubr.f32.gmra.mrb[0].mxu0 %v987
      %v989 = vpop.f32.mrb[0].mxu0
      %v990 = vadd.f32 %v795, %v989
      %v991 = vpop.f32.mrb[0].mxu0
      %992 = vmatprep.mubr.f32.mxu0 0.0
      %v993 = vand.u32 %v363, 4294901760
      %v994 = vsub.f32 %v363, %v993
      %995 = vmatmul.mubr.f32.gmra.mrb[0].mxu0 %v994
      %v996 = vpop.f32.mrb[0].mxu0
      %v997 = vadd.f32 %v801, %v996
      %v998 = vpop.f32.mrb[0].mxu0
      %999 = vmatprep.mubr.f32.mxu0 0.0
      %v1000 = vand.u32 %v364, 4294901760
      %v1001 = vsub.f32 %v364, %v1000
      %1002 = vmatmul.mubr.f32.gmra.mrb[0].mxu0 %v1001
      %v1003 = vpop.f32.mrb[0].mxu0
      %v1004 = vadd.f32 %v807, %v1003
      %v1005 = vpop.f32.mrb[0].mxu0
      %1006 = vmatprep.mubr.f32.mxu0 0.0
      %v1007 = vand.u32 %v365, 4294901760
      %v1008 = vsub.f32 %v365, %v1007
      %1009 = vmatmul.mubr.f32.gmra.mrb[0].mxu0 %v1008
      %v1010 = vpop.f32.mrb[0].mxu0
      %v1011 = vadd.f32 %v813, %v1010
      %v1012 = vpop.f32.mrb[0].mxu0
      %1013 = vmatprep.mubr.f32.mxu0 0.0
      %v1014 = vand.u32 %v366, 4294901760
      %v1015 = vsub.f32 %v366, %v1014
      %1016 = vmatmul.mubr.f32.gmra.mrb[0].mxu0 %v1015
      %v1017 = vpop.f32.mrb[0].mxu0
      %v1018 = vadd.f32 %v819, %v1017
      %v1019 = vpop.f32.mrb[0].mxu0
      %1020 = vmatprep.mubr.f32.mxu0 0.0
      %v1021 = vand.u32 %v367, 4294901760
      %v1022 = vsub.f32 %v367, %v1021
      %1023 = vmatmul.mubr.f32.gmra.mrb[0].mxu0 %v1022
      %v1024 = vpop.f32.mrb[0].mxu0
      %v1025 = vadd.f32 %v825, %v1024
      %v1026 = vpop.f32.mrb[0].mxu0
      %1027 = vmatprep.mubr.f32.mxu0 0.0
      %v1028 = vand.u32 %v368, 4294901760
      %v1029 = vsub.f32 %v368, %v1028
      %1030 = vmatmul.mubr.f32.gmra.mrb[0].mxu0 %v1029
      %v1031 = vpop.f32.mrb[0].mxu0
      %v1032 = vadd.f32 %v831, %v1031
      %v1033 = vpop.f32.mrb[0].mxu0
      %1034 = vmatprep.mubr.f32.mxu0 0.0
      %v1035 = vand.u32 %v369, 4294901760
      %v1036 = vsub.f32 %v369, %v1035
      %1037 = vmatmul.mubr.f32.gmra.mrb[0].mxu0 %v1036
      %v1038 = vpop.f32.mrb[0].mxu0
      %v1039 = vadd.f32 %v837, %v1038
      %v1040 = vpop.f32.mrb[0].mxu0
      %1041 = vmatprep.mubr.f32.mxu0 0.0
      %v1042 = vand.u32 %v370, 4294901760
      %v1043 = vsub.f32 %v370, %v1042
      %1044 = vmatmul.mubr.f32.gmra.mrb[0].mxu0 %v1043
      %v1045 = vpop.f32.mrb[0].mxu0
      %v1046 = vadd.f32 %v843, %v1045
      %v1047 = vpop.f32.mrb[0].mxu0
      %1048 = vmatprep.mubr.f32.mxu0 0.0
      %v1049 = vand.u32 %v371, 4294901760
      %v1050 = vsub.f32 %v371, %v1049
      %1051 = vmatmul.mubr.f32.gmra.mrb[0].mxu0 %v1050
      %v1052 = vpop.f32.mrb[0].mxu0
      %v1053 = vadd.f32 %v849, %v1052
      %v1054 = vpop.f32.mrb[0].mxu0
      %1055 = vmatprep.mubr.f32.mxu0 0.0
      %v1056 = vand.u32 %v372, 4294901760
      %v1057 = vsub.f32 %v372, %v1056
      %1058 = vmatmul.mubr.f32.gmra.mrb[0].mxu0 %v1057
      %v1059 = vpop.f32.mrb[0].mxu0
      %v1060 = vadd.f32 %v855, %v1059
      %v1061 = vpop.f32.mrb[0].mxu0
      %1062 = vmatprep.mubr.f32.mxu0 0.0
      %v1063 = vand.u32 %v373, 4294901760
      %v1064 = vsub.f32 %v373, %v1063
      %1065 = vmatmul.mubr.f32.gmra.mrb[0].mxu0 %v1064
      %v1066 = vpop.f32.mrb[0].mxu0
      %v1067 = vadd.f32 %v861, %v1066
      %v1068 = vpop.f32.mrb[0].mxu0
      %1069 = vmatprep.mubr.f32.mxu0 0.0
      %v1070 = vand.u32 %v374, 4294901760
      %v1071 = vsub.f32 %v374, %v1070
      %1072 = vmatmul.mubr.f32.gmra.mrb[0].mxu0 %v1071
      %v1073 = vpop.f32.mrb[0].mxu0
      %v1074 = vadd.f32 %v867, %v1073
      %v1075 = vpop.f32.mrb[0].mxu0
      %1076 = vmatprep.mubr.f32.mxu0 0.0
      %v1077 = vand.u32 %v375, 4294901760
      %v1078 = vsub.f32 %v375, %v1077
      %1079 = vmatmul.mubr.f32.gmra.mrb[0].mxu0 %v1078
      %v1080 = vpop.f32.mrb[0].mxu0
      %v1081 = vadd.f32 %v873, %v1080
      %v1082 = vpop.f32.mrb[0].mxu0
      %1083 = vmatprep.mubr.f32.mxu0 0.0
      %v1084 = vand.u32 %v376, 4294901760
      %v1085 = vsub.f32 %v376, %v1084
      %1086 = vmatmul.mubr.f32.gmra.mrb[0].mxu0 %v1085
      %v1087 = vpop.f32.mrb[0].mxu0
      %v1088 = vadd.f32 %v879, %v1087
      %v1089 = vpop.f32.mrb[0].mxu0
      %1090 = vdwg.mxu0
      %1091 = vmatprep.subr.mxu0 0.0
      %v1092 = vand.u32 %v377, 4294901760
      %1093 = vmatpush1.msra.mxu0 %v1092
      %1094 = vmatprep.subr.mxu0 0.0
      %v1095 = vand.u32 %v378, 4294901760
      %1096 = vmatpush1.msra.mxu0 %v1095
      %1097 = vmatprep.subr.mxu0 0.0
      %v1098 = vand.u32 %v379, 4294901760
      %1099 = vmatpush1.msra.mxu0 %v1098
      %1100 = vmatprep.subr.mxu0 0.0
      %v1101 = vand.u32 %v380, 4294901760
      %1102 = vmatpush1.msra.mxu0 %v1101
      %1103 = vmatprep.subr.mxu0 0.0
      %v1104 = vand.u32 %v381, 4294901760
      %1105 = vmatpush1.msra.mxu0 %v1104
      %1106 = vmatprep.subr.mxu0 0.0
      %v1107 = vand.u32 %v382, 4294901760
      %1108 = vmatpush1.msra.mxu0 %v1107
      %1109 = vmatprep.subr.mxu0 0.0
      %v1110 = vand.u32 %v383, 4294901760
      %1111 = vmatpush1.msra.mxu0 %v1110
      %1112 = vmatprep.subr.mxu0 0.0
      %v1113 = vand.u32 %v384, 4294901760
      %1114 = vmatpush1.msra.mxu0 %v1113
      %1115 = vmatprep.subr.mxu0 0.0
      %v1116 = vand.u32 %v385, 4294901760
      %1117 = vmatpush1.msra.mxu0 %v1116
      %1118 = vmatprep.subr.mxu0 0.0
      %v1119 = vand.u32 %v386, 4294901760
      %1120 = vmatpush1.msra.mxu0 %v1119
      %1121 = vmatprep.subr.mxu0 0.0
      %v1122 = vand.u32 %v387, 4294901760
      %1123 = vmatpush1.msra.mxu0 %v1122
      %1124 = vmatprep.subr.mxu0 0.0
      %v1125 = vand.u32 %v388, 4294901760
      %1126 = vmatpush1.msra.mxu0 %v1125
      %1127 = vmatprep.subr.mxu0 0.0
      %v1128 = vand.u32 %v389, 4294901760
      %1129 = vmatpush1.msra.mxu0 %v1128
      %1130 = vmatprep.subr.mxu0 0.0
      %v1131 = vand.u32 %v390, 4294901760
      %1132 = vmatpush1.msra.mxu0 %v1131
      %1133 = vmatprep.subr.mxu0 0.0
      %v1134 = vand.u32 %v391, 4294901760
      %1135 = vmatpush1.msra.mxu0 %v1134
      %1136 = vmatprep.subr.mxu0 0.0
      %v1137 = vand.u32 %v392, 4294901760
      %1138 = vmatpush1.msra.mxu0 %v1137
      %1139 = vmatprep.subr.mxu0 0.0
      %1140 = vmatpush1.msra.mxu0 0.0
      %1141 = vmatprep.subr.mxu0 0.0
      %1142 = vmatpush1.msra.mxu0 0.0
      %1143 = vmatprep.subr.mxu0 0.0
      %1144 = vmatpush1.msra.mxu0 0.0
      %1145 = vmatprep.subr.mxu0 0.0
      %1146 = vmatpush1.msra.mxu0 0.0
      %1147 = vmatprep.subr.mxu0 0.0
      %1148 = vmatpush1.msra.mxu0 0.0
      %1149 = vmatprep.subr.mxu0 0.0
      %1150 = vmatpush1.msra.mxu0 0.0
      %1151 = vmatprep.subr.mxu0 0.0
      %1152 = vmatpush1.msra.mxu0 0.0
      %1153 = vmatprep.subr.mxu0 0.0
      %1154 = vmatpush1.msra.mxu0 0.0
      %1155 = vmatprep.subr.mxu0 0.0
      %1156 = vmatpush1.msra.mxu0 0.0
      %1157 = vmatprep.subr.mxu0 0.0
      %1158 = vmatpush1.msra.mxu0 0.0
      %1159 = vmatprep.subr.mxu0 0.0
      %1160 = vmatpush1.msra.mxu0 0.0
      %1161 = vmatprep.subr.mxu0 0.0
      %1162 = vmatpush1.msra.mxu0 0.0
      %1163 = vmatprep.subr.mxu0 0.0
      %1164 = vmatpush1.msra.mxu0 0.0
      %1165 = vmatprep.subr.mxu0 0.0
      %1166 = vmatpush1.msra.mxu0 0.0
      %1167 = vmatprep.subr.mxu0 0.0
      %1168 = vmatpush1.msra.mxu0 0.0
      %1169 = vmatprep.subr.mxu0 0.0
      %1170 = vmatpush1.msra.mxu0 0.0
      %1171 = vmatprep.mubr.f32.mxu0 0.0
      %v1172 = vand.u32 %v361, 4294901760
      %v1173 = vsub.f32 %v361, %v1172
      %v1174 = vand.u32 %v1173, 4294901760
      %1175 = vmatmul.mubr.f32.gmra.mrb[0].mxu0 %v1174
      %v1176 = vpop.f32.mrb[0].mxu0
      %v1177 = vadd.f32 %v983, %v1176
      %v1178 = vpop.f32.mrb[0].mxu0
      %1179 = vmatprep.mubr.f32.mxu0 0.0
      %v1180 = vand.u32 %v362, 4294901760
      %v1181 = vsub.f32 %v362, %v1180
      %v1182 = vand.u32 %v1181, 4294901760
      %1183 = vmatmul.mubr.f32.gmra.mrb[0].mxu0 %v1182
      %v1184 = vpop.f32.mrb[0].mxu0
      %v1185 = vadd.f32 %v990, %v1184
      %v1186 = vpop.f32.mrb[0].mxu0
      %1187 = vmatprep.mubr.f32.mxu0 0.0
      %v1188 = vand.u32 %v363, 4294901760
      %v1189 = vsub.f32 %v363, %v1188
      %v1190 = vand.u32 %v1189, 4294901760
      %1191 = vmatmul.mubr.f32.gmra.mrb[0].mxu0 %v1190
      %v1192 = vpop.f32.mrb[0].mxu0
      %v1193 = vadd.f32 %v997, %v1192
      %v1194 = vpop.f32.mrb[0].mxu0
      %1195 = vmatprep.mubr.f32.mxu0 0.0
      %v1196 = vand.u32 %v364, 4294901760
      %v1197 = vsub.f32 %v364, %v1196
      %v1198 = vand.u32 %v1197, 4294901760
      %1199 = vmatmul.mubr.f32.gmra.mrb[0].mxu0 %v1198
      %v1200 = vpop.f32.mrb[0].mxu0
      %v1201 = vadd.f32 %v1004, %v1200
      %v1202 = vpop.f32.mrb[0].mxu0
      %1203 = vmatprep.mubr.f32.mxu0 0.0
      %v1204 = vand.u32 %v365, 4294901760
      %v1205 = vsub.f32 %v365, %v1204
      %v1206 = vand.u32 %v1205, 4294901760
      %1207 = vmatmul.mubr.f32.gmra.mrb[0].mxu0 %v1206
      %v1208 = vpop.f32.mrb[0].mxu0
      %v1209 = vadd.f32 %v1011, %v1208
      %v1210 = vpop.f32.mrb[0].mxu0
      %1211 = vmatprep.mubr.f32.mxu0 0.0
      %v1212 = vand.u32 %v366, 4294901760
      %v1213 = vsub.f32 %v366, %v1212
      %v1214 = vand.u32 %v1213, 4294901760
      %1215 = vmatmul.mubr.f32.gmra.mrb[0].mxu0 %v1214
      %v1216 = vpop.f32.mrb[0].mxu0
      %v1217 = vadd.f32 %v1018, %v1216
      %v1218 = vpop.f32.mrb[0].mxu0
      %1219 = vmatprep.mubr.f32.mxu0 0.0
      %v1220 = vand.u32 %v367, 4294901760
      %v1221 = vsub.f32 %v367, %v1220
      %v1222 = vand.u32 %v1221, 4294901760
      %1223 = vmatmul.mubr.f32.gmra.mrb[0].mxu0 %v1222
      %v1224 = vpop.f32.mrb[0].mxu0
      %v1225 = vadd.f32 %v1025, %v1224
      %v1226 = vpop.f32.mrb[0].mxu0
      %1227 = vmatprep.mubr.f32.mxu0 0.0
      %v1228 = vand.u32 %v368, 4294901760
      %v1229 = vsub.f32 %v368, %v1228
      %v1230 = vand.u32 %v1229, 4294901760
      %1231 = vmatmul.mubr.f32.gmra.mrb[0].mxu0 %v1230
      %v1232 = vpop.f32.mrb[0].mxu0
      %v1233 = vadd.f32 %v1032, %v1232
      %v1234 = vpop.f32.mrb[0].mxu0
      %1235 = vmatprep.mubr.f32.mxu0 0.0
      %v1236 = vand.u32 %v369, 4294901760
      %v1237 = vsub.f32 %v369, %v1236
      %v1238 = vand.u32 %v1237, 4294901760
      %1239 = vmatmul.mubr.f32.gmra.mrb[0].mxu0 %v1238
      %v1240 = vpop.f32.mrb[0].mxu0
      %v1241 = vadd.f32 %v1039, %v1240
      %v1242 = vpop.f32.mrb[0].mxu0
      %1243 = vmatprep.mubr.f32.mxu0 0.0
      %v1244 = vand.u32 %v370, 4294901760
      %v1245 = vsub.f32 %v370, %v1244
      %v1246 = vand.u32 %v1245, 4294901760
      %1247 = vmatmul.mubr.f32.gmra.mrb[0].mxu0 %v1246
      %v1248 = vpop.f32.mrb[0].mxu0
      %v1249 = vadd.f32 %v1046, %v1248
      %v1250 = vpop.f32.mrb[0].mxu0
      %1251 = vmatprep.mubr.f32.mxu0 0.0
      %v1252 = vand.u32 %v371, 4294901760
      %v1253 = vsub.f32 %v371, %v1252
      %v1254 = vand.u32 %v1253, 4294901760
      %1255 = vmatmul.mubr.f32.gmra.mrb[0].mxu0 %v1254
      %v1256 = vpop.f32.mrb[0].mxu0
      %v1257 = vadd.f32 %v1053, %v1256
      %v1258 = vpop.f32.mrb[0].mxu0
      %1259 = vmatprep.mubr.f32.mxu0 0.0
      %v1260 = vand.u32 %v372, 4294901760
      %v1261 = vsub.f32 %v372, %v1260
      %v1262 = vand.u32 %v1261, 4294901760
      %1263 = vmatmul.mubr.f32.gmra.mrb[0].mxu0 %v1262
      %v1264 = vpop.f32.mrb[0].mxu0
      %v1265 = vadd.f32 %v1060, %v1264
      %v1266 = vpop.f32.mrb[0].mxu0
      %1267 = vmatprep.mubr.f32.mxu0 0.0
      %v1268 = vand.u32 %v373, 4294901760
      %v1269 = vsub.f32 %v373, %v1268
      %v1270 = vand.u32 %v1269, 4294901760
      %1271 = vmatmul.mubr.f32.gmra.mrb[0].mxu0 %v1270
      %v1272 = vpop.f32.mrb[0].mxu0
      %v1273 = vadd.f32 %v1067, %v1272
      %v1274 = vpop.f32.mrb[0].mxu0
      %1275 = vmatprep.mubr.f32.mxu0 0.0
      %v1276 = vand.u32 %v374, 4294901760
      %v1277 = vsub.f32 %v374, %v1276
      %v1278 = vand.u32 %v1277, 4294901760
      %1279 = vmatmul.mubr.f32.gmra.mrb[0].mxu0 %v1278
      %v1280 = vpop.f32.mrb[0].mxu0
      %v1281 = vadd.f32 %v1074, %v1280
      %v1282 = vpop.f32.mrb[0].mxu0
      %1283 = vmatprep.mubr.f32.mxu0 0.0
      %v1284 = vand.u32 %v375, 4294901760
      %v1285 = vsub.f32 %v375, %v1284
      %v1286 = vand.u32 %v1285, 4294901760
      %1287 = vmatmul.mubr.f32.gmra.mrb[0].mxu0 %v1286
      %v1288 = vpop.f32.mrb[0].mxu0
      %v1289 = vadd.f32 %v1081, %v1288
      %v1290 = vpop.f32.mrb[0].mxu0
      %1291 = vmatprep.mubr.f32.mxu0 0.0
      %v1292 = vand.u32 %v376, 4294901760
      %v1293 = vsub.f32 %v376, %v1292
      %v1294 = vand.u32 %v1293, 4294901760
      %1295 = vmatmul.mubr.f32.gmra.mrb[0].mxu0 %v1294
      %v1296 = vpop.f32.mrb[0].mxu0
      %v1297 = vadd.f32 %v1088, %v1296
      %v1298 = vpop.f32.mrb[0].mxu0
      %1299 = vdwg.mxu0
      %1300 = vmatprep.subr.mxu0 0.0
      %v1301 = vand.u32 %v377, 4294901760
      %v1302 = vsub.f32 %v377, %v1301
      %v1303 = vand.u32 %v1302, 4294901760
      %1304 = vmatpush1.msra.mxu0 %v1303
      %1305 = vmatprep.subr.mxu0 0.0
      %v1306 = vand.u32 %v378, 4294901760
      %v1307 = vsub.f32 %v378, %v1306
      %v1308 = vand.u32 %v1307, 4294901760
      %1309 = vmatpush1.msra.mxu0 %v1308
      %1310 = vmatprep.subr.mxu0 0.0
      %v1311 = vand.u32 %v379, 4294901760
      %v1312 = vsub.f32 %v379, %v1311
      %v1313 = vand.u32 %v1312, 4294901760
      %1314 = vmatpush1.msra.mxu0 %v1313
      %1315 = vmatprep.subr.mxu0 0.0
      %v1316 = vand.u32 %v380, 4294901760
      %v1317 = vsub.f32 %v380, %v1316
      %v1318 = vand.u32 %v1317, 4294901760
      %1319 = vmatpush1.msra.mxu0 %v1318
      %1320 = vmatprep.subr.mxu0 0.0
      %v1321 = vand.u32 %v381, 4294901760
      %v1322 = vsub.f32 %v381, %v1321
      %v1323 = vand.u32 %v1322, 4294901760
      %1324 = vmatpush1.msra.mxu0 %v1323
      %1325 = vmatprep.subr.mxu0 0.0
      %v1326 = vand.u32 %v382, 4294901760
      %v1327 = vsub.f32 %v382, %v1326
      %v1328 = vand.u32 %v1327, 4294901760
      %1329 = vmatpush1.msra.mxu0 %v1328
      %1330 = vmatprep.subr.mxu0 0.0
      %v1331 = vand.u32 %v383, 4294901760
      %v1332 = vsub.f32 %v383, %v1331
      %v1333 = vand.u32 %v1332, 4294901760
      %1334 = vmatpush1.msra.mxu0 %v1333
      %1335 = vmatprep.subr.mxu0 0.0
      %v1336 = vand.u32 %v384, 4294901760
      %v1337 = vsub.f32 %v384, %v1336
      %v1338 = vand.u32 %v1337, 4294901760
      %1339 = vmatpush1.msra.mxu0 %v1338
      %1340 = vmatprep.subr.mxu0 0.0
      %v1341 = vand.u32 %v385, 4294901760
      %v1342 = vsub.f32 %v385, %v1341
      %v1343 = vand.u32 %v1342, 4294901760
      %1344 = vmatpush1.msra.mxu0 %v1343
      %1345 = vmatprep.subr.mxu0 0.0
      %v1346 = vand.u32 %v386, 4294901760
      %v1347 = vsub.f32 %v386, %v1346
      %v1348 = vand.u32 %v1347, 4294901760
      %1349 = vmatpush1.msra.mxu0 %v1348
      %1350 = vmatprep.subr.mxu0 0.0
      %v1351 = vand.u32 %v387, 4294901760
      %v1352 = vsub.f32 %v387, %v1351
      %v1353 = vand.u32 %v1352, 4294901760
      %1354 = vmatpush1.msra.mxu0 %v1353
      %1355 = vmatprep.subr.mxu0 0.0
      %v1356 = vand.u32 %v388, 4294901760
      %v1357 = vsub.f32 %v388, %v1356
      %v1358 = vand.u32 %v1357, 4294901760
      %1359 = vmatpush1.msra.mxu0 %v1358
      %1360 = vmatprep.subr.mxu0 0.0
      %v1361 = vand.u32 %v389, 4294901760
      %v1362 = vsub.f32 %v389, %v1361
      %v1363 = vand.u32 %v1362, 4294901760
      %1364 = vmatpush1.msra.mxu0 %v1363
      %1365 = vmatprep.subr.mxu0 0.0
      %v1366 = vand.u32 %v390, 4294901760
      %v1367 = vsub.f32 %v390, %v1366
      %v1368 = vand.u32 %v1367, 4294901760
      %1369 = vmatpush1.msra.mxu0 %v1368
      %1370 = vmatprep.subr.mxu0 0.0
      %v1371 = vand.u32 %v391, 4294901760
      %v1372 = vsub.f32 %v391, %v1371
      %v1373 = vand.u32 %v1372, 4294901760
      %1374 = vmatpush1.msra.mxu0 %v1373
      %1375 = vmatprep.subr.mxu0 0.0
      %v1376 = vand.u32 %v392, 4294901760
      %v1377 = vsub.f32 %v392, %v1376
      %v1378 = vand.u32 %v1377, 4294901760
      %1379 = vmatpush1.msra.mxu0 %v1378
      %1380 = vmatprep.subr.mxu0 0.0
      %1381 = vmatpush1.msra.mxu0 0.0
      %1382 = vmatprep.subr.mxu0 0.0
      %1383 = vmatpush1.msra.mxu0 0.0
      %1384 = vmatprep.subr.mxu0 0.0
      %1385 = vmatpush1.msra.mxu0 0.0
      %1386 = vmatprep.subr.mxu0 0.0
      %1387 = vmatpush1.msra.mxu0 0.0
      %1388 = vmatprep.subr.mxu0 0.0
      %1389 = vmatpush1.msra.mxu0 0.0
      %1390 = vmatprep.subr.mxu0 0.0
      %1391 = vmatpush1.msra.mxu0 0.0
      %1392 = vmatprep.subr.mxu0 0.0
      %1393 = vmatpush1.msra.mxu0 0.0
      %1394 = vmatprep.subr.mxu0 0.0
      %1395 = vmatpush1.msra.mxu0 0.0
      %1396 = vmatprep.subr.mxu0 0.0
      %1397 = vmatpush1.msra.mxu0 0.0
      %1398 = vmatprep.subr.mxu0 0.0
      %1399 = vmatpush1.msra.mxu0 0.0
      %1400 = vmatprep.subr.mxu0 0.0
      %1401 = vmatpush1.msra.mxu0 0.0
      %1402 = vmatprep.subr.mxu0 0.0
      %1403 = vmatpush1.msra.mxu0 0.0
      %1404 = vmatprep.subr.mxu0 0.0
      %1405 = vmatpush1.msra.mxu0 0.0
      %1406 = vmatprep.subr.mxu0 0.0
      %1407 = vmatpush1.msra.mxu0 0.0
      %1408 = vmatprep.subr.mxu0 0.0
      %1409 = vmatpush1.msra.mxu0 0.0
      %1410 = vmatprep.subr.mxu0 0.0
      %1411 = vmatpush1.msra.mxu0 0.0
      %1412 = vmatprep.mubr.f32.mxu0 0.0
      %v1413 = vand.u32 %v361, 4294901760
      %1414 = vmatmul.mubr.f32.gmra.mrb[0].mxu0 %v1413
      %v1415 = vpop.f32.mrb[0].mxu0
      %v1416 = vadd.f32 %v1177, %v1415
      %v1417 = vpop.f32.mrb[0].mxu0
      %1418 = vmatprep.mubr.f32.mxu0 0.0
      %v1419 = vand.u32 %v362, 4294901760
      %1420 = vmatmul.mubr.f32.gmra.mrb[0].mxu0 %v1419
      %v1421 = vpop.f32.mrb[0].mxu0
      %v1422 = vadd.f32 %v1185, %v1421
      %v1423 = vpop.f32.mrb[0].mxu0
      %1424 = vmatprep.mubr.f32.mxu0 0.0
      %v1425 = vand.u32 %v363, 4294901760
      %1426 = vmatmul.mubr.f32.gmra.mrb[0].mxu0 %v1425
      %v1427 = vpop.f32.mrb[0].mxu0
      %v1428 = vadd.f32 %v1193, %v1427
      %v1429 = vpop.f32.mrb[0].mxu0
      %1430 = vmatprep.mubr.f32.mxu0 0.0
      %v1431 = vand.u32 %v364, 4294901760
      %1432 = vmatmul.mubr.f32.gmra.mrb[0].mxu0 %v1431
      %v1433 = vpop.f32.mrb[0].mxu0
      %v1434 = vadd.f32 %v1201, %v1433
      %v1435 = vpop.f32.mrb[0].mxu0
      %1436 = vmatprep.mubr.f32.mxu0 0.0
      %v1437 = vand.u32 %v365, 4294901760
      %1438 = vmatmul.mubr.f32.gmra.mrb[0].mxu0 %v1437
      %v1439 = vpop.f32.mrb[0].mxu0
      %v1440 = vadd.f32 %v1209, %v1439
      %v1441 = vpop.f32.mrb[0].mxu0
      %1442 = vmatprep.mubr.f32.mxu0 0.0
      %v1443 = vand.u32 %v366, 4294901760
      %1444 = vmatmul.mubr.f32.gmra.mrb[0].mxu0 %v1443
      %v1445 = vpop.f32.mrb[0].mxu0
      %v1446 = vadd.f32 %v1217, %v1445
      %v1447 = vpop.f32.mrb[0].mxu0
      %1448 = vmatprep.mubr.f32.mxu0 0.0
      %v1449 = vand.u32 %v367, 4294901760
      %1450 = vmatmul.mubr.f32.gmra.mrb[0].mxu0 %v1449
      %v1451 = vpop.f32.mrb[0].mxu0
      %v1452 = vadd.f32 %v1225, %v1451
      %v1453 = vpop.f32.mrb[0].mxu0
      %1454 = vmatprep.mubr.f32.mxu0 0.0
      %v1455 = vand.u32 %v368, 4294901760
      %1456 = vmatmul.mubr.f32.gmra.mrb[0].mxu0 %v1455
      %v1457 = vpop.f32.mrb[0].mxu0
      %v1458 = vadd.f32 %v1233, %v1457
      %v1459 = vpop.f32.mrb[0].mxu0
      %1460 = vmatprep.mubr.f32.mxu0 0.0
      %v1461 = vand.u32 %v369, 4294901760
      %1462 = vmatmul.mubr.f32.gmra.mrb[0].mxu0 %v1461
      %v1463 = vpop.f32.mrb[0].mxu0
      %v1464 = vadd.f32 %v1241, %v1463
      %v1465 = vpop.f32.mrb[0].mxu0
      %1466 = vmatprep.mubr.f32.mxu0 0.0
      %v1467 = vand.u32 %v370, 4294901760
      %1468 = vmatmul.mubr.f32.gmra.mrb[0].mxu0 %v1467
      %v1469 = vpop.f32.mrb[0].mxu0
      %v1470 = vadd.f32 %v1249, %v1469
      %v1471 = vpop.f32.mrb[0].mxu0
      %1472 = vmatprep.mubr.f32.mxu0 0.0
      %v1473 = vand.u32 %v371, 4294901760
      %1474 = vmatmul.mubr.f32.gmra.mrb[0].mxu0 %v1473
      %v1475 = vpop.f32.mrb[0].mxu0
      %v1476 = vadd.f32 %v1257, %v1475
      %v1477 = vpop.f32.mrb[0].mxu0
      %1478 = vmatprep.mubr.f32.mxu0 0.0
      %v1479 = vand.u32 %v372, 4294901760
      %1480 = vmatmul.mubr.f32.gmra.mrb[0].mxu0 %v1479
      %v1481 = vpop.f32.mrb[0].mxu0
      %v1482 = vadd.f32 %v1265, %v1481
      %v1483 = vpop.f32.mrb[0].mxu0
      %1484 = vmatprep.mubr.f32.mxu0 0.0
      %v1485 = vand.u32 %v373, 4294901760
      %1486 = vmatmul.mubr.f32.gmra.mrb[0].mxu0 %v1485
      %v1487 = vpop.f32.mrb[0].mxu0
      %v1488 = vadd.f32 %v1273, %v1487
      %v1489 = vpop.f32.mrb[0].mxu0
      %1490 = vmatprep.mubr.f32.mxu0 0.0
      %v1491 = vand.u32 %v374, 4294901760
      %1492 = vmatmul.mubr.f32.gmra.mrb[0].mxu0 %v1491
      %v1493 = vpop.f32.mrb[0].mxu0
      %v1494 = vadd.f32 %v1281, %v1493
      %v1495 = vpop.f32.mrb[0].mxu0
      %1496 = vmatprep.mubr.f32.mxu0 0.0
      %v1497 = vand.u32 %v375, 4294901760
      %1498 = vmatmul.mubr.f32.gmra.mrb[0].mxu0 %v1497
      %v1499 = vpop.f32.mrb[0].mxu0
      %v1500 = vadd.f32 %v1289, %v1499
      %v1501 = vpop.f32.mrb[0].mxu0
      %1502 = vmatprep.mubr.f32.mxu0 0.0
      %v1503 = vand.u32 %v376, 4294901760
      %1504 = vmatmul.mubr.f32.gmra.mrb[0].mxu0 %v1503
      %v1505 = vpop.f32.mrb[0].mxu0
      %v1506 = vadd.f32 %v1297, %v1505
      %v1507 = vpop.f32.mrb[0].mxu0
      %1508 = vdwg.mxu0
      %1509 = vmatprep.subr.mxu0 0.0
      %v1510 = vand.u32 %v377, 4294901760
      %1511 = vmatpush1.msra.mxu0 %v1510
      %1512 = vmatprep.subr.mxu0 0.0
      %v1513 = vand.u32 %v378, 4294901760
      %1514 = vmatpush1.msra.mxu0 %v1513
      %1515 = vmatprep.subr.mxu0 0.0
      %v1516 = vand.u32 %v379, 4294901760
      %1517 = vmatpush1.msra.mxu0 %v1516
      %1518 = vmatprep.subr.mxu0 0.0
      %v1519 = vand.u32 %v380, 4294901760
      %1520 = vmatpush1.msra.mxu0 %v1519
      %1521 = vmatprep.subr.mxu0 0.0
      %v1522 = vand.u32 %v381, 4294901760
      %1523 = vmatpush1.msra.mxu0 %v1522
      %1524 = vmatprep.subr.mxu0 0.0
      %v1525 = vand.u32 %v382, 4294901760
      %1526 = vmatpush1.msra.mxu0 %v1525
      %1527 = vmatprep.subr.mxu0 0.0
      %v1528 = vand.u32 %v383, 4294901760
      %1529 = vmatpush1.msra.mxu0 %v1528
      %1530 = vmatprep.subr.mxu0 0.0
      %v1531 = vand.u32 %v384, 4294901760
      %1532 = vmatpush1.msra.mxu0 %v1531
      %1533 = vmatprep.subr.mxu0 0.0
      %v1534 = vand.u32 %v385, 4294901760
      %1535 = vmatpush1.msra.mxu0 %v1534
      %1536 = vmatprep.subr.mxu0 0.0
      %v1537 = vand.u32 %v386, 4294901760
      %1538 = vmatpush1.msra.mxu0 %v1537
      %1539 = vmatprep.subr.mxu0 0.0
      %v1540 = vand.u32 %v387, 4294901760
      %1541 = vmatpush1.msra.mxu0 %v1540
      %1542 = vmatprep.subr.mxu0 0.0
      %v1543 = vand.u32 %v388, 4294901760
      %1544 = vmatpush1.msra.mxu0 %v1543
      %1545 = vmatprep.subr.mxu0 0.0
      %v1546 = vand.u32 %v389, 4294901760
      %1547 = vmatpush1.msra.mxu0 %v1546
      %1548 = vmatprep.subr.mxu0 0.0
      %v1549 = vand.u32 %v390, 4294901760
      %1550 = vmatpush1.msra.mxu0 %v1549
      %1551 = vmatprep.subr.mxu0 0.0
      %v1552 = vand.u32 %v391, 4294901760
      %1553 = vmatpush1.msra.mxu0 %v1552
      %1554 = vmatprep.subr.mxu0 0.0
      %v1555 = vand.u32 %v392, 4294901760
      %1556 = vmatpush1.msra.mxu0 %v1555
      %1557 = vmatprep.subr.mxu0 0.0
      %1558 = vmatpush1.msra.mxu0 0.0
      %1559 = vmatprep.subr.mxu0 0.0
      %1560 = vmatpush1.msra.mxu0 0.0
      %1561 = vmatprep.subr.mxu0 0.0
      %1562 = vmatpush1.msra.mxu0 0.0
      %1563 = vmatprep.subr.mxu0 0.0
      %1564 = vmatpush1.msra.mxu0 0.0
      %1565 = vmatprep.subr.mxu0 0.0
      %1566 = vmatpush1.msra.mxu0 0.0
      %1567 = vmatprep.subr.mxu0 0.0
      %1568 = vmatpush1.msra.mxu0 0.0
      %1569 = vmatprep.subr.mxu0 0.0
      %1570 = vmatpush1.msra.mxu0 0.0
      %1571 = vmatprep.subr.mxu0 0.0
      %1572 = vmatpush1.msra.mxu0 0.0
      %1573 = vmatprep.subr.mxu0 0.0
      %1574 = vmatpush1.msra.mxu0 0.0
      %1575 = vmatprep.subr.mxu0 0.0
      %1576 = vmatpush1.msra.mxu0 0.0
      %1577 = vmatprep.subr.mxu0 0.0
      %1578 = vmatpush1.msra.mxu0 0.0
      %1579 = vmatprep.subr.mxu0 0.0
      %1580 = vmatpush1.msra.mxu0 0.0
      %1581 = vmatprep.subr.mxu0 0.0
      %1582 = vmatpush1.msra.mxu0 0.0
      %1583 = vmatprep.subr.mxu0 0.0
      %1584 = vmatpush1.msra.mxu0 0.0
      %1585 = vmatprep.subr.mxu0 0.0
      %1586 = vmatpush1.msra.mxu0 0.0
      %1587 = vmatprep.subr.mxu0 0.0
      %1588 = vmatpush1.msra.mxu0 0.0
      %1589 = vmatprep.mubr.f32.mxu0 0.0
      %v1590 = vand.u32 %v361, 4294901760
      %1591 = vmatmul.mubr.f32.gmra.mrb[0].mxu0 %v1590
      %v1592 = vpop.f32.mrb[0].mxu0
      %v1593 = vadd.f32 %v1416, %v1592
      %v1594 = vpop.f32.mrb[0].mxu0
      %1595 = vmatprep.mubr.f32.mxu0 0.0
      %v1596 = vand.u32 %v362, 4294901760
      %1597 = vmatmul.mubr.f32.gmra.mrb[0].mxu0 %v1596
      %v1598 = vpop.f32.mrb[0].mxu0
      %v1599 = vadd.f32 %v1422, %v1598
      %v1600 = vpop.f32.mrb[0].mxu0
      %1601 = vmatprep.mubr.f32.mxu0 0.0
      %v1602 = vand.u32 %v363, 4294901760
      %1603 = vmatmul.mubr.f32.gmra.mrb[0].mxu0 %v1602
      %v1604 = vpop.f32.mrb[0].mxu0
      %v1605 = vadd.f32 %v1428, %v1604
      %v1606 = vpop.f32.mrb[0].mxu0
      %1607 = vmatprep.mubr.f32.mxu0 0.0
      %v1608 = vand.u32 %v364, 4294901760
      %1609 = vmatmul.mubr.f32.gmra.mrb[0].mxu0 %v1608
      %v1610 = vpop.f32.mrb[0].mxu0
      %v1611 = vadd.f32 %v1434, %v1610
      %v1612 = vpop.f32.mrb[0].mxu0
      %1613 = vmatprep.mubr.f32.mxu0 0.0
      %v1614 = vand.u32 %v365, 4294901760
      %1615 = vmatmul.mubr.f32.gmra.mrb[0].mxu0 %v1614
      %v1616 = vpop.f32.mrb[0].mxu0
      %v1617 = vadd.f32 %v1440, %v1616
      %v1618 = vpop.f32.mrb[0].mxu0
      %1619 = vmatprep.mubr.f32.mxu0 0.0
      %v1620 = vand.u32 %v366, 4294901760
      %1621 = vmatmul.mubr.f32.gmra.mrb[0].mxu0 %v1620
      %v1622 = vpop.f32.mrb[0].mxu0
      %v1623 = vadd.f32 %v1446, %v1622
      %v1624 = vpop.f32.mrb[0].mxu0
      %1625 = vmatprep.mubr.f32.mxu0 0.0
      %v1626 = vand.u32 %v367, 4294901760
      %1627 = vmatmul.mubr.f32.gmra.mrb[0].mxu0 %v1626
      %v1628 = vpop.f32.mrb[0].mxu0
      %v1629 = vadd.f32 %v1452, %v1628
      %v1630 = vpop.f32.mrb[0].mxu0
      %1631 = vmatprep.mubr.f32.mxu0 0.0
      %v1632 = vand.u32 %v368, 4294901760
      %1633 = vmatmul.mubr.f32.gmra.mrb[0].mxu0 %v1632
      %v1634 = vpop.f32.mrb[0].mxu0
      %v1635 = vadd.f32 %v1458, %v1634
      %v1636 = vpop.f32.mrb[0].mxu0
      %1637 = vmatprep.mubr.f32.mxu0 0.0
      %v1638 = vand.u32 %v369, 4294901760
      %1639 = vmatmul.mubr.f32.gmra.mrb[0].mxu0 %v1638
      %v1640 = vpop.f32.mrb[0].mxu0
      %v1641 = vadd.f32 %v1464, %v1640
      %v1642 = vpop.f32.mrb[0].mxu0
      %1643 = vmatprep.mubr.f32.mxu0 0.0
      %v1644 = vand.u32 %v370, 4294901760
      %1645 = vmatmul.mubr.f32.gmra.mrb[0].mxu0 %v1644
      %v1646 = vpop.f32.mrb[0].mxu0
      %v1647 = vadd.f32 %v1470, %v1646
      %v1648 = vpop.f32.mrb[0].mxu0
      %1649 = vmatprep.mubr.f32.mxu0 0.0
      %v1650 = vand.u32 %v371, 4294901760
      %1651 = vmatmul.mubr.f32.gmra.mrb[0].mxu0 %v1650
      %v1652 = vpop.f32.mrb[0].mxu0
      %v1653 = vadd.f32 %v1476, %v1652
      %v1654 = vpop.f32.mrb[0].mxu0
      %1655 = vmatprep.mubr.f32.mxu0 0.0
      %v1656 = vand.u32 %v372, 4294901760
      %1657 = vmatmul.mubr.f32.gmra.mrb[0].mxu0 %v1656
      %v1658 = vpop.f32.mrb[0].mxu0
      %v1659 = vadd.f32 %v1482, %v1658
      %v1660 = vpop.f32.mrb[0].mxu0
      %1661 = vmatprep.mubr.f32.mxu0 0.0
      %v1662 = vand.u32 %v373, 4294901760
      %1663 = vmatmul.mubr.f32.gmra.mrb[0].mxu0 %v1662
      %v1664 = vpop.f32.mrb[0].mxu0
      %v1665 = vadd.f32 %v1488, %v1664
      %v1666 = vpop.f32.mrb[0].mxu0
      %1667 = vmatprep.mubr.f32.mxu0 0.0
      %v1668 = vand.u32 %v374, 4294901760
      %1669 = vmatmul.mubr.f32.gmra.mrb[0].mxu0 %v1668
      %v1670 = vpop.f32.mrb[0].mxu0
      %v1671 = vadd.f32 %v1494, %v1670
      %v1672 = vpop.f32.mrb[0].mxu0
      %1673 = vmatprep.mubr.f32.mxu0 0.0
      %v1674 = vand.u32 %v375, 4294901760
      %1675 = vmatmul.mubr.f32.gmra.mrb[0].mxu0 %v1674
      %v1676 = vpop.f32.mrb[0].mxu0
      %v1677 = vadd.f32 %v1500, %v1676
      %v1678 = vpop.f32.mrb[0].mxu0
      %1679 = vmatprep.mubr.f32.mxu0 0.0
      %v1680 = vand.u32 %v376, 4294901760
      %1681 = vmatmul.mubr.f32.gmra.mrb[0].mxu0 %v1680
      %v1682 = vpop.f32.mrb[0].mxu0
      %v1683 = vadd.f32 %v1506, %v1682
      %v1684 = vpop.f32.mrb[0].mxu0
      %1685 = vdwg.mxu0
      %v1686 = vmax.f32 %v1593, 0.0
      %v1687 = vmax.f32 %v1599, 0.0
      %v1688 = vmax.f32 %v1605, 0.0
      %v1689 = vmax.f32 %v1611, 0.0
      %v1690 = vmax.f32 %v1617, 0.0
      %v1691 = vmax.f32 %v1623, 0.0
      %v1692 = vmax.f32 %v1629, 0.0
      %v1693 = vmax.f32 %v1635, 0.0
      %v1694 = vmax.f32 %v1641, 0.0
      %v1695 = vmax.f32 %v1647, 0.0
      %v1696 = vmax.f32 %v1653, 0.0
      %v1697 = vmax.f32 %v1659, 0.0
      %v1698 = vmax.f32 %v1665, 0.0
      %v1699 = vmax.f32 %v1671, 0.0
      %v1700 = vmax.f32 %v1677, 0.0
      %v1701 = vmax.f32 %v1683, 0.0
      %1702 = vst [vmem:[%s309] sm:$0xff] %v1686
      %1703 = vst [vmem:[%s309 + $0x8] sm:$0xff] %v1687
      %1704 = vst [vmem:[%s309 + $0x10] sm:$0xff] %v1688
      %1705 = vst [vmem:[%s309 + $0x18] sm:$0xff] %v1689
      %1706 = vst [vmem:[%s309 + $0x20] sm:$0xff] %v1690
      %1707 = vst [vmem:[%s309 + $0x28] sm:$0xff] %v1691
      %1708 = vst [vmem:[%s309 + $0x30] sm:$0xff] %v1692
      %1709 = vst [vmem:[%s309 + $0x38] sm:$0xff] %v1693
      %1710 = vst [vmem:[%s309 + $0x40] sm:$0xff] %v1694
      %1711 = vst [vmem:[%s309 + $0x48] sm:$0xff] %v1695
      %1712 = vst [vmem:[%s309 + $0x50] sm:$0xff] %v1696
      %1713 = vst [vmem:[%s309 + $0x58] sm:$0xff] %v1697
      %1714 = vst [vmem:[%s309 + $0x60] sm:$0xff] %v1698
      %1715 = vst [vmem:[%s309 + $0x68] sm:$0xff] %v1699
      %1716 = vst [vmem:[%s309 + $0x70] sm:$0xff] %v1700
      %1717 = vst [vmem:[%s309 + $0x78] sm:$0xff] %v1701
      %v1718 = vld [vmem:[%s303] sm:$0xff]
      %v1719 = vld [vmem:[%s303 + $0x8] sm:$0xff]
      %v1720 = vld [vmem:[%s303 + $0x10] sm:$0xff]
      %v1721 = vld [vmem:[%s303 + $0x18] sm:$0xff]
      %v1722 = vld [vmem:[%s303 + $0x20] sm:$0xff]
      %v1723 = vld [vmem:[%s303 + $0x28] sm:$0xff]
      %v1724 = vld [vmem:[%s303 + $0x30] sm:$0xff]
      %v1725 = vld [vmem:[%s303 + $0x38] sm:$0xff]
      %v1726 = vld [vmem:[%s303 + $0x40] sm:$0xff]
      %v1727 = vld [vmem:[%s303 + $0x48] sm:$0xff]
      %v1728 = vld [vmem:[%s303 + $0x50] sm:$0xff]
      %v1729 = vld [vmem:[%s303 + $0x58] sm:$0xff]
      %v1730 = vld [vmem:[%s303 + $0x60] sm:$0xff]
      %v1731 = vld [vmem:[%s303 + $0x68] sm:$0xff]
      %v1732 = vld [vmem:[%s303 + $0x70] sm:$0xff]
      %v1733 = vld [vmem:[%s303 + $0x78] sm:$0xff]
      %1735 = vset.pattern.permute.xlu0 0
      %1736 = vperm.xlu0 %1735, %v1718
      %v1737 = vpop.permute.xlu0 %1736
      %1740 = vset.pattern.permute.xlu0 0
      %1741 = vperm.xlu0 %1740, %v1719
      %v1742 = vpop.permute.xlu0 %1741
      %1745 = vset.pattern.permute.xlu0 0
      %1746 = vperm.xlu0 %1745, %v1720
      %v1747 = vpop.permute.xlu0 %1746
      %1750 = vset.pattern.permute.xlu0 0
      %1751 = vperm.xlu0 %1750, %v1721
      %v1752 = vpop.permute.xlu0 %1751
      %1755 = vset.pattern.permute.xlu0 0
      %1756 = vperm.xlu0 %1755, %v1722
      %v1757 = vpop.permute.xlu0 %1756
      %1760 = vset.pattern.permute.xlu0 0
      %1761 = vperm.xlu0 %1760, %v1723
      %v1762 = vpop.permute.xlu0 %1761
      %1765 = vset.pattern.permute.xlu0 0
      %1766 = vperm.xlu0 %1765, %v1724
      %v1767 = vpop.permute.xlu0 %1766
      %1770 = vset.pattern.permute.xlu0 0
      %1771 = vperm.xlu0 %1770, %v1725
      %v1772 = vpop.permute.xlu0 %1771
      %1775 = vset.pattern.permute.xlu0 0
      %1776 = vperm.xlu0 %1775, %v1726
      %v1777 = vpop.permute.xlu0 %1776
      %1780 = vset.pattern.permute.xlu0 0
      %1781 = vperm.xlu0 %1780, %v1727
      %v1782 = vpop.permute.xlu0 %1781
      %1785 = vset.pattern.permute.xlu0 0
      %1786 = vperm.xlu0 %1785, %v1728
      %v1787 = vpop.permute.xlu0 %1786
      %1790 = vset.pattern.permute.xlu0 0
      %1791 = vperm.xlu0 %1790, %v1729
      %v1792 = vpop.permute.xlu0 %1791
      %1795 = vset.pattern.permute.xlu0 0
      %1796 = vperm.xlu0 %1795, %v1730
      %v1797 = vpop.permute.xlu0 %1796
      %1800 = vset.pattern.permute.xlu0 0
      %1801 = vperm.xlu0 %1800, %v1731
      %v1802 = vpop.permute.xlu0 %1801
      %1805 = vset.pattern.permute.xlu0 0
      %1806 = vperm.xlu0 %1805, %v1732
      %v1807 = vpop.permute.xlu0 %1806
      %1810 = vset.pattern.permute.xlu0 0
      %1811 = vperm.xlu0 %1810, %v1733
      %v1812 = vpop.permute.xlu0 %1811
      %v1814 = vmul.f32 %v1686, %v1737
      %v1815 = vmul.f32 %v1687, %v1742
      %v1816 = vmul.f32 %v1688, %v1747
      %v1817 = vmul.f32 %v1689, %v1752
      %v1818 = vmul.f32 %v1690, %v1757
      %v1819 = vmul.f32 %v1691, %v1762
      %v1820 = vmul.f32 %v1692, %v1767
      %v1821 = vmul.f32 %v1693, %v1772
      %v1822 = vmul.f32 %v1694, %v1777
      %v1823 = vmul.f32 %v1695, %v1782
      %v1824 = vmul.f32 %v1696, %v1787
      %v1825 = vmul.f32 %v1697, %v1792
      %v1826 = vmul.f32 %v1698, %v1797
      %v1827 = vmul.f32 %v1699, %v1802
      %v1828 = vmul.f32 %v1700, %v1807
      %v1829 = vmul.f32 %v1701, %v1812
      %v1830 = vadd.f32 %v1814, %v1815
      %v1831 = vadd.f32 %v1830, %v1816
      %v1832 = vadd.f32 %v1831, %v1817
      %v1833 = vadd.f32 %v1832, %v1818
      %v1834 = vadd.f32 %v1833, %v1819
      %v1835 = vadd.f32 %v1834, %v1820
      %v1836 = vadd.f32 %v1835, %v1821
      %v1837 = vadd.f32 %v1836, %v1822
      %v1838 = vadd.f32 %v1837, %v1823
      %v1839 = vadd.f32 %v1838, %v1824
      %v1840 = vadd.f32 %v1839, %v1825
      %v1841 = vadd.f32 %v1840, %v1826
      %v1842 = vadd.f32 %v1841, %v1827
      %v1843 = vadd.f32 %v1842, %v1828
      %v1844 = vadd.f32 %v1843, %v1829
      %v1845 = vrot.slane %v1844, 4
      %v1846 = vadd.f32 %v1844, %v1845
      %v1847 = vrot.slane %v1846, 2
      %v1848 = vadd.f32 %v1846, %v1847
      %v1849 = vrot.slane %v1848, 1
      %v1850 = vadd.f32 %v1848, %v1849
      %v1851 = vmul.f32 %v1814, %v1814
      %v1852 = vmul.f32 %v1815, %v1815
      %v1853 = vmul.f32 %v1816, %v1816
      %v1854 = vmul.f32 %v1817, %v1817
      %v1855 = vmul.f32 %v1818, %v1818
      %v1856 = vmul.f32 %v1819, %v1819
      %v1857 = vmul.f32 %v1820, %v1820
      %v1858 = vmul.f32 %v1821, %v1821
      %v1859 = vmul.f32 %v1822, %v1822
      %v1860 = vmul.f32 %v1823, %v1823
      %v1861 = vmul.f32 %v1824, %v1824
      %v1862 = vmul.f32 %v1825, %v1825
      %v1863 = vmul.f32 %v1826, %v1826
      %v1864 = vmul.f32 %v1827, %v1827
      %v1865 = vmul.f32 %v1828, %v1828
      %v1866 = vmul.f32 %v1829, %v1829
      %v1867 = vadd.f32 %v1851, %v1852
      %v1868 = vadd.f32 %v1867, %v1853
      %v1869 = vadd.f32 %v1868, %v1854
      %v1870 = vadd.f32 %v1869, %v1855
      %v1871 = vadd.f32 %v1870, %v1856
      %v1872 = vadd.f32 %v1871, %v1857
      %v1873 = vadd.f32 %v1872, %v1858
      %v1874 = vadd.f32 %v1873, %v1859
      %v1875 = vadd.f32 %v1874, %v1860
      %v1876 = vadd.f32 %v1875, %v1861
      %v1877 = vadd.f32 %v1876, %v1862
      %v1878 = vadd.f32 %v1877, %v1863
      %v1879 = vadd.f32 %v1878, %v1864
      %v1880 = vadd.f32 %v1879, %v1865
      %v1881 = vadd.f32 %v1880, %v1866
      %v1882 = vrot.slane %v1881, 4
      %v1883 = vadd.f32 %v1881, %v1882
      %v1884 = vrot.slane %v1883, 2
      %v1885 = vadd.f32 %v1883, %v1884
      %v1886 = vrot.slane %v1885, 1
      %v1887 = vadd.f32 %v1885, %v1886
      %vm1888 = vcmask 1040384
      %v1889 = vsel %vm1888, %v1850, %v1887
      %1890 = vst [vmem:[%s314] sm:$0x3] %v1889
      %s1891 = smul.u32 16, %s19
      %p1892 = scmp.lt.s32.totalorder %s1891, 31
      %s1893 = scalar_select %p1892, %s1891, 31
      %s1894 = smul.addr %s1893, 8
      %s1895 = scalar_lea.vmem %s6, %s1894
      %p1896 = scmp.lt.s32.totalorder %s19, 1
      %s1897 = scalar_select %p1896, %s19, 1
      %s1898 = smul.addr %s1897, 2
      %s1899 = scalar_lea.vmem %s7, %s1898
      // Predicated region
      $region45: #{_lambda_.4} parent=43 // pred_check
        %p1900 = pneg %p173
      $region46: #{_lambda_.4} parent=43 // pred_check_branch
        %1902 = sbr.rel (%p1900) target = $region48
      $region47: #{_lambda_.4} parent=43 // pred_region
        %s1903 = smul.u32 16, %s19
      $region48: #{_lambda_.4} parent=43 // pred_fallthru
        _
      // Predicated region
      $region49: #{_lambda_.4} parent=43 // pred_check
        %p1904 = pneg %p199
      $region50: #{_lambda_.4} parent=43 // pred_check_branch
        %1906 = sbr.rel (%p1904) target = $region52
      $region51: #{_lambda_.4} parent=43 // pred_region
        _
      $region52: #{_lambda_.4} parent=43 // pred_fallthru
        _
    $region44: #{_lambda_.4} parent=5 // pred_fallthru
      _
    %p1907 = scmp.le.s32.totalorder 2, %s14
    // Predicated region
    $region53: #{_lambda_.4} parent=5 // pred_check
      %p1908 = pneg %p1907
    $region54: #{_lambda_.4} parent=5 // pred_check_branch
      %1910 = sbr.rel (%p1908) target = $region56
    $region55: #{_lambda_.4} parent=5 // pred_region
      %s1911 = ssub.s32 %s14, 2
      // Predicated region
      $region57: #{_lambda_.4} parent=55 // pred_check
        %p1912 = pneg %p179
      $region58: #{_lambda_.4} parent=55 // pred_check_branch
        %1914 = sbr.rel (%p1912) target = $region60
      $region59: #{_lambda_.4} parent=55 // pred_region
        %s1915 = smul.u32 16, %s20
        %p1916 = scmp.lt.s32.totalorder %s1915, 31
        %s1917 = scalar_select %p1916, %s1915, 31
        %s1918 = smul.addr %s1917, 8
        %s1919 = scalar_lea.vmem %s6, %s1918
      $region60: #{_lambda_.4} parent=55 // pred_fallthru
        _
      // Predicated region
      $region61: #{_lambda_.4} parent=55 // pred_check
        %p1920 = pneg %p205
      $region62: #{_lambda_.4} parent=55 // pred_check_branch
        %1922 = sbr.rel (%p1920) target = $region64
      $region63: #{_lambda_.4} parent=55 // pred_region
        %p1923 = scmp.lt.s32.totalorder %s20, 1
        %s1924 = scalar_select %p1923, %s20, 1
        %s1925 = smul.addr %s1924, 2
        %s1926 = scalar_lea.vmem %s7, %s1925
      $region64: #{_lambda_.4} parent=55 // pred_fallthru
        _
    $region56: #{_lambda_.4} parent=5 // pred_fallthru
      _
  $region6: #{_lambda_.4} parent=0 // loop_footer
    %s18 = sadd.s32 1, %s14
  $region7: #{_lambda_.4} parent=0 // loop_footer_branch
    %13 = sbr.rel target = $region3
  $region8: #{_lambda_.4} parent=0 // loop_exit
    _

// kernel: _lambda_.5
$region0: #{_lambda_.5}
  #allocation0 [shape = 'u32[]', space=smem, size = 0x4, offset = 0x4, fixed_abs, tag = 'smem constant byte address 0x4 - core index']
  #allocation1 [shape = 'u32[144,128]{1,0:T(1,128)}', space=vmem, size = 0x12000, scoped, tag = 'internal scratch']
  %s0 = inlined_call_operand.vmem [shape: f32[256,128], index: 0, kind: input, shape index: {}, may-alias: {0,3}]
  %s1 = inlined_call_operand.vmem [shape: f32[1,128], index: 1, kind: input, shape index: {}]
  %s2 = inlined_call_operand.vmem [shape: f32[1,128], index: 2, kind: input, shape index: {}]
  %s3 = inlined_call_operand.vmem [shape: f32[256,128], index: 3, kind: output, shape index: {}, may-alias: {0,3}]
  %s4 = sld [smem:[#allocation0]]
  $region45: #{_lambda_.5} parent=0
    _
  %s6 = ssub.s32 1, %s4
  %s7 = scalar_select 0, %s6, %s4
  loop: start=0, step=1, limit=4
  $region2: #{_lambda_.5} parent=0 // loop_pre_header
    _
  $region3: #{_lambda_.5} parent=0 // loop_header
    %s9 = sphi 0, %s13
    %p10 = scmp.ge.s32.totalorder %s9, 4
    %s19 = sphi 0, %s21
    %s22 = sphi 0, %s19
    %s23 = sphi 0, %s22
    %s39 = sphi 0, %s23
    %s43 = sphi 0, %s43
    %s45 = sphi 0, %s43
    %s46 = sphi 0, %s45
    %s60 = sphi 0, %s46
    %s64 = sphi 0, %s64
    %s66 = sphi 0, %s64
    %s67 = sphi 0, %s66
    %s81 = sphi 0, %s67
    %s87 = sphi 0, %s89
    %s90 = sphi 0, %s87
    %s91 = sphi 0, %s90
    %s107 = sphi 0, %s91
  $region4: #{_lambda_.5} parent=0 // loop_header_branch
    %12 = sbr.rel (%p10) target = $region8
  $region5: #{_lambda_.5} parent=0 // loop_body
    %s14 = ssub.s32 %s9, 1
    %s15 = ssub.s32 %s9, 2
    %s16 = sadd.s32 %s9, 1
    %s17 = ssub.s32 %s9, %s16
    %p18 = scmp.eq.s32.totalorder %s17, 0
    %s20 = sadd.s32 %s19, 1
    %s21 = scalar_select %p18, %s19, %s20
    %p24 = pneg %p18
    %p25 = scmp.eq.s32.totalorder %s9, 1
    %p26 = por %p24, %p25
    %p27 = scmp.ne.s32.totalorder %s19, %s22
    %p28 = scmp.eq.s32.totalorder %s9, 0
    %p29 = por %p27, %p28
    %p30 = scmp.ne.s32.totalorder %s19, %s22
    %p31 = scmp.eq.s32.totalorder %s14, 1
    %p32 = por %p30, %p31
    %p33 = scmp.ne.s32.totalorder %s22, %s23
    %p34 = scmp.eq.s32.totalorder %s14, 0
    %p35 = por %p33, %p34
    %p36 = scmp.ne.s32.totalorder %s22, %s23
    %p37 = scmp.eq.s32.totalorder %s15, 1
    %p38 = por %p36, %p37
    %p40 = scmp.ne.s32.totalorder %s23, %s39
    %p41 = scmp.eq.s32.totalorder %s15, 0
    %p42 = por %p40, %p41
    %s44 = sadd.s32 %s43, 1
    %p47 = scmp.eq.s32.totalorder %s9, 1
    %p48 = scmp.ne.s32.totalorder %s43, %s45
    %p49 = scmp.eq.s32.totalorder %s9, 0
    %p50 = por %p48, %p49
    %p51 = scmp.ne.s32.totalorder %s43, %s45
    %p52 = scmp.eq.s32.totalorder %s14, 1
    %p53 = por %p51, %p52
    %p54 = scmp.ne.s32.totalorder %s45, %s46
    %p55 = scmp.eq.s32.totalorder %s14, 0
    %p56 = por %p54, %p55
    %p57 = scmp.ne.s32.totalorder %s45, %s46
    %p58 = scmp.eq.s32.totalorder %s15, 1
    %p59 = por %p57, %p58
    %p61 = scmp.ne.s32.totalorder %s46, %s60
    %p62 = scmp.eq.s32.totalorder %s15, 0
    %p63 = por %p61, %p62
    %s65 = sadd.s32 %s64, 1
    %p68 = scmp.eq.s32.totalorder %s9, 1
    %p69 = scmp.ne.s32.totalorder %s64, %s66
    %p70 = scmp.eq.s32.totalorder %s9, 0
    %p71 = por %p69, %p70
    %p72 = scmp.ne.s32.totalorder %s64, %s66
    %p73 = scmp.eq.s32.totalorder %s14, 1
    %p74 = por %p72, %p73
    %p75 = scmp.ne.s32.totalorder %s66, %s67
    %p76 = scmp.eq.s32.totalorder %s14, 0
    %p77 = por %p75, %p76
    %p78 = scmp.ne.s32.totalorder %s66, %s67
    %p79 = scmp.eq.s32.totalorder %s15, 1
    %p80 = por %p78, %p79
    %p82 = scmp.ne.s32.totalorder %s67, %s81
    %p83 = scmp.eq.s32.totalorder %s15, 0
    %p84 = por %p82, %p83
    %s85 = ssub.s32 %s9, %s16
    %p86 = scmp.eq.s32.totalorder %s85, 0
    %s88 = sadd.s32 %s87, 1
    %s89 = scalar_select %p86, %s87, %s88
    %p92 = pneg %p86
    %p93 = scmp.eq.s32.totalorder %s9, 1
    %p94 = por %p92, %p93
    %p95 = scmp.ne.s32.totalorder %s87, %s90
    %p96 = scmp.eq.s32.totalorder %s9, 0
    %p97 = por %p95, %p96
    %p98 = scmp.ne.s32.totalorder %s87, %s90
    %p99 = scmp.eq.s32.totalorder %s14, 1
    %p100 = por %p98, %p99
    %p101 = scmp.ne.s32.totalorder %s90, %s91
    %p102 = scmp.eq.s32.totalorder %s14, 0
    %p103 = por %p101, %p102
    %p104 = scmp.ne.s32.totalorder %s90, %s91
    %p105 = scmp.eq.s32.totalorder %s15, 1
    %p106 = por %p104, %p105
    %p108 = scmp.ne.s32.totalorder %s91, %s107
    %p109 = scmp.eq.s32.totalorder %s15, 0
    %p110 = por %p108, %p109
    %p111 = scmp.le.s32.totalorder 1, %s9
    %p112 = scmp.lt.s32.totalorder %s9, 3
    %p113 = pnand %p111, %p112
    %p114 = pneg %p113
    // Predicated region
    $region9: #{_lambda_.5} parent=5 // pred_check
      _
    $region10: #{_lambda_.5} parent=5 // pred_check_branch
      %116 = sbr.rel (%p113) target = $region12
    $region11: #{_lambda_.5} parent=5 // pred_region
      %s117 = ssub.s32 %s9, 1
      // Predicated region
      $region13: #{_lambda_.5} parent=11 // pred_check
        %p118 = pneg %p56
      $region14: #{_lambda_.5} parent=11 // pred_check_branch
        %120 = sbr.rel (%p118) target = $region16
      $region15: #{_lambda_.5} parent=11 // pred_region
        _
      $region16: #{_lambda_.5} parent=11 // pred_fallthru
        _
      // Predicated region
      $region17: #{_lambda_.5} parent=11 // pred_check
        %p121 = pneg %p77
      $region18: #{_lambda_.5} parent=11 // pred_check_branch
        %123 = sbr.rel (%p121) target = $region20
      $region19: #{_lambda_.5} parent=11 // pred_region
        _
      $region20: #{_lambda_.5} parent=11 // pred_fallthru
        _
    $region12: #{_lambda_.5} parent=5 // pred_fallthru
      _
    %p124 = scmp.lt.s32.totalorder %s9, 2
    // Predicated region
    $region21: #{_lambda_.5} parent=5 // pred_check
      %p125 = pneg %p124
    $region22: #{_lambda_.5} parent=5 // pred_check_branch
      %127 = sbr.rel (%p125) target = $region24
    $region23: #{_lambda_.5} parent=5 // pred_region
      // Predicated region
      $region25: #{_lambda_.5} parent=23 // pred_check
        %p128 = pneg %p29
      $region26: #{_lambda_.5} parent=23 // pred_check_branch
        %130 = sbr.rel (%p128) target = $region28
      $region27: #{_lambda_.5} parent=23 // pred_region
        %s131 = smul.u32 16, %s9
        %p132 = scmp.lt.s32.totalorder %s131, 31
        %s133 = scalar_select %p132, %s131, 31
        %s134 = smul.addr %s133, 8
        %s135 = scalar_lea.vmem %s0, %s134
        %s136 = smul.u32 16, %s9
      $region28: #{_lambda_.5} parent=23 // pred_fallthru
        _
    $region24: #{_lambda_.5} parent=5 // pred_fallthru
      _
    %p137 = scmp.le.s32.totalorder 1, %s9
    %p138 = scmp.lt.s32.totalorder %s9, 3
    %p139 = pnand %p137, %p138
    %p140 = pneg %p139
    // Predicated region
    $region29: #{_lambda_.5} parent=5 // pred_check
      _
    $region30: #{_lambda_.5} parent=5 // pred_check_branch
      %142 = sbr.rel (%p139) target = $region32
    $region31: #{_lambda_.5} parent=5 // pred_region
      %s143 = ssub.s32 %s9, 1
      %s144 = smul.u32 16, %s14
      %p145 = scmp.lt.s32.totalorder %s144, 31
      %s146 = scalar_select %p145, %s144, 31
      %s147 = smul.addr %s146, 8
      %s148 = scalar_lea.vmem %s0, %s147
      %p149 = pneg %p35
      %p150 = pneg %p32
      %p151 = pneg %p56
      %p152 = pneg %p53
      %p153 = pneg %p77
      %p154 = pneg %p74
      %p155 = pneg %p103
      %p156 = pneg %p100
      %s157 = smul.u32 16, %s14
      %p158 = scmp.lt.s32.totalorder %s157, 31
      %s159 = scalar_select %p158, %s157, 31
      %s160 = smul.addr %s159, 8
      %s161 = scalar_lea.vmem %s3, %s160
      %s162 = smul.u32 16, %s14
      %p163 = scmp.lt.s32.totalorder %s162, 31
      %s164 = scalar_select %p163, %s162, 31
      %s165 = smul.addr %s164, 8
      %s166 = scalar_lea.vmem %s0, %s165
      %s167 = smul.u32 16, %s14
      %s168 = smul.u32 16, %s14
      %p169 = scmp.lt.s32.totalorder %s168, 31
      %s170 = scalar_select %p169, %s168, 31
      %s171 = smul.addr %s170, 8
      %s172 = scalar_lea.vmem %s3, %s171
      %s173 = smul.u32 16, %s14
      %v174 = vld [vmem:[%s166] sm:$0xff]
      %v175 = vld [vmem:[%s166 + $0x8] sm:$0xff]
      %v176 = vld [vmem:[%s166 + $0x10] sm:$0xff]
      %v177 = vld [vmem:[%s166 + $0x18] sm:$0xff]
      %v178 = vld [vmem:[%s166 + $0x20] sm:$0xff]
      %v179 = vld [vmem:[%s166 + $0x28] sm:$0xff]
      %v180 = vld [vmem:[%s166 + $0x30] sm:$0xff]
      %v181 = vld [vmem:[%s166 + $0x38] sm:$0xff]
      %v182 = vld [vmem:[%s166 + $0x40] sm:$0xff]
      %v183 = vld [vmem:[%s166 + $0x48] sm:$0xff]
      %v184 = vld [vmem:[%s166 + $0x50] sm:$0xff]
      %v185 = vld [vmem:[%s166 + $0x58] sm:$0xff]
      %v186 = vld [vmem:[%s166 + $0x60] sm:$0xff]
      %v187 = vld [vmem:[%s166 + $0x68] sm:$0xff]
      %v188 = vld [vmem:[%s166 + $0x70] sm:$0xff]
      %v189 = vld [vmem:[%s166 + $0x78] sm:$0xff]
      %v190 = vld [vmem:[%s1] sm:$0x1]
      %v192 = vlaneseq
      %v193 = vshrl.u32 %v192, 7
      %v194 = vsub.s32 0, %v193
      %v195 = vrot.slane %v190, %v194
      %v197 = vmul.f32 %v174, %v195
      %v198 = vmul.f32 %v175, %v195
      %v199 = vmul.f32 %v176, %v195
      %v200 = vmul.f32 %v177, %v195
      %v201 = vmul.f32 %v178, %v195
      %v202 = vmul.f32 %v179, %v195
      %v203 = vmul.f32 %v180, %v195
      %v204 = vmul.f32 %v181, %v195
      %v205 = vmul.f32 %v182, %v195
      %v206 = vmul.f32 %v183, %v195
      %v207 = vmul.f32 %v184, %v195
      %v208 = vmul.f32 %v185, %v195
      %v209 = vmul.f32 %v186, %v195
      %v210 = vmul.f32 %v187, %v195
      %v211 = vmul.f32 %v188, %v195
      %v212 = vmul.f32 %v189, %v195
      %v213 = vld [vmem:[%s2] sm:$0x1]
      %v215 = vlaneseq
      %v216 = vshrl.u32 %v215, 7
      %v217 = vsub.s32 0, %v216
      %v218 = vrot.slane %v213, %v217
      %v220 = vadd.f32 %v197, %v218
      %v221 = vadd.f32 %v198, %v218
      %v222 = vadd.f32 %v199, %v218
      %v223 = vadd.f32 %v200, %v218
      %v224 = vadd.f32 %v201, %v218
      %v225 = vadd.f32 %v202, %v218
      %v226 = vadd.f32 %v203, %v218
      %v227 = vadd.f32 %v204, %v218
      %v228 = vadd.f32 %v205, %v218
      %v229 = vadd.f32 %v206, %v218
      %v230 = vadd.f32 %v207, %v218
      %v231 = vadd.f32 %v208, %v218
      %v232 = vadd.f32 %v209, %v218
      %v233 = vadd.f32 %v210, %v218
      %v234 = vadd.f32 %v211, %v218
      %v235 = vadd.f32 %v212, %v218
      %236 = vst [vmem:[%s172] sm:$0xff] %v220
      %237 = vst [vmem:[%s172 + $0x8] sm:$0xff] %v221
      %238 = vst [vmem:[%s172 + $0x10] sm:$0xff] %v222
      %239 = vst [vmem:[%s172 + $0x18] sm:$0xff] %v223
      %240 = vst [vmem:[%s172 + $0x20] sm:$0xff] %v224
      %241 = vst [vmem:[%s172 + $0x28] sm:$0xff] %v225
      %242 = vst [vmem:[%s172 + $0x30] sm:$0xff] %v226
      %243 = vst [vmem:[%s172 + $0x38] sm:$0xff] %v227
      %244 = vst [vmem:[%s172 + $0x40] sm:$0xff] %v228
      %245 = vst [vmem:[%s172 + $0x48] sm:$0xff] %v229
      %246 = vst [vmem:[%s172 + $0x50] sm:$0xff] %v230
      %247 = vst [vmem:[%s172 + $0x58] sm:$0xff] %v231
      %248 = vst [vmem:[%s172 + $0x60] sm:$0xff] %v232
      %249 = vst [vmem:[%s172 + $0x68] sm:$0xff] %v233
      %250 = vst [vmem:[%s172 + $0x70] sm:$0xff] %v234
      %251 = vst [vmem:[%s172 + $0x78] sm:$0xff] %v235
      %s252 = smul.u32 16, %s14
      %p253 = scmp.lt.s32.totalorder %s252, 31
      %s254 = scalar_select %p253, %s252, 31
      %s255 = smul.addr %s254, 8
      %s256 = scalar_lea.vmem %s3, %s255
      // Predicated region
      $region33: #{_lambda_.5} parent=31 // pred_check
        %p257 = pneg %p100
      $region34: #{_lambda_.5} parent=31 // pred_check_branch
        %259 = sbr.rel (%p257) target = $region36
      $region35: #{_lambda_.5} parent=31 // pred_region
        %s260 = smul.u32 16, %s14
      $region36: #{_lambda_.5} parent=31 // pred_fallthru
        _
    $region32: #{_lambda_.5} parent=5 // pred_fallthru
      _
    %p261 = scmp.le.s32.totalorder 2, %s9
    // Predicated region
    $region37: #{_lambda_.5} parent=5 // pred_check
      %p262 = pneg %p261
    $region38: #{_lambda_.5} parent=5 // pred_check_branch
      %264 = sbr.rel (%p262) target = $region40
    $region39: #{_lambda_.5} parent=5 // pred_region
      %s265 = ssub.s32 %s9, 2
      // Predicated region
      $region41: #{_lambda_.5} parent=39 // pred_check
        %p266 = pneg %p106
      $region42: #{_lambda_.5} parent=39 // pred_check_branch
        %268 = sbr.rel (%p266) target = $region44
      $region43: #{_lambda_.5} parent=39 // pred_region
        %s269 = smul.u32 16, %s15
        %p270 = scmp.lt.s32.totalorder %s269, 31
        %s271 = scalar_select %p270, %s269, 31
        %s272 = smul.addr %s271, 8
        %s273 = scalar_lea.vmem %s3, %s272
      $region44: #{_lambda_.5} parent=39 // pred_fallthru
        _
    $region40: #{_lambda_.5} parent=5 // pred_fallthru
      _
  $region6: #{_lambda_.5} parent=0 // loop_footer
    %s13 = sadd.s32 1, %s9
  $region7: #{_lambda_.5} parent=0 // loop_footer_branch
    %8 = sbr.rel target = $region3
  $region8: #{_lambda_.5} parent=0 // loop_exit
    _

// kernel: _lambda_.3
$region0: #{_lambda_.3}
  #allocation0 [shape = 'u32[]', space=smem, size = 0x4, offset = 0x4, fixed_abs, tag = 'smem constant byte address 0x4 - core index']
  #allocation1 [shape = 'u32[144,128]{1,0:T(1,128)}', space=vmem, size = 0x12000, scoped, tag = 'internal scratch']
  #allocation2 [shape = 'f32[128,128]{1,0:T(8,128)}', space=vmem, size = 0x10000, scoped, tag = 'scratch operand']
  %s0 = inlined_call_operand.vmem [shape: f32[256,256], index: 0, kind: input, shape index: {}]
  %s1 = inlined_call_operand.vmem [shape: f32[256,128], index: 1, kind: input, shape index: {}]
  %s2 = inlined_call_operand.vmem [shape: f32[256,1], index: 2, kind: input, shape index: {}]
  %s3 = inlined_call_operand.vmem [shape: f32[128,128], index: 3, kind: input, shape index: {}]
  %s4 = inlined_call_operand.vmem [shape: f32[1,128], index: 4, kind: input, shape index: {}]
  %s5 = inlined_call_operand.vmem [shape: f32[256,128], index: 5, kind: output, shape index: {0}]
  %s6 = inlined_call_operand.vmem [shape: f32[2,2,128], index: 6, kind: output, shape index: {1}]
  %7 = xla_tuple %s5, %s6
  %s8 = sld [smem:[#allocation0]]
  $region107: #{_lambda_.3} parent=0
    _
  %s10 = ssub.s32 1, %s8
  %s11 = scalar_select 0, %s10, %s8
  $region1: #{_lambda_.3} parent=0
    #allocation3 [shape = 'u8[131072]{0}', space=vmem, size = 0x20000, scoped, tag = 'input window, operand 0']
    loop: start=0, step=1, limit=6
    $region2: #{_lambda_.3} parent=1 // loop_pre_header
      _
    $region3: #{_lambda_.3} parent=1 // loop_header
      %s13 = sphi 0, %s17
      %p14 = scmp.ge.s32.totalorder %s13, 6
      %s20 = sphi 0, %s32
      %s21 = sphi 0, %s28
      %s22 = sphi 0, %s20
      %s23 = sphi 0, %s21
      %s24 = sphi 0, %s22
      %s25 = sphi 0, %s23
      %s37 = sphi 0, %s39
      %s40 = sphi 0, %s37
      %s41 = sphi 0, %s40
      %s57 = sphi 0, %s41
      %s63 = sphi 0, %s65
      %s66 = sphi 0, %s63
      %s67 = sphi 0, %s66
      %s83 = sphi 0, %s67
      %s89 = sphi 0, %s91
      %s92 = sphi 0, %s89
      %s93 = sphi 0, %s92
      %s109 = sphi 0, %s93
      %s113 = sphi 0, %s113
      %s115 = sphi 0, %s113
      %s116 = sphi 0, %s115
      %s130 = sphi 0, %s116
      %s134 = sphi 0, %s134
      %s136 = sphi 0, %s134
      %s137 = sphi 0, %s136
      %s151 = sphi 0, %s137
      %s157 = sphi 0, %s159
      %s160 = sphi 0, %s157
      %s161 = sphi 0, %s160
      %s177 = sphi 0, %s161
      %s183 = sphi 0, %s185
      %s186 = sphi 0, %s183
      %s187 = sphi 0, %s186
      %s203 = sphi 0, %s187
    $region4: #{_lambda_.3} parent=1 // loop_header_branch
      %16 = sbr.rel (%p14) target = $region8
    $region5: #{_lambda_.3} parent=1 // loop_body
      %s18 = ssub.s32 %s13, 1
      %s19 = ssub.s32 %s13, 2
      %s26 = sadd.s32 1, %s21
      %p27 = scmp.ge.s32.totalorder %s26, 2
      %s28 = scalar_select %p27, 0, %s26
      %s29 = sadd.s32 1, %s20
      %s30 = scalar_select %p27, %s29, %s20
      %p31 = scmp.ge.s32.totalorder %s30, 2
      %s32 = scalar_select %p31, 0, %s30
      %s33 = ssub.s32 %s20, %s32
      %s34 = ssub.s32 %s21, %s28
      %s35 = sor.u32 %s33, %s34
      %p36 = scmp.eq.s32.totalorder %s35, 0
      %s38 = sadd.s32 %s37, 1
      %s39 = scalar_select %p36, %s37, %s38
      %p42 = pneg %p36
      %p43 = scmp.eq.s32.totalorder %s13, 3
      %p44 = por %p42, %p43
      %p45 = scmp.ne.s32.totalorder %s37, %s40
      %p46 = scmp.eq.s32.totalorder %s13, 0
      %p47 = por %p45, %p46
      %p48 = scmp.ne.s32.totalorder %s37, %s40
      %p49 = scmp.eq.s32.totalorder %s18, 3
      %p50 = por %p48, %p49
      %p51 = scmp.ne.s32.totalorder %s40, %s41
      %p52 = scmp.eq.s32.totalorder %s18, 0
      %p53 = por %p51, %p52
      %p54 = scmp.ne.s32.totalorder %s40, %s41
      %p55 = scmp.eq.s32.totalorder %s19, 3
      %p56 = por %p54, %p55
      %p58 = scmp.ne.s32.totalorder %s41, %s57
      %p59 = scmp.eq.s32.totalorder %s19, 0
      %p60 = por %p58, %p59
      %s61 = ssub.s32 %s21, %s28
      %p62 = scmp.eq.s32.totalorder %s61, 0
      %s64 = sadd.s32 %s63, 1
      %s65 = scalar_select %p62, %s63, %s64
      %p68 = pneg %p62
      %p69 = scmp.eq.s32.totalorder %s13, 3
      %p70 = por %p68, %p69
      %p71 = scmp.ne.s32.totalorder %s63, %s66
      %p72 = scmp.eq.s32.totalorder %s13, 0
      %p73 = por %p71, %p72
      %p74 = scmp.ne.s32.totalorder %s63, %s66
      %p75 = scmp.eq.s32.totalorder %s18, 3
      %p76 = por %p74, %p75
      %p77 = scmp.ne.s32.totalorder %s66, %s67
      %p78 = scmp.eq.s32.totalorder %s18, 0
      %p79 = por %p77, %p78
      %p80 = scmp.ne.s32.totalorder %s66, %s67
      %p81 = scmp.eq.s32.totalorder %s19, 3
      %p82 = por %p80, %p81
      %p84 = scmp.ne.s32.totalorder %s67, %s83
      %p85 = scmp.eq.s32.totalorder %s19, 0
      %p86 = por %p84, %p85
      %s87 = ssub.s32 %s20, %s32
      %p88 = scmp.eq.s32.totalorder %s87, 0
      %s90 = sadd.s32 %s89, 1
      %s91 = scalar_select %p88, %s89, %s90
      %p94 = pneg %p88
      %p95 = scmp.eq.s32.totalorder %s13, 3
      %p96 = por %p94, %p95
      %p97 = scmp.ne.s32.totalorder %s89, %s92
      %p98 = scmp.eq.s32.totalorder %s13, 0
      %p99 = por %p97, %p98
      %p100 = scmp.ne.s32.totalorder %s89, %s92
      %p101 = scmp.eq.s32.totalorder %s18, 3
      %p102 = por %p100, %p101
      %p103 = scmp.ne.s32.totalorder %s92, %s93
      %p104 = scmp.eq.s32.totalorder %s18, 0
      %p105 = por %p103, %p104
      %p106 = scmp.ne.s32.totalorder %s92, %s93
      %p107 = scmp.eq.s32.totalorder %s19, 3
      %p108 = por %p106, %p107
      %p110 = scmp.ne.s32.totalorder %s93, %s109
      %p111 = scmp.eq.s32.totalorder %s19, 0
      %p112 = por %p110, %p111
      %s114 = sadd.s32 %s113, 1
      %p117 = scmp.eq.s32.totalorder %s13, 3
      %p118 = scmp.ne.s32.totalorder %s113, %s115
      %p119 = scmp.eq.s32.totalorder %s13, 0
      %p120 = por %p118, %p119
      %p121 = scmp.ne.s32.totalorder %s113, %s115
      %p122 = scmp.eq.s32.totalorder %s18, 3
      %p123 = por %p121, %p122
      %p124 = scmp.ne.s32.totalorder %s115, %s116
      %p125 = scmp.eq.s32.totalorder %s18, 0
      %p126 = por %p124, %p125
      %p127 = scmp.ne.s32.totalorder %s115, %s116
      %p128 = scmp.eq.s32.totalorder %s19, 3
      %p129 = por %p127, %p128
      %p131 = scmp.ne.s32.totalorder %s116, %s130
      %p132 = scmp.eq.s32.totalorder %s19, 0
      %p133 = por %p131, %p132
      %s135 = sadd.s32 %s134, 1
      %p138 = scmp.eq.s32.totalorder %s13, 3
      %p139 = scmp.ne.s32.totalorder %s134, %s136
      %p140 = scmp.eq.s32.totalorder %s13, 0
      %p141 = por %p139, %p140
      %p142 = scmp.ne.s32.totalorder %s134, %s136
      %p143 = scmp.eq.s32.totalorder %s18, 3
      %p144 = por %p142, %p143
      %p145 = scmp.ne.s32.totalorder %s136, %s137
      %p146 = scmp.eq.s32.totalorder %s18, 0
      %p147 = por %p145, %p146
      %p148 = scmp.ne.s32.totalorder %s136, %s137
      %p149 = scmp.eq.s32.totalorder %s19, 3
      %p150 = por %p148, %p149
      %p152 = scmp.ne.s32.totalorder %s137, %s151
      %p153 = scmp.eq.s32.totalorder %s19, 0
      %p154 = por %p152, %p153
      %s155 = ssub.s32 %s20, %s32
      %p156 = scmp.eq.s32.totalorder %s155, 0
      %s158 = sadd.s32 %s157, 1
      %s159 = scalar_select %p156, %s157, %s158
      %p162 = pneg %p156
      %p163 = scmp.eq.s32.totalorder %s13, 3
      %p164 = por %p162, %p163
      %p165 = scmp.ne.s32.totalorder %s157, %s160
      %p166 = scmp.eq.s32.totalorder %s13, 0
      %p167 = por %p165, %p166
      %p168 = scmp.ne.s32.totalorder %s157, %s160
      %p169 = scmp.eq.s32.totalorder %s18, 3
      %p170 = por %p168, %p169
      %p171 = scmp.ne.s32.totalorder %s160, %s161
      %p172 = scmp.eq.s32.totalorder %s18, 0
      %p173 = por %p171, %p172
      %p174 = scmp.ne.s32.totalorder %s160, %s161
      %p175 = scmp.eq.s32.totalorder %s19, 3
      %p176 = por %p174, %p175
      %p178 = scmp.ne.s32.totalorder %s161, %s177
      %p179 = scmp.eq.s32.totalorder %s19, 0
      %p180 = por %p178, %p179
      %s181 = ssub.s32 %s20, %s32
      %p182 = scmp.eq.s32.totalorder %s181, 0
      %s184 = sadd.s32 %s183, 1
      %s185 = scalar_select %p182, %s183, %s184
      %p188 = pneg %p182
      %p189 = scmp.eq.s32.totalorder %s13, 3
      %p190 = por %p188, %p189
      %p191 = scmp.ne.s32.totalorder %s183, %s186
      %p192 = scmp.eq.s32.totalorder %s13, 0
      %p193 = por %p191, %p192
      %p194 = scmp.ne.s32.totalorder %s183, %s186
      %p195 = scmp.eq.s32.totalorder %s18, 3
      %p196 = por %p194, %p195
      %p197 = scmp.ne.s32.totalorder %s186, %s187
      %p198 = scmp.eq.s32.totalorder %s18, 0
      %p199 = por %p197, %p198
      %p200 = scmp.ne.s32.totalorder %s186, %s187
      %p201 = scmp.eq.s32.totalorder %s19, 3
      %p202 = por %p200, %p201
      %p204 = scmp.ne.s32.totalorder %s187, %s203
      %p205 = scmp.eq.s32.totalorder %s19, 0
      %p206 = por %p204, %p205
      %p207 = scmp.le.s32.totalorder 1, %s13
      %p208 = scmp.lt.s32.totalorder %s13, 5
      %p209 = pnand %p207, %p208
      %p210 = pneg %p209
      // Predicated region
      $region9: #{_lambda_.3} parent=5 // pred_check
        _
      $region10: #{_lambda_.3} parent=5 // pred_check_branch
        %212 = sbr.rel (%p209) target = $region12
      $region11: #{_lambda_.3} parent=5 // pred_region
        %s213 = ssub.s32 %s13, 1
        // Predicated region
        $region13: #{_lambda_.3} parent=11 // pred_check
          %p214 = pneg %p126
        $region14: #{_lambda_.3} parent=11 // pred_check_branch
          %216 = sbr.rel (%p214) target = $region16
        $region15: #{_lambda_.3} parent=11 // pred_region
          _
        $region16: #{_lambda_.3} parent=11 // pred_fallthru
          _
        // Predicated region
        $region17: #{_lambda_.3} parent=11 // pred_check
          %p217 = pneg %p147
        $region18: #{_lambda_.3} parent=11 // pred_check_branch
          %219 = sbr.rel (%p217) target = $region20
        $region19: #{_lambda_.3} parent=11 // pred_region
          _
        $region20: #{_lambda_.3} parent=11 // pred_fallthru
          _
      $region12: #{_lambda_.3} parent=5 // pred_fallthru
        _
      %p220 = scmp.lt.s32.totalorder %s13, 4
      // Predicated region
      $region21: #{_lambda_.3} parent=5 // pred_check
        %p221 = pneg %p220
      $region22: #{_lambda_.3} parent=5 // pred_check_branch
        %223 = sbr.rel (%p221) target = $region24
      $region23: #{_lambda_.3} parent=5 // pred_region
        // Predicated region
        $region25: #{_lambda_.3} parent=23 // pred_check
          %p224 = pneg %p47
        $region26: #{_lambda_.3} parent=23 // pred_check_branch
          %226 = sbr.rel (%p224) target = $region28
        $region27: #{_lambda_.3} parent=23 // pred_region
          %s227 = sand.u32 %s37, 1
          %s228 = sand.u32 %s37, 1
          %s229 = smul.addr %s228, 128
          %s230 = scalar_lea.vmem [#allocation3], %s229
          %s231 = smul.u32 16, %s20
          %s232 = smul.addr %s231, 2
          %s233 = sadd.s32 %s21, %s232
          %s234 = smul.addr %s233, 8
          %s235 = scalar_lea.vmem %s0, %s234
          // Predicated region
          $region29: #{_lambda_.3} parent=27 // pred_check
            _
          $region30: #{_lambda_.3} parent=27 // pred_check_branch
            %237 = sbr.rel (0) target = $region32
          $region31: #{_lambda_.3} parent=27 // pred_region
            // Predicated region
            $region33: #{_lambda_.3} parent=31 // pred_check
              _
            $region34: #{_lambda_.3} parent=31 // pred_check_branch
              %239 = sbr.rel (0) target = $region36
            $region35: #{_lambda_.3} parent=31 // pred_region
              // Predicated region
              $region48: #{_lambda_.3} parent=35 // pred_check
                _
              $region49: #{_lambda_.3} parent=35 // pred_check_branch
                %284 = sbr.rel (0) target = $region51
              $region50: #{_lambda_.3} parent=35 // pred_region
                loop: start=0, step=1, limit=1
                $region52: #{_lambda_.3} parent=50 // loop_pre_header
                  _
                $region53: #{_lambda_.3} parent=50 // loop_header
                  %s286 = sphi 0, %s290
                  %p287 = scmp.ge.s32.totalorder %s286, 1
                  %s291 = sphi %s235, %s235
                  %s292 = sphi %s230, %s230
                $region54: #{_lambda_.3} parent=50 // loop_header_branch
                  %289 = sbr.rel (%p287) target = $region58
                $region55: #{_lambda_.3} parent=50 // loop_body
                  %v293 = vld [vmem:[%s291] sm:$0xff]
                  %294 = vst [vmem:[%s292] sm:$0xff] %v293
                  %v295 = vld [vmem:[%s291 + $0x10] sm:$0xff]
                  %296 = vst [vmem:[%s292 + $0x8] sm:$0xff] %v295
                  %v297 = vld [vmem:[%s291 + $0x20] sm:$0xff]
                  %298 = vst [vmem:[%s292 + $0x10] sm:$0xff] %v297
                  %v299 = vld [vmem:[%s291 + $0x30] sm:$0xff]
                  %300 = vst [vmem:[%s292 + $0x18] sm:$0xff] %v299
                  %v301 = vld [vmem:[%s291 + $0x40] sm:$0xff]
                  %302 = vst [vmem:[%s292 + $0x20] sm:$0xff] %v301
                  %v303 = vld [vmem:[%s291 + $0x50] sm:$0xff]
                  %304 = vst [vmem:[%s292 + $0x28] sm:$0xff] %v303
                  %v305 = vld [vmem:[%s291 + $0x60] sm:$0xff]
                  %306 = vst [vmem:[%s292 + $0x30] sm:$0xff] %v305
                  %v307 = vld [vmem:[%s291 + $0x70] sm:$0xff]
                  %308 = vst [vmem:[%s292 + $0x38] sm:$0xff] %v307
                  %v309 = vld [vmem:[%s291 + $0x80] sm:$0xff]
                  %310 = vst [vmem:[%s292 + $0x40] sm:$0xff] %v309
                  %v311 = vld [vmem:[%s291 + $0x90] sm:$0xff]
                  %312 = vst [vmem:[%s292 + $0x48] sm:$0xff] %v311
                  %v313 = vld [vmem:[%s291 + $0xa0] sm:$0xff]
                  %314 = vst [vmem:[%s292 + $0x50] sm:$0xff] %v313
                  %v315 = vld [vmem:[%s291 + $0xb0] sm:$0xff]
                  %316 = vst [vmem:[%s292 + $0x58] sm:$0xff] %v315
                  %v317 = vld [vmem:[%s291 + $0xc0] sm:$0xff]
                  %318 = vst [vmem:[%s292 + $0x60] sm:$0xff] %v317
                  %v319 = vld [vmem:[%s291 + $0xd0] sm:$0xff]
                  %320 = vst [vmem:[%s292 + $0x68] sm:$0xff] %v319
                  %v321 = vld [vmem:[%s291 + $0xe0] sm:$0xff]
                  %322 = vst [vmem:[%s292 + $0x70] sm:$0xff] %v321
                  %v323 = vld [vmem:[%s291 + $0xf0] sm:$0xff]
                  %324 = vst [vmem:[%s292 + $0x78] sm:$0xff] %v323
                $region56: #{_lambda_.3} parent=50 // loop_footer
                  %s290 = sadd.s32 1, %s286
                $region57: #{_lambda_.3} parent=50 // loop_footer_branch
                  %285 = sbr.rel target = $region53
                $region58: #{_lambda_.3} parent=50 // loop_exit
                  _
              $region51: #{_lambda_.3} parent=35 // pred_fallthru
                _
              // Predicated region
              $region59: #{_lambda_.3} parent=35 // pred_check
                _
              $region60: #{_lambda_.3} parent=35 // pred_check_branch
                %326 = sbr.rel target = $region62
              $region61: #{_lambda_.3} parent=35 // pred_region
                _
              $region62: #{_lambda_.3} parent=35 // pred_fallthru
                _
            $region36: #{_lambda_.3} parent=31 // pred_fallthru
              _
            // Predicated region
            $region37: #{_lambda_.3} parent=31 // pred_check
              _
            $region38: #{_lambda_.3} parent=31 // pred_check_branch
              %241 = sbr.rel target = $region40
            $region39: #{_lambda_.3} parent=31 // pred_region
              loop: start=0, step=1, limit=1
              $region41: #{_lambda_.3} parent=39 // loop_pre_header
                _
              $region42: #{_lambda_.3} parent=39 // loop_header
                %s244 = sphi 0, %s248
                %p245 = scmp.ge.s32.totalorder %s244, 1
                %s249 = sphi %s235, %s235
                %s250 = sphi %s230, %s230
              $region43: #{_lambda_.3} parent=39 // loop_header_branch
                %247 = sbr.rel (%p245) target = $region47
              $region44: #{_lambda_.3} parent=39 // loop_body
                %v251 = vld [vmem:[%s249] sm:$0xff]
                %252 = vst [vmem:[%s250] sm:$0xff] %v251
                %v253 = vld [vmem:[%s249 + $0x10] sm:$0xff]
                %254 = vst [vmem:[%s250 + $0x8] sm:$0xff] %v253
                %v255 = vld [vmem:[%s249 + $0x20] sm:$0xff]
                %256 = vst [vmem:[%s250 + $0x10] sm:$0xff] %v255
                %v257 = vld [vmem:[%s249 + $0x30] sm:$0xff]
                %258 = vst [vmem:[%s250 + $0x18] sm:$0xff] %v257
                %v259 = vld [vmem:[%s249 + $0x40] sm:$0xff]
                %260 = vst [vmem:[%s250 + $0x20] sm:$0xff] %v259
                %v261 = vld [vmem:[%s249 + $0x50] sm:$0xff]
                %262 = vst [vmem:[%s250 + $0x28] sm:$0xff] %v261
                %v263 = vld [vmem:[%s249 + $0x60] sm:$0xff]
                %264 = vst [vmem:[%s250 + $0x30] sm:$0xff] %v263
                %v265 = vld [vmem:[%s249 + $0x70] sm:$0xff]
                %266 = vst [vmem:[%s250 + $0x38] sm:$0xff] %v265
                %v267 = vld [vmem:[%s249 + $0x80] sm:$0xff]
                %268 = vst [vmem:[%s250 + $0x40] sm:$0xff] %v267
                %v269 = vld [vmem:[%s249 + $0x90] sm:$0xff]
                %270 = vst [vmem:[%s250 + $0x48] sm:$0xff] %v269
                %v271 = vld [vmem:[%s249 + $0xa0] sm:$0xff]
                %272 = vst [vmem:[%s250 + $0x50] sm:$0xff] %v271
                %v273 = vld [vmem:[%s249 + $0xb0] sm:$0xff]
                %274 = vst [vmem:[%s250 + $0x58] sm:$0xff] %v273
                %v275 = vld [vmem:[%s249 + $0xc0] sm:$0xff]
                %276 = vst [vmem:[%s250 + $0x60] sm:$0xff] %v275
                %v277 = vld [vmem:[%s249 + $0xd0] sm:$0xff]
                %278 = vst [vmem:[%s250 + $0x68] sm:$0xff] %v277
                %v279 = vld [vmem:[%s249 + $0xe0] sm:$0xff]
                %280 = vst [vmem:[%s250 + $0x70] sm:$0xff] %v279
                %v281 = vld [vmem:[%s249 + $0xf0] sm:$0xff]
                %282 = vst [vmem:[%s250 + $0x78] sm:$0xff] %v281
              $region45: #{_lambda_.3} parent=39 // loop_footer
                %s248 = sadd.s32 1, %s244
              $region46: #{_lambda_.3} parent=39 // loop_footer_branch
                %243 = sbr.rel target = $region42
              $region47: #{_lambda_.3} parent=39 // loop_exit
                _
            $region40: #{_lambda_.3} parent=31 // pred_fallthru
              _
          $region32: #{_lambda_.3} parent=27 // pred_fallthru
            _
          %327 = vnop
        $region28: #{_lambda_.3} parent=23 // pred_fallthru
          _
        // Predicated region
        $region63: #{_lambda_.3} parent=23 // pred_check
          %p328 = pneg %p73
        $region64: #{_lambda_.3} parent=23 // pred_check_branch
          %330 = sbr.rel (%p328) target = $region66
        $region65: #{_lambda_.3} parent=23 // pred_region
          %s331 = smul.u32 16, %s21
          %p332 = scmp.lt.s32.totalorder %s331, 31
          %s333 = scalar_select %p332, %s331, 31
          %s334 = smul.addr %s333, 8
          %s335 = scalar_lea.vmem %s1, %s334
          %s336 = smul.u32 16, %s21
        $region66: #{_lambda_.3} parent=23 // pred_fallthru
          _
        // Predicated region
        $region67: #{_lambda_.3} parent=23 // pred_check
          %p337 = pneg %p99
        $region68: #{_lambda_.3} parent=23 // pred_check_branch
          %339 = sbr.rel (%p337) target = $region70
        $region69: #{_lambda_.3} parent=23 // pred_region
          %s340 = smul.u32 16, %s20
          %p341 = scmp.lt.s32.totalorder %s340, 31
          %s342 = scalar_select %p341, %s340, 31
          %s343 = smul.addr %s342, 8
          %s344 = scalar_lea.vmem %s2, %s343
          %s345 = smul.u32 16, %s20
        $region70: #{_lambda_.3} parent=23 // pred_fallthru
          _
      $region24: #{_lambda_.3} parent=5 // pred_fallthru
        _
      %p346 = scmp.le.s32.totalorder 1, %s13
      %p347 = scmp.lt.s32.totalorder %s13, 5
      %p348 = pnand %p346, %p347
      %p349 = pneg %p348
      // Predicated region
      $region71: #{_lambda_.3} parent=5 // pred_check
        _
      $region72: #{_lambda_.3} parent=5 // pred_check_branch
        %351 = sbr.rel (%p348) target = $region74
      $region73: #{_lambda_.3} parent=5 // pred_region
        %s352 = ssub.s32 %s13, 1
        %s353 = sand.u32 %s40, 1
        %s354 = sand.u32 %s40, 1
        %s355 = smul.addr %s354, 128
        %s356 = scalar_lea.vmem [#allocation3], %s355
        // Predicated region
        $region75: #{_lambda_.3} parent=73 // pred_check
          %p357 = pneg %p53
        $region76: #{_lambda_.3} parent=73 // pred_check_branch
          %359 = sbr.rel (%p357) target = $region78
        $region77: #{_lambda_.3} parent=73 // pred_region
          _
        $region78: #{_lambda_.3} parent=73 // pred_fallthru
          _
        %s360 = sand.u32 %s40, 1
        %s361 = sand.u32 %s40, 1
        %s362 = smul.addr %s361, 128
        %s363 = scalar_lea.vmem [#allocation3], %s362
        %p364 = pneg %p53
        %p365 = pneg %p50
        %s366 = smul.u32 16, %s23
        %p367 = scmp.lt.s32.totalorder %s366, 31
        %s368 = scalar_select %p367, %s366, 31
        %s369 = smul.addr %s368, 8
        %s370 = scalar_lea.vmem %s1, %s369
        %p371 = pneg %p79
        %p372 = pneg %p76
        %s373 = smul.u32 16, %s22
        %p374 = scmp.lt.s32.totalorder %s373, 31
        %s375 = scalar_select %p374, %s373, 31
        %s376 = smul.addr %s375, 8
        %s377 = scalar_lea.vmem %s2, %s376
        %p378 = pneg %p105
        %p379 = pneg %p102
        %p380 = pneg %p126
        %p381 = pneg %p123
        %p382 = pneg %p147
        %p383 = pneg %p144
        %p384 = pneg %p173
        %p385 = pneg %p170
        %s386 = smul.u32 16, %s22
        %p387 = scmp.lt.s32.totalorder %s386, 31
        %s388 = scalar_select %p387, %s386, 31
        %s389 = smul.addr %s388, 8
        %s390 = scalar_lea.vmem %s5, %s389
        %p391 = pneg %p199
        %p392 = pneg %p196
        %p393 = scmp.lt.s32.totalorder %s22, 1
        %s394 = scalar_select %p393, %s22, 1
        %s395 = smul.addr %s394, 2
        %s396 = scalar_lea.vmem %s6, %s395
        %s397 = smul.u32 16, %s22
        %s398 = smul.u32 16, %s23
        %p399 = scmp.lt.s32.totalorder %s398, 31
        %s400 = scalar_select %p399, %s398, 31
        %s401 = smul.addr %s400, 8
        %s402 = scalar_lea.vmem %s1, %s401
        %s403 = smul.u32 16, %s23
        %s404 = smul.u32 16, %s22
        %p405 = scmp.lt.s32.totalorder %s404, 31
        %s406 = scalar_select %p405, %s404, 31
        %s407 = smul.addr %s406, 8
        %s408 = scalar_lea.vmem %s2, %s407
        %s409 = smul.u32 16, %s22
        %s410 = smul.u32 16, %s22
        %p411 = scmp.lt.s32.totalorder %s410, 31
        %s412 = scalar_select %p411, %s410, 31
        %s413 = smul.addr %s412, 8
        %s414 = scalar_lea.vmem %s5, %s413
        %s415 = smul.u32 16, %s22
        %p416 = scmp.lt.s32.totalorder %s22, 1
        %s417 = scalar_select %p416, %s22, 1
        %s418 = smul.addr %s417, 2
        %s419 = scalar_lea.vmem %s6, %s418
        %p420 = scmp.eq.s32.totalorder %s23, 0
        // Predicated region
        $region79: #{_lambda_.3} parent=73 // pred_check
          %p421 = pneg %p420
        $region80: #{_lambda_.3} parent=73 // pred_check_branch
          %423 = sbr.rel (%p421) target = $region82
        $region81: #{_lambda_.3} parent=73 // pred_region
          %424 = vst [vmem:[#allocation2] sm:$0xff] 0.0
          %425 = vst [vmem:[#allocation2 + $0x8] sm:$0xff] 0.0
          %426 = vst [vmem:[#allocation2 + $0x10] sm:$0xff] 0.0
          %427 = vst [vmem:[#allocation2 + $0x18] sm:$0xff] 0.0
          %428 = vst [vmem:[#allocation2 + $0x20] sm:$0xff] 0.0
          %429 = vst [vmem:[#allocation2 + $0x28] sm:$0xff] 0.0
          %430 = vst [vmem:[#allocation2 + $0x30] sm:$0xff] 0.0
          %431 = vst [vmem:[#allocation2 + $0x38] sm:$0xff] 0.0
          %432 = vst [vmem:[#allocation2 + $0x40] sm:$0xff] 0.0
          %433 = vst [vmem:[#allocation2 + $0x48] sm:$0xff] 0.0
          %434 = vst [vmem:[#allocation2 + $0x50] sm:$0xff] 0.0
          %435 = vst [vmem:[#allocation2 + $0x58] sm:$0xff] 0.0
          %436 = vst [vmem:[#allocation2 + $0x60] sm:$0xff] 0.0
          %437 = vst [vmem:[#allocation2 + $0x68] sm:$0xff] 0.0
          %438 = vst [vmem:[#allocation2 + $0x70] sm:$0xff] 0.0
          %439 = vst [vmem:[#allocation2 + $0x78] sm:$0xff] 0.0
        $region82: #{_lambda_.3} parent=73 // pred_fallthru
          _
        %v440 = vld [vmem:[#allocation2] sm:$0xff]
        %v441 = vld [vmem:[#allocation2 + $0x8] sm:$0xff]
        %v442 = vld [vmem:[#allocation2 + $0x10] sm:$0xff]
        %v443 = vld [vmem:[#allocation2 + $0x18] sm:$0xff]
        %v444 = vld [vmem:[#allocation2 + $0x20] sm:$0xff]
        %v445 = vld [vmem:[#allocation2 + $0x28] sm:$0xff]
        %v446 = vld [vmem:[#allocation2 + $0x30] sm:$0xff]
        %v447 = vld [vmem:[#allocation2 + $0x38] sm:$0xff]
        %v448 = vld [vmem:[#allocation2 + $0x40] sm:$0xff]
        %v449 = vld [vmem:[#allocation2 + $0x48] sm:$0xff]
        %v450 = vld [vmem:[#allocation2 + $0x50] sm:$0xff]
        %v451 = vld [vmem:[#allocation2 + $0x58] sm:$0xff]
        %v452 = vld [vmem:[#allocation2 + $0x60] sm:$0xff]
        %v453 = vld [vmem:[#allocation2 + $0x68] sm:$0xff]
        %v454 = vld [vmem:[#allocation2 + $0x70] sm:$0xff]
        %v455 = vld [vmem:[#allocation2 + $0x78] sm:$0xff]
        %v456 = vld [vmem:[%s356] sm:$0xff]
        %v457 = vld [vmem:[%s356 + $0x8] sm:$0xff]
        %v458 = vld [vmem:[%s356 + $0x10] sm:$0xff]
        %v459 = vld [vmem:[%s356 + $0x18] sm:$0xff]
        %v460 = vld [vmem:[%s356 + $0x20] sm:$0xff]
        %v461 = vld [vmem:[%s356 + $0x28] sm:$0xff]
        %v462 = vld [vmem:[%s356 + $0x30] sm:$0xff]
        %v463 = vld [vmem:[%s356 + $0x38] sm:$0xff]
        %v464 = vld [vmem:[%s356 + $0x40] sm:$0xff]
        %v465 = vld [vmem:[%s356 + $0x48] sm:$0xff]
        %v466 = vld [vmem:[%s356 + $0x50] sm:$0xff]
        %v467 = vld [vmem:[%s356 + $0x58] sm:$0xff]
        %v468 = vld [vmem:[%s356 + $0x60] sm:$0xff]
        %v469 = vld [vmem:[%s356 + $0x68] sm:$0xff]
        %v470 = vld [vmem:[%s356 + $0x70] sm:$0xff]
        %v471 = vld [vmem:[%s356 + $0x78] sm:$0xff]
        %v472 = vld [vmem:[%s402] sm:$0xff]
        %v473 = vld [vmem:[%s402 + $0x8] sm:$0xff]
        %v474 = vld [vmem:[%s402 + $0x10] sm:$0xff]
        %v475 = vld [vmem:[%s402 + $0x18] sm:$0xff]
        %v476 = vld [vmem:[%s402 + $0x20] sm:$0xff]
        %v477 = vld [vmem:[%s402 + $0x28] sm:$0xff]
        %v478 = vld [vmem:[%s402 + $0x30] sm:$0xff]
        %v479 = vld [vmem:[%s402 + $0x38] sm:$0xff]
        %v480 = vld [vmem:[%s402 + $0x40] sm:$0xff]
        %v481 = vld [vmem:[%s402 + $0x48] sm:$0xff]
        %v482 = vld [vmem:[%s402 + $0x50] sm:$0xff]
        %v483 = vld [vmem:[%s402 + $0x58] sm:$0xff]
        %v484 = vld [vmem:[%s402 + $0x60] sm:$0xff]
        %v485 = vld [vmem:[%s402 + $0x68] sm:$0xff]
        %v486 = vld [vmem:[%s402 + $0x70] sm:$0xff]
        %v487 = vld [vmem:[%s402 + $0x78] sm:$0xff]
        %488 = vmatprep.subr.mxu0 0.0
        %v489 = vand.u32 %v472, 4294901760
        %490 = vmatpush1.msra.mxu0 %v489
        %491 = vmatprep.subr.mxu0 0.0
        %v492 = vand.u32 %v473, 4294901760
        %493 = vmatpush1.msra.mxu0 %v492
        %494 = vmatprep.subr.mxu0 0.0
        %v495 = vand.u32 %v474, 4294901760
        %496 = vmatpush1.msra.mxu0 %v495
        %497 = vmatprep.subr.mxu0 0.0
        %v498 = vand.u32 %v475, 4294901760
        %499 = vmatpush1.msra.mxu0 %v498
        %500 = vmatprep.subr.mxu0 0.0
        %v501 = vand.u32 %v476, 4294901760
        %502 = vmatpush1.msra.mxu0 %v501
        %503 = vmatprep.subr.mxu0 0.0
        %v504 = vand.u32 %v477, 4294901760
        %505 = vmatpush1.msra.mxu0 %v504
        %506 = vmatprep.subr.mxu0 0.0
        %v507 = vand.u32 %v478, 4294901760
        %508 = vmatpush1.msra.mxu0 %v507
        %509 = vmatprep.subr.mxu0 0.0
        %v510 = vand.u32 %v479, 4294901760
        %511 = vmatpush1.msra.mxu0 %v510
        %512 = vmatprep.subr.mxu0 0.0
        %v513 = vand.u32 %v480, 4294901760
        %514 = vmatpush1.msra.mxu0 %v513
        %515 = vmatprep.subr.mxu0 0.0
        %v516 = vand.u32 %v481, 4294901760
        %517 = vmatpush1.msra.mxu0 %v516
        %518 = vmatprep.subr.mxu0 0.0
        %v519 = vand.u32 %v482, 4294901760
        %520 = vmatpush1.msra.mxu0 %v519
        %521 = vmatprep.subr.mxu0 0.0
        %v522 = vand.u32 %v483, 4294901760
        %523 = vmatpush1.msra.mxu0 %v522
        %524 = vmatprep.subr.mxu0 0.0
        %v525 = vand.u32 %v484, 4294901760
        %526 = vmatpush1.msra.mxu0 %v525
        %527 = vmatprep.subr.mxu0 0.0
        %v528 = vand.u32 %v485, 4294901760
        %529 = vmatpush1.msra.mxu0 %v528
        %530 = vmatprep.subr.mxu0 0.0
        %v531 = vand.u32 %v486, 4294901760
        %532 = vmatpush1.msra.mxu0 %v531
        %533 = vmatprep.subr.mxu0 0.0
        %v534 = vand.u32 %v487, 4294901760
        %535 = vmatpush1.msra.mxu0 %v534
        %536 = vmatprep.subr.mxu0 0.0
        %537 = vmatpush1.msra.mxu0 0.0
        %538 = vmatprep.subr.mxu0 0.0
        %539 = vmatpush1.msra.mxu0 0.0
        %540 = vmatprep.subr.mxu0 0.0
        %541 = vmatpush1.msra.mxu0 0.0
        %542 = vmatprep.subr.mxu0 0.0
        %543 = vmatpush1.msra.mxu0 0.0
        %544 = vmatprep.subr.mxu0 0.0
        %545 = vmatpush1.msra.mxu0 0.0
        %546 = vmatprep.subr.mxu0 0.0
        %547 = vmatpush1.msra.mxu0 0.0
        %548 = vmatprep.subr.mxu0 0.0
        %549 = vmatpush1.msra.mxu0 0.0
        %550 = vmatprep.subr.mxu0 0.0
        %551 = vmatpush1.msra.mxu0 0.0
        %552 = vmatprep.subr.mxu0 0.0
        %553 = vmatpush1.msra.mxu0 0.0
        %554 = vmatprep.subr.mxu0 0.0
        %555 = vmatpush1.msra.mxu0 0.0
        %556 = vmatprep.subr.mxu0 0.0
        %557 = vmatpush1.msra.mxu0 0.0
        %558 = vmatprep.subr.mxu0 0.0
        %559 = vmatpush1.msra.mxu0 0.0
        %560 = vmatprep.subr.mxu0 0.0
        %561 = vmatpush1.msra.mxu0 0.0
        %562 = vmatprep.subr.mxu0 0.0
        %563 = vmatpush1.msra.mxu0 0.0
        %564 = vmatprep.subr.mxu0 0.0
        %565 = vmatpush1.msra.mxu0 0.0
        %566 = vmatprep.subr.mxu0 0.0
        %567 = vmatpush1.msra.mxu0 0.0
        %568 = vmatprep.mubr.f32.mxu0 0.0
        %v569 = vand.u32 %v456, 4294901760
        %v570 = vsub.f32 %v456, %v569
        %v571 = vand.u32 %v570, 4294901760
        %v572 = vsub.f32 %v570, %v571
        %v573 = vand.u32 %v572, 4294901760
        %574 = vmatmul.mubr.f32.gmra.mrb[0].mxu0 %v573
        %v575 = vpop.f32.mrb[0].mxu0
        %v576 = vadd.f32 0.0, %v575
        %v577 = vpop.f32.mrb[0].mxu0
        %578 = vmatprep.mubr.f32.mxu0 0.0
        %v579 = vand.u32 %v457, 4294901760
        %v580 = vsub.f32 %v457, %v579
        %v581 = vand.u32 %v580, 4294901760
        %v582 = vsub.f32 %v580, %v581
        %v583 = vand.u32 %v582, 4294901760
        %584 = vmatmul.mubr.f32.gmra.mrb[0].mxu0 %v583
        %v585 = vpop.f32.mrb[0].mxu0
        %v586 = vadd.f32 0.0, %v585
        %v587 = vpop.f32.mrb[0].mxu0
        %588 = vmatprep.mubr.f32.mxu0 0.0
        %v589 = vand.u32 %v458, 4294901760
        %v590 = vsub.f32 %v458, %v589
        %v591 = vand.u32 %v590, 4294901760
        %v592 = vsub.f32 %v590, %v591
        %v593 = vand.u32 %v592, 4294901760
        %594 = vmatmul.mubr.f32.gmra.mrb[0].mxu0 %v593
        %v595 = vpop.f32.mrb[0].mxu0
        %v596 = vadd.f32 0.0, %v595
        %v597 = vpop.f32.mrb[0].mxu0
        %598 = vmatprep.mubr.f32.mxu0 0.0
        %v599 = vand.u32 %v459, 4294901760
        %v600 = vsub.f32 %v459, %v599
        %v601 = vand.u32 %v600, 4294901760
        %v602 = vsub.f32 %v600, %v601
        %v603 = vand.u32 %v602, 4294901760
        %604 = vmatmul.mubr.f32.gmra.mrb[0].mxu0 %v603
        %v605 = vpop.f32.mrb[0].mxu0
        %v606 = vadd.f32 0.0, %v605
        %v607 = vpop.f32.mrb[0].mxu0
        %608 = vmatprep.mubr.f32.mxu0 0.0
        %v609 = vand.u32 %v460, 4294901760
        %v610 = vsub.f32 %v460, %v609
        %v611 = vand.u32 %v610, 4294901760
        %v612 = vsub.f32 %v610, %v611
        %v613 = vand.u32 %v612, 4294901760
        %614 = vmatmul.mubr.f32.gmra.mrb[0].mxu0 %v613
        %v615 = vpop.f32.mrb[0].mxu0
        %v616 = vadd.f32 0.0, %v615
        %v617 = vpop.f32.mrb[0].mxu0
        %618 = vmatprep.mubr.f32.mxu0 0.0
        %v619 = vand.u32 %v461, 4294901760
        %v620 = vsub.f32 %v461, %v619
        %v621 = vand.u32 %v620, 4294901760
        %v622 = vsub.f32 %v620, %v621
        %v623 = vand.u32 %v622, 4294901760
        %624 = vmatmul.mubr.f32.gmra.mrb[0].mxu0 %v623
        %v625 = vpop.f32.mrb[0].mxu0
        %v626 = vadd.f32 0.0, %v625
        %v627 = vpop.f32.mrb[0].mxu0
        %628 = vmatprep.mubr.f32.mxu0 0.0
        %v629 = vand.u32 %v462, 4294901760
        %v630 = vsub.f32 %v462, %v629
        %v631 = vand.u32 %v630, 4294901760
        %v632 = vsub.f32 %v630, %v631
        %v633 = vand.u32 %v632, 4294901760
        %634 = vmatmul.mubr.f32.gmra.mrb[0].mxu0 %v633
        %v635 = vpop.f32.mrb[0].mxu0
        %v636 = vadd.f32 0.0, %v635
        %v637 = vpop.f32.mrb[0].mxu0
        %638 = vmatprep.mubr.f32.mxu0 0.0
        %v639 = vand.u32 %v463, 4294901760
        %v640 = vsub.f32 %v463, %v639
        %v641 = vand.u32 %v640, 4294901760
        %v642 = vsub.f32 %v640, %v641
        %v643 = vand.u32 %v642, 4294901760
        %644 = vmatmul.mubr.f32.gmra.mrb[0].mxu0 %v643
        %v645 = vpop.f32.mrb[0].mxu0
        %v646 = vadd.f32 0.0, %v645
        %v647 = vpop.f32.mrb[0].mxu0
        %648 = vmatprep.mubr.f32.mxu0 0.0
        %v649 = vand.u32 %v464, 4294901760
        %v650 = vsub.f32 %v464, %v649
        %v651 = vand.u32 %v650, 4294901760
        %v652 = vsub.f32 %v650, %v651
        %v653 = vand.u32 %v652, 4294901760
        %654 = vmatmul.mubr.f32.gmra.mrb[0].mxu0 %v653
        %v655 = vpop.f32.mrb[0].mxu0
        %v656 = vadd.f32 0.0, %v655
        %v657 = vpop.f32.mrb[0].mxu0
        %658 = vmatprep.mubr.f32.mxu0 0.0
        %v659 = vand.u32 %v465, 4294901760
        %v660 = vsub.f32 %v465, %v659
        %v661 = vand.u32 %v660, 4294901760
        %v662 = vsub.f32 %v660, %v661
        %v663 = vand.u32 %v662, 4294901760
        %664 = vmatmul.mubr.f32.gmra.mrb[0].mxu0 %v663
        %v665 = vpop.f32.mrb[0].mxu0
        %v666 = vadd.f32 0.0, %v665
        %v667 = vpop.f32.mrb[0].mxu0
        %668 = vmatprep.mubr.f32.mxu0 0.0
        %v669 = vand.u32 %v466, 4294901760
        %v670 = vsub.f32 %v466, %v669
        %v671 = vand.u32 %v670, 4294901760
        %v672 = vsub.f32 %v670, %v671
        %v673 = vand.u32 %v672, 4294901760
        %674 = vmatmul.mubr.f32.gmra.mrb[0].mxu0 %v673
        %v675 = vpop.f32.mrb[0].mxu0
        %v676 = vadd.f32 0.0, %v675
        %v677 = vpop.f32.mrb[0].mxu0
        %678 = vmatprep.mubr.f32.mxu0 0.0
        %v679 = vand.u32 %v467, 4294901760
        %v680 = vsub.f32 %v467, %v679
        %v681 = vand.u32 %v680, 4294901760
        %v682 = vsub.f32 %v680, %v681
        %v683 = vand.u32 %v682, 4294901760
        %684 = vmatmul.mubr.f32.gmra.mrb[0].mxu0 %v683
        %v685 = vpop.f32.mrb[0].mxu0
        %v686 = vadd.f32 0.0, %v685
        %v687 = vpop.f32.mrb[0].mxu0
        %688 = vmatprep.mubr.f32.mxu0 0.0
        %v689 = vand.u32 %v468, 4294901760
        %v690 = vsub.f32 %v468, %v689
        %v691 = vand.u32 %v690, 4294901760
        %v692 = vsub.f32 %v690, %v691
        %v693 = vand.u32 %v692, 4294901760
        %694 = vmatmul.mubr.f32.gmra.mrb[0].mxu0 %v693
        %v695 = vpop.f32.mrb[0].mxu0
        %v696 = vadd.f32 0.0, %v695
        %v697 = vpop.f32.mrb[0].mxu0
        %698 = vmatprep.mubr.f32.mxu0 0.0
        %v699 = vand.u32 %v469, 4294901760
        %v700 = vsub.f32 %v469, %v699
        %v701 = vand.u32 %v700, 4294901760
        %v702 = vsub.f32 %v700, %v701
        %v703 = vand.u32 %v702, 4294901760
        %704 = vmatmul.mubr.f32.gmra.mrb[0].mxu0 %v703
        %v705 = vpop.f32.mrb[0].mxu0
        %v706 = vadd.f32 0.0, %v705
        %v707 = vpop.f32.mrb[0].mxu0
        %708 = vmatprep.mubr.f32.mxu0 0.0
        %v709 = vand.u32 %v470, 4294901760
        %v710 = vsub.f32 %v470, %v709
        %v711 = vand.u32 %v710, 4294901760
        %v712 = vsub.f32 %v710, %v711
        %v713 = vand.u32 %v712, 4294901760
        %714 = vmatmul.mubr.f32.gmra.mrb[0].mxu0 %v713
        %v715 = vpop.f32.mrb[0].mxu0
        %v716 = vadd.f32 0.0, %v715
        %v717 = vpop.f32.mrb[0].mxu0
        %718 = vmatprep.mubr.f32.mxu0 0.0
        %v719 = vand.u32 %v471, 4294901760
        %v720 = vsub.f32 %v471, %v719
        %v721 = vand.u32 %v720, 4294901760
        %v722 = vsub.f32 %v720, %v721
        %v723 = vand.u32 %v722, 4294901760
        %724 = vmatmul.mubr.f32.gmra.mrb[0].mxu0 %v723
        %v725 = vpop.f32.mrb[0].mxu0
        %v726 = vadd.f32 0.0, %v725
        %v727 = vpop.f32.mrb[0].mxu0
        %728 = vdwg.mxu0
        %729 = vmatprep.subr.mxu0 0.0
        %v730 = vand.u32 %v472, 4294901760
        %v731 = vsub.f32 %v472, %v730
        %v732 = vand.u32 %v731, 4294901760
        %v733 = vsub.f32 %v731, %v732
        %v734 = vand.u32 %v733, 4294901760
        %735 = vmatpush1.msra.mxu0 %v734
        %736 = vmatprep.subr.mxu0 0.0
        %v737 = vand.u32 %v473, 4294901760
        %v738 = vsub.f32 %v473, %v737
        %v739 = vand.u32 %v738, 4294901760
        %v740 = vsub.f32 %v738, %v739
        %v741 = vand.u32 %v740, 4294901760
        %742 = vmatpush1.msra.mxu0 %v741
        %743 = vmatprep.subr.mxu0 0.0
        %v744 = vand.u32 %v474, 4294901760
        %v745 = vsub.f32 %v474, %v744
        %v746 = vand.u32 %v745, 4294901760
        %v747 = vsub.f32 %v745, %v746
        %v748 = vand.u32 %v747, 4294901760
        %749 = vmatpush1.msra.mxu0 %v748
        %750 = vmatprep.subr.mxu0 0.0
        %v751 = vand.u32 %v475, 4294901760
        %v752 = vsub.f32 %v475, %v751
        %v753 = vand.u32 %v752, 4294901760
        %v754 = vsub.f32 %v752, %v753
        %v755 = vand.u32 %v754, 4294901760
        %756 = vmatpush1.msra.mxu0 %v755
        %757 = vmatprep.subr.mxu0 0.0
        %v758 = vand.u32 %v476, 4294901760
        %v759 = vsub.f32 %v476, %v758
        %v760 = vand.u32 %v759, 4294901760
        %v761 = vsub.f32 %v759, %v760
        %v762 = vand.u32 %v761, 4294901760
        %763 = vmatpush1.msra.mxu0 %v762
        %764 = vmatprep.subr.mxu0 0.0
        %v765 = vand.u32 %v477, 4294901760
        %v766 = vsub.f32 %v477, %v765
        %v767 = vand.u32 %v766, 4294901760
        %v768 = vsub.f32 %v766, %v767
        %v769 = vand.u32 %v768, 4294901760
        %770 = vmatpush1.msra.mxu0 %v769
        %771 = vmatprep.subr.mxu0 0.0
        %v772 = vand.u32 %v478, 4294901760
        %v773 = vsub.f32 %v478, %v772
        %v774 = vand.u32 %v773, 4294901760
        %v775 = vsub.f32 %v773, %v774
        %v776 = vand.u32 %v775, 4294901760
        %777 = vmatpush1.msra.mxu0 %v776
        %778 = vmatprep.subr.mxu0 0.0
        %v779 = vand.u32 %v479, 4294901760
        %v780 = vsub.f32 %v479, %v779
        %v781 = vand.u32 %v780, 4294901760
        %v782 = vsub.f32 %v780, %v781
        %v783 = vand.u32 %v782, 4294901760
        %784 = vmatpush1.msra.mxu0 %v783
        %785 = vmatprep.subr.mxu0 0.0
        %v786 = vand.u32 %v480, 4294901760
        %v787 = vsub.f32 %v480, %v786
        %v788 = vand.u32 %v787, 4294901760
        %v789 = vsub.f32 %v787, %v788
        %v790 = vand.u32 %v789, 4294901760
        %791 = vmatpush1.msra.mxu0 %v790
        %792 = vmatprep.subr.mxu0 0.0
        %v793 = vand.u32 %v481, 4294901760
        %v794 = vsub.f32 %v481, %v793
        %v795 = vand.u32 %v794, 4294901760
        %v796 = vsub.f32 %v794, %v795
        %v797 = vand.u32 %v796, 4294901760
        %798 = vmatpush1.msra.mxu0 %v797
        %799 = vmatprep.subr.mxu0 0.0
        %v800 = vand.u32 %v482, 4294901760
        %v801 = vsub.f32 %v482, %v800
        %v802 = vand.u32 %v801, 4294901760
        %v803 = vsub.f32 %v801, %v802
        %v804 = vand.u32 %v803, 4294901760
        %805 = vmatpush1.msra.mxu0 %v804
        %806 = vmatprep.subr.mxu0 0.0
        %v807 = vand.u32 %v483, 4294901760
        %v808 = vsub.f32 %v483, %v807
        %v809 = vand.u32 %v808, 4294901760
        %v810 = vsub.f32 %v808, %v809
        %v811 = vand.u32 %v810, 4294901760
        %812 = vmatpush1.msra.mxu0 %v811
        %813 = vmatprep.subr.mxu0 0.0
        %v814 = vand.u32 %v484, 4294901760
        %v815 = vsub.f32 %v484, %v814
        %v816 = vand.u32 %v815, 4294901760
        %v817 = vsub.f32 %v815, %v816
        %v818 = vand.u32 %v817, 4294901760
        %819 = vmatpush1.msra.mxu0 %v818
        %820 = vmatprep.subr.mxu0 0.0
        %v821 = vand.u32 %v485, 4294901760
        %v822 = vsub.f32 %v485, %v821
        %v823 = vand.u32 %v822, 4294901760
        %v824 = vsub.f32 %v822, %v823
        %v825 = vand.u32 %v824, 4294901760
        %826 = vmatpush1.msra.mxu0 %v825
        %827 = vmatprep.subr.mxu0 0.0
        %v828 = vand.u32 %v486, 4294901760
        %v829 = vsub.f32 %v486, %v828
        %v830 = vand.u32 %v829, 4294901760
        %v831 = vsub.f32 %v829, %v830
        %v832 = vand.u32 %v831, 4294901760
        %833 = vmatpush1.msra.mxu0 %v832
        %834 = vmatprep.subr.mxu0 0.0
        %v835 = vand.u32 %v487, 4294901760
        %v836 = vsub.f32 %v487, %v835
        %v837 = vand.u32 %v836, 4294901760
        %v838 = vsub.f32 %v836, %v837
        %v839 = vand.u32 %v838, 4294901760
        %840 = vmatpush1.msra.mxu0 %v839
        %841 = vmatprep.subr.mxu0 0.0
        %842 = vmatpush1.msra.mxu0 0.0
        %843 = vmatprep.subr.mxu0 0.0
        %844 = vmatpush1.msra.mxu0 0.0
        %845 = vmatprep.subr.mxu0 0.0
        %846 = vmatpush1.msra.mxu0 0.0
        %847 = vmatprep.subr.mxu0 0.0
        %848 = vmatpush1.msra.mxu0 0.0
        %849 = vmatprep.subr.mxu0 0.0
        %850 = vmatpush1.msra.mxu0 0.0
        %851 = vmatprep.subr.mxu0 0.0
        %852 = vmatpush1.msra.mxu0 0.0
        %853 = vmatprep.subr.mxu0 0.0
        %854 = vmatpush1.msra.mxu0 0.0
        %855 = vmatprep.subr.mxu0 0.0
        %856 = vmatpush1.msra.mxu0 0.0
        %857 = vmatprep.subr.mxu0 0.0
        %858 = vmatpush1.msra.mxu0 0.0
        %859 = vmatprep.subr.mxu0 0.0
        %860 = vmatpush1.msra.mxu0 0.0
        %861 = vmatprep.subr.mxu0 0.0
        %862 = vmatpush1.msra.mxu0 0.0
        %863 = vmatprep.subr.mxu0 0.0
        %864 = vmatpush1.msra.mxu0 0.0
        %865 = vmatprep.subr.mxu0 0.0
        %866 = vmatpush1.msra.mxu0 0.0
        %867 = vmatprep.subr.mxu0 0.0
        %868 = vmatpush1.msra.mxu0 0.0
        %869 = vmatprep.subr.mxu0 0.0
        %870 = vmatpush1.msra.mxu0 0.0
        %871 = vmatprep.subr.mxu0 0.0
        %872 = vmatpush1.msra.mxu0 0.0
        %873 = vmatprep.mubr.f32.mxu0 0.0
        %v874 = vand.u32 %v456, 4294901760
        %875 = vmatmul.mubr.f32.gmra.mrb[0].mxu0 %v874
        %v876 = vpop.f32.mrb[0].mxu0
        %v877 = vadd.f32 %v576, %v876
        %v878 = vpop.f32.mrb[0].mxu0
        %879 = vmatprep.mubr.f32.mxu0 0.0
        %v880 = vand.u32 %v457, 4294901760
        %881 = vmatmul.mubr.f32.gmra.mrb[0].mxu0 %v880
        %v882 = vpop.f32.mrb[0].mxu0
        %v883 = vadd.f32 %v586, %v882
        %v884 = vpop.f32.mrb[0].mxu0
        %885 = vmatprep.mubr.f32.mxu0 0.0
        %v886 = vand.u32 %v458, 4294901760
        %887 = vmatmul.mubr.f32.gmra.mrb[0].mxu0 %v886
        %v888 = vpop.f32.mrb[0].mxu0
        %v889 = vadd.f32 %v596, %v888
        %v890 = vpop.f32.mrb[0].mxu0
        %891 = vmatprep.mubr.f32.mxu0 0.0
        %v892 = vand.u32 %v459, 4294901760
        %893 = vmatmul.mubr.f32.gmra.mrb[0].mxu0 %v892
        %v894 = vpop.f32.mrb[0].mxu0
        %v895 = vadd.f32 %v606, %v894
        %v896 = vpop.f32.mrb[0].mxu0
        %897 = vmatprep.mubr.f32.mxu0 0.0
        %v898 = vand.u32 %v460, 4294901760
        %899 = vmatmul.mubr.f32.gmra.mrb[0].mxu0 %v898
        %v900 = vpop.f32.mrb[0].mxu0
        %v901 = vadd.f32 %v616, %v900
        %v902 = vpop.f32.mrb[0].mxu0
        %903 = vmatprep.mubr.f32.mxu0 0.0
        %v904 = vand.u32 %v461, 4294901760
        %905 = vmatmul.mubr.f32.gmra.mrb[0].mxu0 %v904
        %v906 = vpop.f32.mrb[0].mxu0
        %v907 = vadd.f32 %v626, %v906
        %v908 = vpop.f32.mrb[0].mxu0
        %909 = vmatprep.mubr.f32.mxu0 0.0
        %v910 = vand.u32 %v462, 4294901760
        %911 = vmatmul.mubr.f32.gmra.mrb[0].mxu0 %v910
        %v912 = vpop.f32.mrb[0].mxu0
        %v913 = vadd.f32 %v636, %v912
        %v914 = vpop.f32.mrb[0].mxu0
        %915 = vmatprep.mubr.f32.mxu0 0.0
        %v916 = vand.u32 %v463, 4294901760
        %917 = vmatmul.mubr.f32.gmra.mrb[0].mxu0 %v916
        %v918 = vpop.f32.mrb[0].mxu0
        %v919 = vadd.f32 %v646, %v918
        %v920 = vpop.f32.mrb[0].mxu0
        %921 = vmatprep.mubr.f32.mxu0 0.0
        %v922 = vand.u32 %v464, 4294901760
        %923 = vmatmul.mubr.f32.gmra.mrb[0].mxu0 %v922
        %v924 = vpop.f32.mrb[0].mxu0
        %v925 = vadd.f32 %v656, %v924
        %v926 = vpop.f32.mrb[0].mxu0
        %927 = vmatprep.mubr.f32.mxu0 0.0
        %v928 = vand.u32 %v465, 4294901760
        %929 = vmatmul.mubr.f32.gmra.mrb[0].mxu0 %v928
        %v930 = vpop.f32.mrb[0].mxu0
        %v931 = vadd.f32 %v666, %v930
        %v932 = vpop.f32.mrb[0].mxu0
        %933 = vmatprep.mubr.f32.mxu0 0.0
        %v934 = vand.u32 %v466, 4294901760
        %935 = vmatmul.mubr.f32.gmra.mrb[0].mxu0 %v934
        %v936 = vpop.f32.mrb[0].mxu0
        %v937 = vadd.f32 %v676, %v936
        %v938 = vpop.f32.mrb[0].mxu0
        %939 = vmatprep.mubr.f32.mxu0 0.0
        %v940 = vand.u32 %v467, 4294901760
        %941 = vmatmul.mubr.f32.gmra.mrb[0].mxu0 %v940
        %v942 = vpop.f32.mrb[0].mxu0
        %v943 = vadd.f32 %v686, %v942
        %v944 = vpop.f32.mrb[0].mxu0
        %945 = vmatprep.mubr.f32.mxu0 0.0
        %v946 = vand.u32 %v468, 4294901760
        %947 = vmatmul.mubr.f32.gmra.mrb[0].mxu0 %v946
        %v948 = vpop.f32.mrb[0].mxu0
        %v949 = vadd.f32 %v696, %v948
        %v950 = vpop.f32.mrb[0].mxu0
        %951 = vmatprep.mubr.f32.mxu0 0.0
        %v952 = vand.u32 %v469, 4294901760
        %953 = vmatmul.mubr.f32.gmra.mrb[0].mxu0 %v952
        %v954 = vpop.f32.mrb[0].mxu0
        %v955 = vadd.f32 %v706, %v954
        %v956 = vpop.f32.mrb[0].mxu0
        %957 = vmatprep.mubr.f32.mxu0 0.0
        %v958 = vand.u32 %v470, 4294901760
        %959 = vmatmul.mubr.f32.gmra.mrb[0].mxu0 %v958
        %v960 = vpop.f32.mrb[0].mxu0
        %v961 = vadd.f32 %v716, %v960
        %v962 = vpop.f32.mrb[0].mxu0
        %963 = vmatprep.mubr.f32.mxu0 0.0
        %v964 = vand.u32 %v471, 4294901760
        %965 = vmatmul.mubr.f32.gmra.mrb[0].mxu0 %v964
        %v966 = vpop.f32.mrb[0].mxu0
        %v967 = vadd.f32 %v726, %v966
        %v968 = vpop.f32.mrb[0].mxu0
        %969 = vdwg.mxu0
        %970 = vmatprep.subr.mxu0 0.0
        %v971 = vand.u32 %v472, 4294901760
        %v972 = vsub.f32 %v472, %v971
        %973 = vmatpush1.msra.mxu0 %v972
        %974 = vmatprep.subr.mxu0 0.0
        %v975 = vand.u32 %v473, 4294901760
        %v976 = vsub.f32 %v473, %v975
        %977 = vmatpush1.msra.mxu0 %v976
        %978 = vmatprep.subr.mxu0 0.0
        %v979 = vand.u32 %v474, 4294901760
        %v980 = vsub.f32 %v474, %v979
        %981 = vmatpush1.msra.mxu0 %v980
        %982 = vmatprep.subr.mxu0 0.0
        %v983 = vand.u32 %v475, 4294901760
        %v984 = vsub.f32 %v475, %v983
        %985 = vmatpush1.msra.mxu0 %v984
        %986 = vmatprep.subr.mxu0 0.0
        %v987 = vand.u32 %v476, 4294901760
        %v988 = vsub.f32 %v476, %v987
        %989 = vmatpush1.msra.mxu0 %v988
        %990 = vmatprep.subr.mxu0 0.0
        %v991 = vand.u32 %v477, 4294901760
        %v992 = vsub.f32 %v477, %v991
        %993 = vmatpush1.msra.mxu0 %v992
        %994 = vmatprep.subr.mxu0 0.0
        %v995 = vand.u32 %v478, 4294901760
        %v996 = vsub.f32 %v478, %v995
        %997 = vmatpush1.msra.mxu0 %v996
        %998 = vmatprep.subr.mxu0 0.0
        %v999 = vand.u32 %v479, 4294901760
        %v1000 = vsub.f32 %v479, %v999
        %1001 = vmatpush1.msra.mxu0 %v1000
        %1002 = vmatprep.subr.mxu0 0.0
        %v1003 = vand.u32 %v480, 4294901760
        %v1004 = vsub.f32 %v480, %v1003
        %1005 = vmatpush1.msra.mxu0 %v1004
        %1006 = vmatprep.subr.mxu0 0.0
        %v1007 = vand.u32 %v481, 4294901760
        %v1008 = vsub.f32 %v481, %v1007
        %1009 = vmatpush1.msra.mxu0 %v1008
        %1010 = vmatprep.subr.mxu0 0.0
        %v1011 = vand.u32 %v482, 4294901760
        %v1012 = vsub.f32 %v482, %v1011
        %1013 = vmatpush1.msra.mxu0 %v1012
        %1014 = vmatprep.subr.mxu0 0.0
        %v1015 = vand.u32 %v483, 4294901760
        %v1016 = vsub.f32 %v483, %v1015
        %1017 = vmatpush1.msra.mxu0 %v1016
        %1018 = vmatprep.subr.mxu0 0.0
        %v1019 = vand.u32 %v484, 4294901760
        %v1020 = vsub.f32 %v484, %v1019
        %1021 = vmatpush1.msra.mxu0 %v1020
        %1022 = vmatprep.subr.mxu0 0.0
        %v1023 = vand.u32 %v485, 4294901760
        %v1024 = vsub.f32 %v485, %v1023
        %1025 = vmatpush1.msra.mxu0 %v1024
        %1026 = vmatprep.subr.mxu0 0.0
        %v1027 = vand.u32 %v486, 4294901760
        %v1028 = vsub.f32 %v486, %v1027
        %1029 = vmatpush1.msra.mxu0 %v1028
        %1030 = vmatprep.subr.mxu0 0.0
        %v1031 = vand.u32 %v487, 4294901760
        %v1032 = vsub.f32 %v487, %v1031
        %1033 = vmatpush1.msra.mxu0 %v1032
        %1034 = vmatprep.subr.mxu0 0.0
        %1035 = vmatpush1.msra.mxu0 0.0
        %1036 = vmatprep.subr.mxu0 0.0
        %1037 = vmatpush1.msra.mxu0 0.0
        %1038 = vmatprep.subr.mxu0 0.0
        %1039 = vmatpush1.msra.mxu0 0.0
        %1040 = vmatprep.subr.mxu0 0.0
        %1041 = vmatpush1.msra.mxu0 0.0
        %1042 = vmatprep.subr.mxu0 0.0
        %1043 = vmatpush1.msra.mxu0 0.0
        %1044 = vmatprep.subr.mxu0 0.0
        %1045 = vmatpush1.msra.mxu0 0.0
        %1046 = vmatprep.subr.mxu0 0.0
        %1047 = vmatpush1.msra.mxu0 0.0
        %1048 = vmatprep.subr.mxu0 0.0
        %1049 = vmatpush1.msra.mxu0 0.0
        %1050 = vmatprep.subr.mxu0 0.0
        %1051 = vmatpush1.msra.mxu0 0.0
        %1052 = vmatprep.subr.mxu0 0.0
        %1053 = vmatpush1.msra.mxu0 0.0
        %1054 = vmatprep.subr.mxu0 0.0
        %1055 = vmatpush1.msra.mxu0 0.0
        %1056 = vmatprep.subr.mxu0 0.0
        %1057 = vmatpush1.msra.mxu0 0.0
        %1058 = vmatprep.subr.mxu0 0.0
        %1059 = vmatpush1.msra.mxu0 0.0
        %1060 = vmatprep.subr.mxu0 0.0
        %1061 = vmatpush1.msra.mxu0 0.0
        %1062 = vmatprep.subr.mxu0 0.0
        %1063 = vmatpush1.msra.mxu0 0.0
        %1064 = vmatprep.subr.mxu0 0.0
        %1065 = vmatpush1.msra.mxu0 0.0
        %1066 = vmatprep.mubr.f32.mxu0 0.0
        %v1067 = vand.u32 %v456, 4294901760
        %v1068 = vsub.f32 %v456, %v1067
        %1069 = vmatmul.mubr.f32.gmra.mrb[0].mxu0 %v1068
        %v1070 = vpop.f32.mrb[0].mxu0
        %v1071 = vadd.f32 %v877, %v1070
        %v1072 = vpop.f32.mrb[0].mxu0
        %1073 = vmatprep.mubr.f32.mxu0 0.0
        %v1074 = vand.u32 %v457, 4294901760
        %v1075 = vsub.f32 %v457, %v1074
        %1076 = vmatmul.mubr.f32.gmra.mrb[0].mxu0 %v1075
        %v1077 = vpop.f32.mrb[0].mxu0
        %v1078 = vadd.f32 %v883, %v1077
        %v1079 = vpop.f32.mrb[0].mxu0
        %1080 = vmatprep.mubr.f32.mxu0 0.0
        %v1081 = vand.u32 %v458, 4294901760
        %v1082 = vsub.f32 %v458, %v1081
        %1083 = vmatmul.mubr.f32.gmra.mrb[0].mxu0 %v1082
        %v1084 = vpop.f32.mrb[0].mxu0
        %v1085 = vadd.f32 %v889, %v1084
        %v1086 = vpop.f32.mrb[0].mxu0
        %1087 = vmatprep.mubr.f32.mxu0 0.0
        %v1088 = vand.u32 %v459, 4294901760
        %v1089 = vsub.f32 %v459, %v1088
        %1090 = vmatmul.mubr.f32.gmra.mrb[0].mxu0 %v1089
        %v1091 = vpop.f32.mrb[0].mxu0
        %v1092 = vadd.f32 %v895, %v1091
        %v1093 = vpop.f32.mrb[0].mxu0
        %1094 = vmatprep.mubr.f32.mxu0 0.0
        %v1095 = vand.u32 %v460, 4294901760
        %v1096 = vsub.f32 %v460, %v1095
        %1097 = vmatmul.mubr.f32.gmra.mrb[0].mxu0 %v1096
        %v1098 = vpop.f32.mrb[0].mxu0
        %v1099 = vadd.f32 %v901, %v1098
        %v1100 = vpop.f32.mrb[0].mxu0
        %1101 = vmatprep.mubr.f32.mxu0 0.0
        %v1102 = vand.u32 %v461, 4294901760
        %v1103 = vsub.f32 %v461, %v1102
        %1104 = vmatmul.mubr.f32.gmra.mrb[0].mxu0 %v1103
        %v1105 = vpop.f32.mrb[0].mxu0
        %v1106 = vadd.f32 %v907, %v1105
        %v1107 = vpop.f32.mrb[0].mxu0
        %1108 = vmatprep.mubr.f32.mxu0 0.0
        %v1109 = vand.u32 %v462, 4294901760
        %v1110 = vsub.f32 %v462, %v1109
        %1111 = vmatmul.mubr.f32.gmra.mrb[0].mxu0 %v1110
        %v1112 = vpop.f32.mrb[0].mxu0
        %v1113 = vadd.f32 %v913, %v1112
        %v1114 = vpop.f32.mrb[0].mxu0
        %1115 = vmatprep.mubr.f32.mxu0 0.0
        %v1116 = vand.u32 %v463, 4294901760
        %v1117 = vsub.f32 %v463, %v1116
        %1118 = vmatmul.mubr.f32.gmra.mrb[0].mxu0 %v1117
        %v1119 = vpop.f32.mrb[0].mxu0
        %v1120 = vadd.f32 %v919, %v1119
        %v1121 = vpop.f32.mrb[0].mxu0
        %1122 = vmatprep.mubr.f32.mxu0 0.0
        %v1123 = vand.u32 %v464, 4294901760
        %v1124 = vsub.f32 %v464, %v1123
        %1125 = vmatmul.mubr.f32.gmra.mrb[0].mxu0 %v1124
        %v1126 = vpop.f32.mrb[0].mxu0
        %v1127 = vadd.f32 %v925, %v1126
        %v1128 = vpop.f32.mrb[0].mxu0
        %1129 = vmatprep.mubr.f32.mxu0 0.0
        %v1130 = vand.u32 %v465, 4294901760
        %v1131 = vsub.f32 %v465, %v1130
        %1132 = vmatmul.mubr.f32.gmra.mrb[0].mxu0 %v1131
        %v1133 = vpop.f32.mrb[0].mxu0
        %v1134 = vadd.f32 %v931, %v1133
        %v1135 = vpop.f32.mrb[0].mxu0
        %1136 = vmatprep.mubr.f32.mxu0 0.0
        %v1137 = vand.u32 %v466, 4294901760
        %v1138 = vsub.f32 %v466, %v1137
        %1139 = vmatmul.mubr.f32.gmra.mrb[0].mxu0 %v1138
        %v1140 = vpop.f32.mrb[0].mxu0
        %v1141 = vadd.f32 %v937, %v1140
        %v1142 = vpop.f32.mrb[0].mxu0
        %1143 = vmatprep.mubr.f32.mxu0 0.0
        %v1144 = vand.u32 %v467, 4294901760
        %v1145 = vsub.f32 %v467, %v1144
        %1146 = vmatmul.mubr.f32.gmra.mrb[0].mxu0 %v1145
        %v1147 = vpop.f32.mrb[0].mxu0
        %v1148 = vadd.f32 %v943, %v1147
        %v1149 = vpop.f32.mrb[0].mxu0
        %1150 = vmatprep.mubr.f32.mxu0 0.0
        %v1151 = vand.u32 %v468, 4294901760
        %v1152 = vsub.f32 %v468, %v1151
        %1153 = vmatmul.mubr.f32.gmra.mrb[0].mxu0 %v1152
        %v1154 = vpop.f32.mrb[0].mxu0
        %v1155 = vadd.f32 %v949, %v1154
        %v1156 = vpop.f32.mrb[0].mxu0
        %1157 = vmatprep.mubr.f32.mxu0 0.0
        %v1158 = vand.u32 %v469, 4294901760
        %v1159 = vsub.f32 %v469, %v1158
        %1160 = vmatmul.mubr.f32.gmra.mrb[0].mxu0 %v1159
        %v1161 = vpop.f32.mrb[0].mxu0
        %v1162 = vadd.f32 %v955, %v1161
        %v1163 = vpop.f32.mrb[0].mxu0
        %1164 = vmatprep.mubr.f32.mxu0 0.0
        %v1165 = vand.u32 %v470, 4294901760
        %v1166 = vsub.f32 %v470, %v1165
        %1167 = vmatmul.mubr.f32.gmra.mrb[0].mxu0 %v1166
        %v1168 = vpop.f32.mrb[0].mxu0
        %v1169 = vadd.f32 %v961, %v1168
        %v1170 = vpop.f32.mrb[0].mxu0
        %1171 = vmatprep.mubr.f32.mxu0 0.0
        %v1172 = vand.u32 %v471, 4294901760
        %v1173 = vsub.f32 %v471, %v1172
        %1174 = vmatmul.mubr.f32.gmra.mrb[0].mxu0 %v1173
        %v1175 = vpop.f32.mrb[0].mxu0
        %v1176 = vadd.f32 %v967, %v1175
        %v1177 = vpop.f32.mrb[0].mxu0
        %1178 = vdwg.mxu0
        %1179 = vmatprep.subr.mxu0 0.0
        %v1180 = vand.u32 %v472, 4294901760
        %1181 = vmatpush1.msra.mxu0 %v1180
        %1182 = vmatprep.subr.mxu0 0.0
        %v1183 = vand.u32 %v473, 4294901760
        %1184 = vmatpush1.msra.mxu0 %v1183
        %1185 = vmatprep.subr.mxu0 0.0
        %v1186 = vand.u32 %v474, 4294901760
        %1187 = vmatpush1.msra.mxu0 %v1186
        %1188 = vmatprep.subr.mxu0 0.0
        %v1189 = vand.u32 %v475, 4294901760
        %1190 = vmatpush1.msra.mxu0 %v1189
        %1191 = vmatprep.subr.mxu0 0.0
        %v1192 = vand.u32 %v476, 4294901760
        %1193 = vmatpush1.msra.mxu0 %v1192
        %1194 = vmatprep.subr.mxu0 0.0
        %v1195 = vand.u32 %v477, 4294901760
        %1196 = vmatpush1.msra.mxu0 %v1195
        %1197 = vmatprep.subr.mxu0 0.0
        %v1198 = vand.u32 %v478, 4294901760
        %1199 = vmatpush1.msra.mxu0 %v1198
        %1200 = vmatprep.subr.mxu0 0.0
        %v1201 = vand.u32 %v479, 4294901760
        %1202 = vmatpush1.msra.mxu0 %v1201
        %1203 = vmatprep.subr.mxu0 0.0
        %v1204 = vand.u32 %v480, 4294901760
        %1205 = vmatpush1.msra.mxu0 %v1204
        %1206 = vmatprep.subr.mxu0 0.0
        %v1207 = vand.u32 %v481, 4294901760
        %1208 = vmatpush1.msra.mxu0 %v1207
        %1209 = vmatprep.subr.mxu0 0.0
        %v1210 = vand.u32 %v482, 4294901760
        %1211 = vmatpush1.msra.mxu0 %v1210
        %1212 = vmatprep.subr.mxu0 0.0
        %v1213 = vand.u32 %v483, 4294901760
        %1214 = vmatpush1.msra.mxu0 %v1213
        %1215 = vmatprep.subr.mxu0 0.0
        %v1216 = vand.u32 %v484, 4294901760
        %1217 = vmatpush1.msra.mxu0 %v1216
        %1218 = vmatprep.subr.mxu0 0.0
        %v1219 = vand.u32 %v485, 4294901760
        %1220 = vmatpush1.msra.mxu0 %v1219
        %1221 = vmatprep.subr.mxu0 0.0
        %v1222 = vand.u32 %v486, 4294901760
        %1223 = vmatpush1.msra.mxu0 %v1222
        %1224 = vmatprep.subr.mxu0 0.0
        %v1225 = vand.u32 %v487, 4294901760
        %1226 = vmatpush1.msra.mxu0 %v1225
        %1227 = vmatprep.subr.mxu0 0.0
        %1228 = vmatpush1.msra.mxu0 0.0
        %1229 = vmatprep.subr.mxu0 0.0
        %1230 = vmatpush1.msra.mxu0 0.0
        %1231 = vmatprep.subr.mxu0 0.0
        %1232 = vmatpush1.msra.mxu0 0.0
        %1233 = vmatprep.subr.mxu0 0.0
        %1234 = vmatpush1.msra.mxu0 0.0
        %1235 = vmatprep.subr.mxu0 0.0
        %1236 = vmatpush1.msra.mxu0 0.0
        %1237 = vmatprep.subr.mxu0 0.0
        %1238 = vmatpush1.msra.mxu0 0.0
        %1239 = vmatprep.subr.mxu0 0.0
        %1240 = vmatpush1.msra.mxu0 0.0
        %1241 = vmatprep.subr.mxu0 0.0
        %1242 = vmatpush1.msra.mxu0 0.0
        %1243 = vmatprep.subr.mxu0 0.0
        %1244 = vmatpush1.msra.mxu0 0.0
        %1245 = vmatprep.subr.mxu0 0.0
        %1246 = vmatpush1.msra.mxu0 0.0
        %1247 = vmatprep.subr.mxu0 0.0
        %1248 = vmatpush1.msra.mxu0 0.0
        %1249 = vmatprep.subr.mxu0 0.0
        %1250 = vmatpush1.msra.mxu0 0.0
        %1251 = vmatprep.subr.mxu0 0.0
        %1252 = vmatpush1.msra.mxu0 0.0
        %1253 = vmatprep.subr.mxu0 0.0
        %1254 = vmatpush1.msra.mxu0 0.0
        %1255 = vmatprep.subr.mxu0 0.0
        %1256 = vmatpush1.msra.mxu0 0.0
        %1257 = vmatprep.subr.mxu0 0.0
        %1258 = vmatpush1.msra.mxu0 0.0
        %1259 = vmatprep.mubr.f32.mxu0 0.0
        %v1260 = vand.u32 %v456, 4294901760
        %v1261 = vsub.f32 %v456, %v1260
        %v1262 = vand.u32 %v1261, 4294901760
        %1263 = vmatmul.mubr.f32.gmra.mrb[0].mxu0 %v1262
        %v1264 = vpop.f32.mrb[0].mxu0
        %v1265 = vadd.f32 %v1071, %v1264
        %v1266 = vpop.f32.mrb[0].mxu0
        %1267 = vmatprep.mubr.f32.mxu0 0.0
        %v1268 = vand.u32 %v457, 4294901760
        %v1269 = vsub.f32 %v457, %v1268
        %v1270 = vand.u32 %v1269, 4294901760
        %1271 = vmatmul.mubr.f32.gmra.mrb[0].mxu0 %v1270
        %v1272 = vpop.f32.mrb[0].mxu0
        %v1273 = vadd.f32 %v1078, %v1272
        %v1274 = vpop.f32.mrb[0].mxu0
        %1275 = vmatprep.mubr.f32.mxu0 0.0
        %v1276 = vand.u32 %v458, 4294901760
        %v1277 = vsub.f32 %v458, %v1276
        %v1278 = vand.u32 %v1277, 4294901760
        %1279 = vmatmul.mubr.f32.gmra.mrb[0].mxu0 %v1278
        %v1280 = vpop.f32.mrb[0].mxu0
        %v1281 = vadd.f32 %v1085, %v1280
        %v1282 = vpop.f32.mrb[0].mxu0
        %1283 = vmatprep.mubr.f32.mxu0 0.0
        %v1284 = vand.u32 %v459, 4294901760
        %v1285 = vsub.f32 %v459, %v1284
        %v1286 = vand.u32 %v1285, 4294901760
        %1287 = vmatmul.mubr.f32.gmra.mrb[0].mxu0 %v1286
        %v1288 = vpop.f32.mrb[0].mxu0
        %v1289 = vadd.f32 %v1092, %v1288
        %v1290 = vpop.f32.mrb[0].mxu0
        %1291 = vmatprep.mubr.f32.mxu0 0.0
        %v1292 = vand.u32 %v460, 4294901760
        %v1293 = vsub.f32 %v460, %v1292
        %v1294 = vand.u32 %v1293, 4294901760
        %1295 = vmatmul.mubr.f32.gmra.mrb[0].mxu0 %v1294
        %v1296 = vpop.f32.mrb[0].mxu0
        %v1297 = vadd.f32 %v1099, %v1296
        %v1298 = vpop.f32.mrb[0].mxu0
        %1299 = vmatprep.mubr.f32.mxu0 0.0
        %v1300 = vand.u32 %v461, 4294901760
        %v1301 = vsub.f32 %v461, %v1300
        %v1302 = vand.u32 %v1301, 4294901760
        %1303 = vmatmul.mubr.f32.gmra.mrb[0].mxu0 %v1302
        %v1304 = vpop.f32.mrb[0].mxu0
        %v1305 = vadd.f32 %v1106, %v1304
        %v1306 = vpop.f32.mrb[0].mxu0
        %1307 = vmatprep.mubr.f32.mxu0 0.0
        %v1308 = vand.u32 %v462, 4294901760
        %v1309 = vsub.f32 %v462, %v1308
        %v1310 = vand.u32 %v1309, 4294901760
        %1311 = vmatmul.mubr.f32.gmra.mrb[0].mxu0 %v1310
        %v1312 = vpop.f32.mrb[0].mxu0
        %v1313 = vadd.f32 %v1113, %v1312
        %v1314 = vpop.f32.mrb[0].mxu0
        %1315 = vmatprep.mubr.f32.mxu0 0.0
        %v1316 = vand.u32 %v463, 4294901760
        %v1317 = vsub.f32 %v463, %v1316
        %v1318 = vand.u32 %v1317, 4294901760
        %1319 = vmatmul.mubr.f32.gmra.mrb[0].mxu0 %v1318
        %v1320 = vpop.f32.mrb[0].mxu0
        %v1321 = vadd.f32 %v1120, %v1320
        %v1322 = vpop.f32.mrb[0].mxu0
        %1323 = vmatprep.mubr.f32.mxu0 0.0
        %v1324 = vand.u32 %v464, 4294901760
        %v1325 = vsub.f32 %v464, %v1324
        %v1326 = vand.u32 %v1325, 4294901760
        %1327 = vmatmul.mubr.f32.gmra.mrb[0].mxu0 %v1326
        %v1328 = vpop.f32.mrb[0].mxu0
        %v1329 = vadd.f32 %v1127, %v1328
        %v1330 = vpop.f32.mrb[0].mxu0
        %1331 = vmatprep.mubr.f32.mxu0 0.0
        %v1332 = vand.u32 %v465, 4294901760
        %v1333 = vsub.f32 %v465, %v1332
        %v1334 = vand.u32 %v1333, 4294901760
        %1335 = vmatmul.mubr.f32.gmra.mrb[0].mxu0 %v1334
        %v1336 = vpop.f32.mrb[0].mxu0
        %v1337 = vadd.f32 %v1134, %v1336
        %v1338 = vpop.f32.mrb[0].mxu0
        %1339 = vmatprep.mubr.f32.mxu0 0.0
        %v1340 = vand.u32 %v466, 4294901760
        %v1341 = vsub.f32 %v466, %v1340
        %v1342 = vand.u32 %v1341, 4294901760
        %1343 = vmatmul.mubr.f32.gmra.mrb[0].mxu0 %v1342
        %v1344 = vpop.f32.mrb[0].mxu0
        %v1345 = vadd.f32 %v1141, %v1344
        %v1346 = vpop.f32.mrb[0].mxu0
        %1347 = vmatprep.mubr.f32.mxu0 0.0
        %v1348 = vand.u32 %v467, 4294901760
        %v1349 = vsub.f32 %v467, %v1348
        %v1350 = vand.u32 %v1349, 4294901760
        %1351 = vmatmul.mubr.f32.gmra.mrb[0].mxu0 %v1350
        %v1352 = vpop.f32.mrb[0].mxu0
        %v1353 = vadd.f32 %v1148, %v1352
        %v1354 = vpop.f32.mrb[0].mxu0
        %1355 = vmatprep.mubr.f32.mxu0 0.0
        %v1356 = vand.u32 %v468, 4294901760
        %v1357 = vsub.f32 %v468, %v1356
        %v1358 = vand.u32 %v1357, 4294901760
        %1359 = vmatmul.mubr.f32.gmra.mrb[0].mxu0 %v1358
        %v1360 = vpop.f32.mrb[0].mxu0
        %v1361 = vadd.f32 %v1155, %v1360
        %v1362 = vpop.f32.mrb[0].mxu0
        %1363 = vmatprep.mubr.f32.mxu0 0.0
        %v1364 = vand.u32 %v469, 4294901760
        %v1365 = vsub.f32 %v469, %v1364
        %v1366 = vand.u32 %v1365, 4294901760
        %1367 = vmatmul.mubr.f32.gmra.mrb[0].mxu0 %v1366
        %v1368 = vpop.f32.mrb[0].mxu0
        %v1369 = vadd.f32 %v1162, %v1368
        %v1370 = vpop.f32.mrb[0].mxu0
        %1371 = vmatprep.mubr.f32.mxu0 0.0
        %v1372 = vand.u32 %v470, 4294901760
        %v1373 = vsub.f32 %v470, %v1372
        %v1374 = vand.u32 %v1373, 4294901760
        %1375 = vmatmul.mubr.f32.gmra.mrb[0].mxu0 %v1374
        %v1376 = vpop.f32.mrb[0].mxu0
        %v1377 = vadd.f32 %v1169, %v1376
        %v1378 = vpop.f32.mrb[0].mxu0
        %1379 = vmatprep.mubr.f32.mxu0 0.0
        %v1380 = vand.u32 %v471, 4294901760
        %v1381 = vsub.f32 %v471, %v1380
        %v1382 = vand.u32 %v1381, 4294901760
        %1383 = vmatmul.mubr.f32.gmra.mrb[0].mxu0 %v1382
        %v1384 = vpop.f32.mrb[0].mxu0
        %v1385 = vadd.f32 %v1176, %v1384
        %v1386 = vpop.f32.mrb[0].mxu0
        %1387 = vdwg.mxu0
        %1388 = vmatprep.subr.mxu0 0.0
        %v1389 = vand.u32 %v472, 4294901760
        %v1390 = vsub.f32 %v472, %v1389
        %v1391 = vand.u32 %v1390, 4294901760
        %1392 = vmatpush1.msra.mxu0 %v1391
        %1393 = vmatprep.subr.mxu0 0.0
        %v1394 = vand.u32 %v473, 4294901760
        %v1395 = vsub.f32 %v473, %v1394
        %v1396 = vand.u32 %v1395, 4294901760
        %1397 = vmatpush1.msra.mxu0 %v1396
        %1398 = vmatprep.subr.mxu0 0.0
        %v1399 = vand.u32 %v474, 4294901760
        %v1400 = vsub.f32 %v474, %v1399
        %v1401 = vand.u32 %v1400, 4294901760
        %1402 = vmatpush1.msra.mxu0 %v1401
        %1403 = vmatprep.subr.mxu0 0.0
        %v1404 = vand.u32 %v475, 4294901760
        %v1405 = vsub.f32 %v475, %v1404
        %v1406 = vand.u32 %v1405, 4294901760
        %1407 = vmatpush1.msra.mxu0 %v1406
        %1408 = vmatprep.subr.mxu0 0.0
        %v1409 = vand.u32 %v476, 4294901760
        %v1410 = vsub.f32 %v476, %v1409
        %v1411 = vand.u32 %v1410, 4294901760
        %1412 = vmatpush1.msra.mxu0 %v1411
        %1413 = vmatprep.subr.mxu0 0.0
        %v1414 = vand.u32 %v477, 4294901760
        %v1415 = vsub.f32 %v477, %v1414
        %v1416 = vand.u32 %v1415, 4294901760
        %1417 = vmatpush1.msra.mxu0 %v1416
        %1418 = vmatprep.subr.mxu0 0.0
        %v1419 = vand.u32 %v478, 4294901760
        %v1420 = vsub.f32 %v478, %v1419
        %v1421 = vand.u32 %v1420, 4294901760
        %1422 = vmatpush1.msra.mxu0 %v1421
        %1423 = vmatprep.subr.mxu0 0.0
        %v1424 = vand.u32 %v479, 4294901760
        %v1425 = vsub.f32 %v479, %v1424
        %v1426 = vand.u32 %v1425, 4294901760
        %1427 = vmatpush1.msra.mxu0 %v1426
        %1428 = vmatprep.subr.mxu0 0.0
        %v1429 = vand.u32 %v480, 4294901760
        %v1430 = vsub.f32 %v480, %v1429
        %v1431 = vand.u32 %v1430, 4294901760
        %1432 = vmatpush1.msra.mxu0 %v1431
        %1433 = vmatprep.subr.mxu0 0.0
        %v1434 = vand.u32 %v481, 4294901760
        %v1435 = vsub.f32 %v481, %v1434
        %v1436 = vand.u32 %v1435, 4294901760
        %1437 = vmatpush1.msra.mxu0 %v1436
        %1438 = vmatprep.subr.mxu0 0.0
        %v1439 = vand.u32 %v482, 4294901760
        %v1440 = vsub.f32 %v482, %v1439
        %v1441 = vand.u32 %v1440, 4294901760
        %1442 = vmatpush1.msra.mxu0 %v1441
        %1443 = vmatprep.subr.mxu0 0.0
        %v1444 = vand.u32 %v483, 4294901760
        %v1445 = vsub.f32 %v483, %v1444
        %v1446 = vand.u32 %v1445, 4294901760
        %1447 = vmatpush1.msra.mxu0 %v1446
        %1448 = vmatprep.subr.mxu0 0.0
        %v1449 = vand.u32 %v484, 4294901760
        %v1450 = vsub.f32 %v484, %v1449
        %v1451 = vand.u32 %v1450, 4294901760
        %1452 = vmatpush1.msra.mxu0 %v1451
        %1453 = vmatprep.subr.mxu0 0.0
        %v1454 = vand.u32 %v485, 4294901760
        %v1455 = vsub.f32 %v485, %v1454
        %v1456 = vand.u32 %v1455, 4294901760
        %1457 = vmatpush1.msra.mxu0 %v1456
        %1458 = vmatprep.subr.mxu0 0.0
        %v1459 = vand.u32 %v486, 4294901760
        %v1460 = vsub.f32 %v486, %v1459
        %v1461 = vand.u32 %v1460, 4294901760
        %1462 = vmatpush1.msra.mxu0 %v1461
        %1463 = vmatprep.subr.mxu0 0.0
        %v1464 = vand.u32 %v487, 4294901760
        %v1465 = vsub.f32 %v487, %v1464
        %v1466 = vand.u32 %v1465, 4294901760
        %1467 = vmatpush1.msra.mxu0 %v1466
        %1468 = vmatprep.subr.mxu0 0.0
        %1469 = vmatpush1.msra.mxu0 0.0
        %1470 = vmatprep.subr.mxu0 0.0
        %1471 = vmatpush1.msra.mxu0 0.0
        %1472 = vmatprep.subr.mxu0 0.0
        %1473 = vmatpush1.msra.mxu0 0.0
        %1474 = vmatprep.subr.mxu0 0.0
        %1475 = vmatpush1.msra.mxu0 0.0
        %1476 = vmatprep.subr.mxu0 0.0
        %1477 = vmatpush1.msra.mxu0 0.0
        %1478 = vmatprep.subr.mxu0 0.0
        %1479 = vmatpush1.msra.mxu0 0.0
        %1480 = vmatprep.subr.mxu0 0.0
        %1481 = vmatpush1.msra.mxu0 0.0
        %1482 = vmatprep.subr.mxu0 0.0
        %1483 = vmatpush1.msra.mxu0 0.0
        %1484 = vmatprep.subr.mxu0 0.0
        %1485 = vmatpush1.msra.mxu0 0.0
        %1486 = vmatprep.subr.mxu0 0.0
        %1487 = vmatpush1.msra.mxu0 0.0
        %1488 = vmatprep.subr.mxu0 0.0
        %1489 = vmatpush1.msra.mxu0 0.0
        %1490 = vmatprep.subr.mxu0 0.0
        %1491 = vmatpush1.msra.mxu0 0.0
        %1492 = vmatprep.subr.mxu0 0.0
        %1493 = vmatpush1.msra.mxu0 0.0
        %1494 = vmatprep.subr.mxu0 0.0
        %1495 = vmatpush1.msra.mxu0 0.0
        %1496 = vmatprep.subr.mxu0 0.0
        %1497 = vmatpush1.msra.mxu0 0.0
        %1498 = vmatprep.subr.mxu0 0.0
        %1499 = vmatpush1.msra.mxu0 0.0
        %1500 = vmatprep.mubr.f32.mxu0 0.0
        %v1501 = vand.u32 %v456, 4294901760
        %1502 = vmatmul.mubr.f32.gmra.mrb[0].mxu0 %v1501
        %v1503 = vpop.f32.mrb[0].mxu0
        %v1504 = vadd.f32 %v1265, %v1503
        %v1505 = vpop.f32.mrb[0].mxu0
        %1506 = vmatprep.mubr.f32.mxu0 0.0
        %v1507 = vand.u32 %v457, 4294901760
        %1508 = vmatmul.mubr.f32.gmra.mrb[0].mxu0 %v1507
        %v1509 = vpop.f32.mrb[0].mxu0
        %v1510 = vadd.f32 %v1273, %v1509
        %v1511 = vpop.f32.mrb[0].mxu0
        %1512 = vmatprep.mubr.f32.mxu0 0.0
        %v1513 = vand.u32 %v458, 4294901760
        %1514 = vmatmul.mubr.f32.gmra.mrb[0].mxu0 %v1513
        %v1515 = vpop.f32.mrb[0].mxu0
        %v1516 = vadd.f32 %v1281, %v1515
        %v1517 = vpop.f32.mrb[0].mxu0
        %1518 = vmatprep.mubr.f32.mxu0 0.0
        %v1519 = vand.u32 %v459, 4294901760
        %1520 = vmatmul.mubr.f32.gmra.mrb[0].mxu0 %v1519
        %v1521 = vpop.f32.mrb[0].mxu0
        %v1522 = vadd.f32 %v1289, %v1521
        %v1523 = vpop.f32.mrb[0].mxu0
        %1524 = vmatprep.mubr.f32.mxu0 0.0
        %v1525 = vand.u32 %v460, 4294901760
        %1526 = vmatmul.mubr.f32.gmra.mrb[0].mxu0 %v1525
        %v1527 = vpop.f32.mrb[0].mxu0
        %v1528 = vadd.f32 %v1297, %v1527
        %v1529 = vpop.f32.mrb[0].mxu0
        %1530 = vmatprep.mubr.f32.mxu0 0.0
        %v1531 = vand.u32 %v461, 4294901760
        %1532 = vmatmul.mubr.f32.gmra.mrb[0].mxu0 %v1531
        %v1533 = vpop.f32.mrb[0].mxu0
        %v1534 = vadd.f32 %v1305, %v1533
        %v1535 = vpop.f32.mrb[0].mxu0
        %1536 = vmatprep.mubr.f32.mxu0 0.0
        %v1537 = vand.u32 %v462, 4294901760
        %1538 = vmatmul.mubr.f32.gmra.mrb[0].mxu0 %v1537
        %v1539 = vpop.f32.mrb[0].mxu0
        %v1540 = vadd.f32 %v1313, %v1539
        %v1541 = vpop.f32.mrb[0].mxu0
        %1542 = vmatprep.mubr.f32.mxu0 0.0
        %v1543 = vand.u32 %v463, 4294901760
        %1544 = vmatmul.mubr.f32.gmra.mrb[0].mxu0 %v1543
        %v1545 = vpop.f32.mrb[0].mxu0
        %v1546 = vadd.f32 %v1321, %v1545
        %v1547 = vpop.f32.mrb[0].mxu0
        %1548 = vmatprep.mubr.f32.mxu0 0.0
        %v1549 = vand.u32 %v464, 4294901760
        %1550 = vmatmul.mubr.f32.gmra.mrb[0].mxu0 %v1549
        %v1551 = vpop.f32.mrb[0].mxu0
        %v1552 = vadd.f32 %v1329, %v1551
        %v1553 = vpop.f32.mrb[0].mxu0
        %1554 = vmatprep.mubr.f32.mxu0 0.0
        %v1555 = vand.u32 %v465, 4294901760
        %1556 = vmatmul.mubr.f32.gmra.mrb[0].mxu0 %v1555
        %v1557 = vpop.f32.mrb[0].mxu0
        %v1558 = vadd.f32 %v1337, %v1557
        %v1559 = vpop.f32.mrb[0].mxu0
        %1560 = vmatprep.mubr.f32.mxu0 0.0
        %v1561 = vand.u32 %v466, 4294901760
        %1562 = vmatmul.mubr.f32.gmra.mrb[0].mxu0 %v1561
        %v1563 = vpop.f32.mrb[0].mxu0
        %v1564 = vadd.f32 %v1345, %v1563
        %v1565 = vpop.f32.mrb[0].mxu0
        %1566 = vmatprep.mubr.f32.mxu0 0.0
        %v1567 = vand.u32 %v467, 4294901760
        %1568 = vmatmul.mubr.f32.gmra.mrb[0].mxu0 %v1567
        %v1569 = vpop.f32.mrb[0].mxu0
        %v1570 = vadd.f32 %v1353, %v1569
        %v1571 = vpop.f32.mrb[0].mxu0
        %1572 = vmatprep.mubr.f32.mxu0 0.0
        %v1573 = vand.u32 %v468, 4294901760
        %1574 = vmatmul.mubr.f32.gmra.mrb[0].mxu0 %v1573
        %v1575 = vpop.f32.mrb[0].mxu0
        %v1576 = vadd.f32 %v1361, %v1575
        %v1577 = vpop.f32.mrb[0].mxu0
        %1578 = vmatprep.mubr.f32.mxu0 0.0
        %v1579 = vand.u32 %v469, 4294901760
        %1580 = vmatmul.mubr.f32.gmra.mrb[0].mxu0 %v1579
        %v1581 = vpop.f32.mrb[0].mxu0
        %v1582 = vadd.f32 %v1369, %v1581
        %v1583 = vpop.f32.mrb[0].mxu0
        %1584 = vmatprep.mubr.f32.mxu0 0.0
        %v1585 = vand.u32 %v470, 4294901760
        %1586 = vmatmul.mubr.f32.gmra.mrb[0].mxu0 %v1585
        %v1587 = vpop.f32.mrb[0].mxu0
        %v1588 = vadd.f32 %v1377, %v1587
        %v1589 = vpop.f32.mrb[0].mxu0
        %1590 = vmatprep.mubr.f32.mxu0 0.0
        %v1591 = vand.u32 %v471, 4294901760
        %1592 = vmatmul.mubr.f32.gmra.mrb[0].mxu0 %v1591
        %v1593 = vpop.f32.mrb[0].mxu0
        %v1594 = vadd.f32 %v1385, %v1593
        %v1595 = vpop.f32.mrb[0].mxu0
        %1596 = vdwg.mxu0
        %1597 = vmatprep.subr.mxu0 0.0
        %v1598 = vand.u32 %v472, 4294901760
        %1599 = vmatpush1.msra.mxu0 %v1598
        %1600 = vmatprep.subr.mxu0 0.0
        %v1601 = vand.u32 %v473, 4294901760
        %1602 = vmatpush1.msra.mxu0 %v1601
        %1603 = vmatprep.subr.mxu0 0.0
        %v1604 = vand.u32 %v474, 4294901760
        %1605 = vmatpush1.msra.mxu0 %v1604
        %1606 = vmatprep.subr.mxu0 0.0
        %v1607 = vand.u32 %v475, 4294901760
        %1608 = vmatpush1.msra.mxu0 %v1607
        %1609 = vmatprep.subr.mxu0 0.0
        %v1610 = vand.u32 %v476, 4294901760
        %1611 = vmatpush1.msra.mxu0 %v1610
        %1612 = vmatprep.subr.mxu0 0.0
        %v1613 = vand.u32 %v477, 4294901760
        %1614 = vmatpush1.msra.mxu0 %v1613
        %1615 = vmatprep.subr.mxu0 0.0
        %v1616 = vand.u32 %v478, 4294901760
        %1617 = vmatpush1.msra.mxu0 %v1616
        %1618 = vmatprep.subr.mxu0 0.0
        %v1619 = vand.u32 %v479, 4294901760
        %1620 = vmatpush1.msra.mxu0 %v1619
        %1621 = vmatprep.subr.mxu0 0.0
        %v1622 = vand.u32 %v480, 4294901760
        %1623 = vmatpush1.msra.mxu0 %v1622
        %1624 = vmatprep.subr.mxu0 0.0
        %v1625 = vand.u32 %v481, 4294901760
        %1626 = vmatpush1.msra.mxu0 %v1625
        %1627 = vmatprep.subr.mxu0 0.0
        %v1628 = vand.u32 %v482, 4294901760
        %1629 = vmatpush1.msra.mxu0 %v1628
        %1630 = vmatprep.subr.mxu0 0.0
        %v1631 = vand.u32 %v483, 4294901760
        %1632 = vmatpush1.msra.mxu0 %v1631
        %1633 = vmatprep.subr.mxu0 0.0
        %v1634 = vand.u32 %v484, 4294901760
        %1635 = vmatpush1.msra.mxu0 %v1634
        %1636 = vmatprep.subr.mxu0 0.0
        %v1637 = vand.u32 %v485, 4294901760
        %1638 = vmatpush1.msra.mxu0 %v1637
        %1639 = vmatprep.subr.mxu0 0.0
        %v1640 = vand.u32 %v486, 4294901760
        %1641 = vmatpush1.msra.mxu0 %v1640
        %1642 = vmatprep.subr.mxu0 0.0
        %v1643 = vand.u32 %v487, 4294901760
        %1644 = vmatpush1.msra.mxu0 %v1643
        %1645 = vmatprep.subr.mxu0 0.0
        %1646 = vmatpush1.msra.mxu0 0.0
        %1647 = vmatprep.subr.mxu0 0.0
        %1648 = vmatpush1.msra.mxu0 0.0
        %1649 = vmatprep.subr.mxu0 0.0
        %1650 = vmatpush1.msra.mxu0 0.0
        %1651 = vmatprep.subr.mxu0 0.0
        %1652 = vmatpush1.msra.mxu0 0.0
        %1653 = vmatprep.subr.mxu0 0.0
        %1654 = vmatpush1.msra.mxu0 0.0
        %1655 = vmatprep.subr.mxu0 0.0
        %1656 = vmatpush1.msra.mxu0 0.0
        %1657 = vmatprep.subr.mxu0 0.0
        %1658 = vmatpush1.msra.mxu0 0.0
        %1659 = vmatprep.subr.mxu0 0.0
        %1660 = vmatpush1.msra.mxu0 0.0
        %1661 = vmatprep.subr.mxu0 0.0
        %1662 = vmatpush1.msra.mxu0 0.0
        %1663 = vmatprep.subr.mxu0 0.0
        %1664 = vmatpush1.msra.mxu0 0.0
        %1665 = vmatprep.subr.mxu0 0.0
        %1666 = vmatpush1.msra.mxu0 0.0
        %1667 = vmatprep.subr.mxu0 0.0
        %1668 = vmatpush1.msra.mxu0 0.0
        %1669 = vmatprep.subr.mxu0 0.0
        %1670 = vmatpush1.msra.mxu0 0.0
        %1671 = vmatprep.subr.mxu0 0.0
        %1672 = vmatpush1.msra.mxu0 0.0
        %1673 = vmatprep.subr.mxu0 0.0
        %1674 = vmatpush1.msra.mxu0 0.0
        %1675 = vmatprep.subr.mxu0 0.0
        %1676 = vmatpush1.msra.mxu0 0.0
        %1677 = vmatprep.mubr.f32.mxu0 0.0
        %v1678 = vand.u32 %v456, 4294901760
        %1679 = vmatmul.mubr.f32.gmra.mrb[0].mxu0 %v1678
        %v1680 = vpop.f32.mrb[0].mxu0
        %v1681 = vadd.f32 %v1504, %v1680
        %v1682 = vpop.f32.mrb[0].mxu0
        %1683 = vmatprep.mubr.f32.mxu0 0.0
        %v1684 = vand.u32 %v457, 4294901760
        %1685 = vmatmul.mubr.f32.gmra.mrb[0].mxu0 %v1684
        %v1686 = vpop.f32.mrb[0].mxu0
        %v1687 = vadd.f32 %v1510, %v1686
        %v1688 = vpop.f32.mrb[0].mxu0
        %1689 = vmatprep.mubr.f32.mxu0 0.0
        %v1690 = vand.u32 %v458, 4294901760
        %1691 = vmatmul.mubr.f32.gmra.mrb[0].mxu0 %v1690
        %v1692 = vpop.f32.mrb[0].mxu0
        %v1693 = vadd.f32 %v1516, %v1692
        %v1694 = vpop.f32.mrb[0].mxu0
        %1695 = vmatprep.mubr.f32.mxu0 0.0
        %v1696 = vand.u32 %v459, 4294901760
        %1697 = vmatmul.mubr.f32.gmra.mrb[0].mxu0 %v1696
        %v1698 = vpop.f32.mrb[0].mxu0
        %v1699 = vadd.f32 %v1522, %v1698
        %v1700 = vpop.f32.mrb[0].mxu0
        %1701 = vmatprep.mubr.f32.mxu0 0.0
        %v1702 = vand.u32 %v460, 4294901760
        %1703 = vmatmul.mubr.f32.gmra.mrb[0].mxu0 %v1702
        %v1704 = vpop.f32.mrb[0].mxu0
        %v1705 = vadd.f32 %v1528, %v1704
        %v1706 = vpop.f32.mrb[0].mxu0
        %1707 = vmatprep.mubr.f32.mxu0 0.0
        %v1708 = vand.u32 %v461, 4294901760
        %1709 = vmatmul.mubr.f32.gmra.mrb[0].mxu0 %v1708
        %v1710 = vpop.f32.mrb[0].mxu0
        %v1711 = vadd.f32 %v1534, %v1710
        %v1712 = vpop.f32.mrb[0].mxu0
        %1713 = vmatprep.mubr.f32.mxu0 0.0
        %v1714 = vand.u32 %v462, 4294901760
        %1715 = vmatmul.mubr.f32.gmra.mrb[0].mxu0 %v1714
        %v1716 = vpop.f32.mrb[0].mxu0
        %v1717 = vadd.f32 %v1540, %v1716
        %v1718 = vpop.f32.mrb[0].mxu0
        %1719 = vmatprep.mubr.f32.mxu0 0.0
        %v1720 = vand.u32 %v463, 4294901760
        %1721 = vmatmul.mubr.f32.gmra.mrb[0].mxu0 %v1720
        %v1722 = vpop.f32.mrb[0].mxu0
        %v1723 = vadd.f32 %v1546, %v1722
        %v1724 = vpop.f32.mrb[0].mxu0
        %1725 = vmatprep.mubr.f32.mxu0 0.0
        %v1726 = vand.u32 %v464, 4294901760
        %1727 = vmatmul.mubr.f32.gmra.mrb[0].mxu0 %v1726
        %v1728 = vpop.f32.mrb[0].mxu0
        %v1729 = vadd.f32 %v1552, %v1728
        %v1730 = vpop.f32.mrb[0].mxu0
        %1731 = vmatprep.mubr.f32.mxu0 0.0
        %v1732 = vand.u32 %v465, 4294901760
        %1733 = vmatmul.mubr.f32.gmra.mrb[0].mxu0 %v1732
        %v1734 = vpop.f32.mrb[0].mxu0
        %v1735 = vadd.f32 %v1558, %v1734
        %v1736 = vpop.f32.mrb[0].mxu0
        %1737 = vmatprep.mubr.f32.mxu0 0.0
        %v1738 = vand.u32 %v466, 4294901760
        %1739 = vmatmul.mubr.f32.gmra.mrb[0].mxu0 %v1738
        %v1740 = vpop.f32.mrb[0].mxu0
        %v1741 = vadd.f32 %v1564, %v1740
        %v1742 = vpop.f32.mrb[0].mxu0
        %1743 = vmatprep.mubr.f32.mxu0 0.0
        %v1744 = vand.u32 %v467, 4294901760
        %1745 = vmatmul.mubr.f32.gmra.mrb[0].mxu0 %v1744
        %v1746 = vpop.f32.mrb[0].mxu0
        %v1747 = vadd.f32 %v1570, %v1746
        %v1748 = vpop.f32.mrb[0].mxu0
        %1749 = vmatprep.mubr.f32.mxu0 0.0
        %v1750 = vand.u32 %v468, 4294901760
        %1751 = vmatmul.mubr.f32.gmra.mrb[0].mxu0 %v1750
        %v1752 = vpop.f32.mrb[0].mxu0
        %v1753 = vadd.f32 %v1576, %v1752
        %v1754 = vpop.f32.mrb[0].mxu0
        %1755 = vmatprep.mubr.f32.mxu0 0.0
        %v1756 = vand.u32 %v469, 4294901760
        %1757 = vmatmul.mubr.f32.gmra.mrb[0].mxu0 %v1756
        %v1758 = vpop.f32.mrb[0].mxu0
        %v1759 = vadd.f32 %v1582, %v1758
        %v1760 = vpop.f32.mrb[0].mxu0
        %1761 = vmatprep.mubr.f32.mxu0 0.0
        %v1762 = vand.u32 %v470, 4294901760
        %1763 = vmatmul.mubr.f32.gmra.mrb[0].mxu0 %v1762
        %v1764 = vpop.f32.mrb[0].mxu0
        %v1765 = vadd.f32 %v1588, %v1764
        %v1766 = vpop.f32.mrb[0].mxu0
        %1767 = vmatprep.mubr.f32.mxu0 0.0
        %v1768 = vand.u32 %v471, 4294901760
        %1769 = vmatmul.mubr.f32.gmra.mrb[0].mxu0 %v1768
        %v1770 = vpop.f32.mrb[0].mxu0
        %v1771 = vadd.f32 %v1594, %v1770
        %v1772 = vpop.f32.mrb[0].mxu0
        %1773 = vdwg.mxu0
        %v1774 = vadd.f32 %v440, %v1681
        %v1775 = vadd.f32 %v441, %v1687
        %v1776 = vadd.f32 %v442, %v1693
        %v1777 = vadd.f32 %v443, %v1699
        %v1778 = vadd.f32 %v444, %v1705
        %v1779 = vadd.f32 %v445, %v1711
        %v1780 = vadd.f32 %v446, %v1717
        %v1781 = vadd.f32 %v447, %v1723
        %v1782 = vadd.f32 %v448, %v1729
        %v1783 = vadd.f32 %v449, %v1735
        %v1784 = vadd.f32 %v450, %v1741
        %v1785 = vadd.f32 %v451, %v1747
        %v1786 = vadd.f32 %v452, %v1753
        %v1787 = vadd.f32 %v453, %v1759
        %v1788 = vadd.f32 %v454, %v1765
        %v1789 = vadd.f32 %v455, %v1771
        %1790 = vst [vmem:[#allocation2] sm:$0xff] %v1774
        %1791 = vst [vmem:[#allocation2 + $0x8] sm:$0xff] %v1775
        %1792 = vst [vmem:[#allocation2 + $0x10] sm:$0xff] %v1776
        %1793 = vst [vmem:[#allocation2 + $0x18] sm:$0xff] %v1777
        %1794 = vst [vmem:[#allocation2 + $0x20] sm:$0xff] %v1778
        %1795 = vst [vmem:[#allocation2 + $0x28] sm:$0xff] %v1779
        %1796 = vst [vmem:[#allocation2 + $0x30] sm:$0xff] %v1780
        %1797 = vst [vmem:[#allocation2 + $0x38] sm:$0xff] %v1781
        %1798 = vst [vmem:[#allocation2 + $0x40] sm:$0xff] %v1782
        %1799 = vst [vmem:[#allocation2 + $0x48] sm:$0xff] %v1783
        %1800 = vst [vmem:[#allocation2 + $0x50] sm:$0xff] %v1784
        %1801 = vst [vmem:[#allocation2 + $0x58] sm:$0xff] %v1785
        %1802 = vst [vmem:[#allocation2 + $0x60] sm:$0xff] %v1786
        %1803 = vst [vmem:[#allocation2 + $0x68] sm:$0xff] %v1787
        %1804 = vst [vmem:[#allocation2 + $0x70] sm:$0xff] %v1788
        %1805 = vst [vmem:[#allocation2 + $0x78] sm:$0xff] %v1789
        %p1806 = scmp.eq.s32.totalorder %s23, 1
        // Predicated region
        $region83: #{_lambda_.3} parent=73 // pred_check
          %p1807 = pneg %p1806
        $region84: #{_lambda_.3} parent=73 // pred_check_branch
          %1809 = sbr.rel (%p1807) target = $region86
        $region85: #{_lambda_.3} parent=73 // pred_region
          %v1810 = vld [vmem:[#allocation2] sm:$0xff]
          %v1811 = vld [vmem:[#allocation2 + $0x8] sm:$0xff]
          %v1812 = vld [vmem:[#allocation2 + $0x10] sm:$0xff]
          %v1813 = vld [vmem:[#allocation2 + $0x18] sm:$0xff]
          %v1814 = vld [vmem:[#allocation2 + $0x20] sm:$0xff]
          %v1815 = vld [vmem:[#allocation2 + $0x28] sm:$0xff]
          %v1816 = vld [vmem:[#allocation2 + $0x30] sm:$0xff]
          %v1817 = vld [vmem:[#allocation2 + $0x38] sm:$0xff]
          %v1818 = vld [vmem:[#allocation2 + $0x40] sm:$0xff]
          %v1819 = vld [vmem:[#allocation2 + $0x48] sm:$0xff]
          %v1820 = vld [vmem:[#allocation2 + $0x50] sm:$0xff]
          %v1821 = vld [vmem:[#allocation2 + $0x58] sm:$0xff]
          %v1822 = vld [vmem:[#allocation2 + $0x60] sm:$0xff]
          %v1823 = vld [vmem:[#allocation2 + $0x68] sm:$0xff]
          %v1824 = vld [vmem:[#allocation2 + $0x70] sm:$0xff]
          %v1825 = vld [vmem:[#allocation2 + $0x78] sm:$0xff]
          %v1826 = vld [vmem:[%s3] sm:$0xff]
          %v1827 = vld [vmem:[%s3 + $0x8] sm:$0xff]
          %v1828 = vld [vmem:[%s3 + $0x10] sm:$0xff]
          %v1829 = vld [vmem:[%s3 + $0x18] sm:$0xff]
          %v1830 = vld [vmem:[%s3 + $0x20] sm:$0xff]
          %v1831 = vld [vmem:[%s3 + $0x28] sm:$0xff]
          %v1832 = vld [vmem:[%s3 + $0x30] sm:$0xff]
          %v1833 = vld [vmem:[%s3 + $0x38] sm:$0xff]
          %v1834 = vld [vmem:[%s3 + $0x40] sm:$0xff]
          %v1835 = vld [vmem:[%s3 + $0x48] sm:$0xff]
          %v1836 = vld [vmem:[%s3 + $0x50] sm:$0xff]
          %v1837 = vld [vmem:[%s3 + $0x58] sm:$0xff]
          %v1838 = vld [vmem:[%s3 + $0x60] sm:$0xff]
          %v1839 = vld [vmem:[%s3 + $0x68] sm:$0xff]
          %v1840 = vld [vmem:[%s3 + $0x70] sm:$0xff]
          %v1841 = vld [vmem:[%s3 + $0x78] sm:$0xff]
          %v1842 = vld [vmem:[%s4] sm:$0x1]
          %v1844 = vlaneseq
          %v1845 = vshrl.u32 %v1844, 7
          %v1846 = vsub.s32 0, %v1845
          %v1847 = vrot.slane %v1842, %v1846
          %1849 = vmatprep.subr.mxu0 0.0
          %v1850 = vand.u32 %v1826, 4294901760
          %1851 = vmatpush1.msra.mxu0 %v1850
          %1852 = vmatprep.subr.mxu0 0.0
          %v1853 = vand.u32 %v1827, 4294901760
          %1854 = vmatpush1.msra.mxu0 %v1853
          %1855 = vmatprep.subr.mxu0 0.0
          %v1856 = vand.u32 %v1828, 4294901760
          %1857 = vmatpush1.msra.mxu0 %v1856
          %1858 = vmatprep.subr.mxu0 0.0
          %v1859 = vand.u32 %v1829, 4294901760
          %1860 = vmatpush1.msra.mxu0 %v1859
          %1861 = vmatprep.subr.mxu0 0.0
          %v1862 = vand.u32 %v1830, 4294901760
          %1863 = vmatpush1.msra.mxu0 %v1862
          %1864 = vmatprep.subr.mxu0 0.0
          %v1865 = vand.u32 %v1831, 4294901760
          %1866 = vmatpush1.msra.mxu0 %v1865
          %1867 = vmatprep.subr.mxu0 0.0
          %v1868 = vand.u32 %v1832, 4294901760
          %1869 = vmatpush1.msra.mxu0 %v1868
          %1870 = vmatprep.subr.mxu0 0.0
          %v1871 = vand.u32 %v1833, 4294901760
          %1872 = vmatpush1.msra.mxu0 %v1871
          %1873 = vmatprep.subr.mxu0 0.0
          %v1874 = vand.u32 %v1834, 4294901760
          %1875 = vmatpush1.msra.mxu0 %v1874
          %1876 = vmatprep.subr.mxu0 0.0
          %v1877 = vand.u32 %v1835, 4294901760
          %1878 = vmatpush1.msra.mxu0 %v1877
          %1879 = vmatprep.subr.mxu0 0.0
          %v1880 = vand.u32 %v1836, 4294901760
          %1881 = vmatpush1.msra.mxu0 %v1880
          %1882 = vmatprep.subr.mxu0 0.0
          %v1883 = vand.u32 %v1837, 4294901760
          %1884 = vmatpush1.msra.mxu0 %v1883
          %1885 = vmatprep.subr.mxu0 0.0
          %v1886 = vand.u32 %v1838, 4294901760
          %1887 = vmatpush1.msra.mxu0 %v1886
          %1888 = vmatprep.subr.mxu0 0.0
          %v1889 = vand.u32 %v1839, 4294901760
          %1890 = vmatpush1.msra.mxu0 %v1889
          %1891 = vmatprep.subr.mxu0 0.0
          %v1892 = vand.u32 %v1840, 4294901760
          %1893 = vmatpush1.msra.mxu0 %v1892
          %1894 = vmatprep.subr.mxu0 0.0
          %v1895 = vand.u32 %v1841, 4294901760
          %1896 = vmatpush1.msra.mxu0 %v1895
          %1897 = vmatprep.subr.mxu0 0.0
          %1898 = vmatpush1.msra.mxu0 0.0
          %1899 = vmatprep.subr.mxu0 0.0
          %1900 = vmatpush1.msra.mxu0 0.0
          %1901 = vmatprep.subr.mxu0 0.0
          %1902 = vmatpush1.msra.mxu0 0.0
          %1903 = vmatprep.subr.mxu0 0.0
          %1904 = vmatpush1.msra.mxu0 0.0
          %1905 = vmatprep.subr.mxu0 0.0
          %1906 = vmatpush1.msra.mxu0 0.0
          %1907 = vmatprep.subr.mxu0 0.0
          %1908 = vmatpush1.msra.mxu0 0.0
          %1909 = vmatprep.subr.mxu0 0.0
          %1910 = vmatpush1.msra.mxu0 0.0
          %1911 = vmatprep.subr.mxu0 0.0
          %1912 = vmatpush1.msra.mxu0 0.0
          %1913 = vmatprep.subr.mxu0 0.0
          %1914 = vmatpush1.msra.mxu0 0.0
          %1915 = vmatprep.subr.mxu0 0.0
          %1916 = vmatpush1.msra.mxu0 0.0
          %1917 = vmatprep.subr.mxu0 0.0
          %1918 = vmatpush1.msra.mxu0 0.0
          %1919 = vmatprep.subr.mxu0 0.0
          %1920 = vmatpush1.msra.mxu0 0.0
          %1921 = vmatprep.subr.mxu0 0.0
          %1922 = vmatpush1.msra.mxu0 0.0
          %1923 = vmatprep.subr.mxu0 0.0
          %1924 = vmatpush1.msra.mxu0 0.0
          %1925 = vmatprep.subr.mxu0 0.0
          %1926 = vmatpush1.msra.mxu0 0.0
          %1927 = vmatprep.subr.mxu0 0.0
          %1928 = vmatpush1.msra.mxu0 0.0
          %1929 = vmatprep.mubr.f32.mxu0 0.0
          %v1930 = vand.u32 %v1810, 4294901760
          %v1931 = vsub.f32 %v1810, %v1930
          %v1932 = vand.u32 %v1931, 4294901760
          %v1933 = vsub.f32 %v1931, %v1932
          %v1934 = vand.u32 %v1933, 4294901760
          %1935 = vmatmul.mubr.f32.gmra.mrb[0].mxu0 %v1934
          %v1936 = vpop.f32.mrb[0].mxu0
          %v1937 = vadd.f32 %v1847, %v1936
          %v1938 = vpop.f32.mrb[0].mxu0
          %1939 = vmatprep.mubr.f32.mxu0 0.0
          %v1940 = vand.u32 %v1811, 4294901760
          %v1941 = vsub.f32 %v1811, %v1940
          %v1942 = vand.u32 %v1941, 4294901760
          %v1943 = vsub.f32 %v1941, %v1942
          %v1944 = vand.u32 %v1943, 4294901760
          %1945 = vmatmul.mubr.f32.gmra.mrb[0].mxu0 %v1944
          %v1946 = vpop.f32.mrb[0].mxu0
          %v1947 = vadd.f32 %v1847, %v1946
          %v1948 = vpop.f32.mrb[0].mxu0
          %1949 = vmatprep.mubr.f32.mxu0 0.0
          %v1950 = vand.u32 %v1812, 4294901760
          %v1951 = vsub.f32 %v1812, %v1950
          %v1952 = vand.u32 %v1951, 4294901760
          %v1953 = vsub.f32 %v1951, %v1952
          %v1954 = vand.u32 %v1953, 4294901760
          %1955 = vmatmul.mubr.f32.gmra.mrb[0].mxu0 %v1954
          %v1956 = vpop.f32.mrb[0].mxu0
          %v1957 = vadd.f32 %v1847, %v1956
          %v1958 = vpop.f32.mrb[0].mxu0
          %1959 = vmatprep.mubr.f32.mxu0 0.0
          %v1960 = vand.u32 %v1813, 4294901760
          %v1961 = vsub.f32 %v1813, %v1960
          %v1962 = vand.u32 %v1961, 4294901760
          %v1963 = vsub.f32 %v1961, %v1962
          %v1964 = vand.u32 %v1963, 4294901760
          %1965 = vmatmul.mubr.f32.gmra.mrb[0].mxu0 %v1964
          %v1966 = vpop.f32.mrb[0].mxu0
          %v1967 = vadd.f32 %v1847, %v1966
          %v1968 = vpop.f32.mrb[0].mxu0
          %1969 = vmatprep.mubr.f32.mxu0 0.0
          %v1970 = vand.u32 %v1814, 4294901760
          %v1971 = vsub.f32 %v1814, %v1970
          %v1972 = vand.u32 %v1971, 4294901760
          %v1973 = vsub.f32 %v1971, %v1972
          %v1974 = vand.u32 %v1973, 4294901760
          %1975 = vmatmul.mubr.f32.gmra.mrb[0].mxu0 %v1974
          %v1976 = vpop.f32.mrb[0].mxu0
          %v1977 = vadd.f32 %v1847, %v1976
          %v1978 = vpop.f32.mrb[0].mxu0
          %1979 = vmatprep.mubr.f32.mxu0 0.0
          %v1980 = vand.u32 %v1815, 4294901760
          %v1981 = vsub.f32 %v1815, %v1980
          %v1982 = vand.u32 %v1981, 4294901760
          %v1983 = vsub.f32 %v1981, %v1982
          %v1984 = vand.u32 %v1983, 4294901760
          %1985 = vmatmul.mubr.f32.gmra.mrb[0].mxu0 %v1984
          %v1986 = vpop.f32.mrb[0].mxu0
          %v1987 = vadd.f32 %v1847, %v1986
          %v1988 = vpop.f32.mrb[0].mxu0
          %1989 = vmatprep.mubr.f32.mxu0 0.0
          %v1990 = vand.u32 %v1816, 4294901760
          %v1991 = vsub.f32 %v1816, %v1990
          %v1992 = vand.u32 %v1991, 4294901760
          %v1993 = vsub.f32 %v1991, %v1992
          %v1994 = vand.u32 %v1993, 4294901760
          %1995 = vmatmul.mubr.f32.gmra.mrb[0].mxu0 %v1994
          %v1996 = vpop.f32.mrb[0].mxu0
          %v1997 = vadd.f32 %v1847, %v1996
          %v1998 = vpop.f32.mrb[0].mxu0
          %1999 = vmatprep.mubr.f32.mxu0 0.0
          %v2000 = vand.u32 %v1817, 4294901760
          %v2001 = vsub.f32 %v1817, %v2000
          %v2002 = vand.u32 %v2001, 4294901760
          %v2003 = vsub.f32 %v2001, %v2002
          %v2004 = vand.u32 %v2003, 4294901760
          %2005 = vmatmul.mubr.f32.gmra.mrb[0].mxu0 %v2004
          %v2006 = vpop.f32.mrb[0].mxu0
          %v2007 = vadd.f32 %v1847, %v2006
          %v2008 = vpop.f32.mrb[0].mxu0
          %2009 = vmatprep.mubr.f32.mxu0 0.0
          %v2010 = vand.u32 %v1818, 4294901760
          %v2011 = vsub.f32 %v1818, %v2010
          %v2012 = vand.u32 %v2011, 4294901760
          %v2013 = vsub.f32 %v2011, %v2012
          %v2014 = vand.u32 %v2013, 4294901760
          %2015 = vmatmul.mubr.f32.gmra.mrb[0].mxu0 %v2014
          %v2016 = vpop.f32.mrb[0].mxu0
          %v2017 = vadd.f32 %v1847, %v2016
          %v2018 = vpop.f32.mrb[0].mxu0
          %2019 = vmatprep.mubr.f32.mxu0 0.0
          %v2020 = vand.u32 %v1819, 4294901760
          %v2021 = vsub.f32 %v1819, %v2020
          %v2022 = vand.u32 %v2021, 4294901760
          %v2023 = vsub.f32 %v2021, %v2022
          %v2024 = vand.u32 %v2023, 4294901760
          %2025 = vmatmul.mubr.f32.gmra.mrb[0].mxu0 %v2024
          %v2026 = vpop.f32.mrb[0].mxu0
          %v2027 = vadd.f32 %v1847, %v2026
          %v2028 = vpop.f32.mrb[0].mxu0
          %2029 = vmatprep.mubr.f32.mxu0 0.0
          %v2030 = vand.u32 %v1820, 4294901760
          %v2031 = vsub.f32 %v1820, %v2030
          %v2032 = vand.u32 %v2031, 4294901760
          %v2033 = vsub.f32 %v2031, %v2032
          %v2034 = vand.u32 %v2033, 4294901760
          %2035 = vmatmul.mubr.f32.gmra.mrb[0].mxu0 %v2034
          %v2036 = vpop.f32.mrb[0].mxu0
          %v2037 = vadd.f32 %v1847, %v2036
          %v2038 = vpop.f32.mrb[0].mxu0
          %2039 = vmatprep.mubr.f32.mxu0 0.0
          %v2040 = vand.u32 %v1821, 4294901760
          %v2041 = vsub.f32 %v1821, %v2040
          %v2042 = vand.u32 %v2041, 4294901760
          %v2043 = vsub.f32 %v2041, %v2042
          %v2044 = vand.u32 %v2043, 4294901760
          %2045 = vmatmul.mubr.f32.gmra.mrb[0].mxu0 %v2044
          %v2046 = vpop.f32.mrb[0].mxu0
          %v2047 = vadd.f32 %v1847, %v2046
          %v2048 = vpop.f32.mrb[0].mxu0
          %2049 = vmatprep.mubr.f32.mxu0 0.0
          %v2050 = vand.u32 %v1822, 4294901760
          %v2051 = vsub.f32 %v1822, %v2050
          %v2052 = vand.u32 %v2051, 4294901760
          %v2053 = vsub.f32 %v2051, %v2052
          %v2054 = vand.u32 %v2053, 4294901760
          %2055 = vmatmul.mubr.f32.gmra.mrb[0].mxu0 %v2054
          %v2056 = vpop.f32.mrb[0].mxu0
          %v2057 = vadd.f32 %v1847, %v2056
          %v2058 = vpop.f32.mrb[0].mxu0
          %2059 = vmatprep.mubr.f32.mxu0 0.0
          %v2060 = vand.u32 %v1823, 4294901760
          %v2061 = vsub.f32 %v1823, %v2060
          %v2062 = vand.u32 %v2061, 4294901760
          %v2063 = vsub.f32 %v2061, %v2062
          %v2064 = vand.u32 %v2063, 4294901760
          %2065 = vmatmul.mubr.f32.gmra.mrb[0].mxu0 %v2064
          %v2066 = vpop.f32.mrb[0].mxu0
          %v2067 = vadd.f32 %v1847, %v2066
          %v2068 = vpop.f32.mrb[0].mxu0
          %2069 = vmatprep.mubr.f32.mxu0 0.0
          %v2070 = vand.u32 %v1824, 4294901760
          %v2071 = vsub.f32 %v1824, %v2070
          %v2072 = vand.u32 %v2071, 4294901760
          %v2073 = vsub.f32 %v2071, %v2072
          %v2074 = vand.u32 %v2073, 4294901760
          %2075 = vmatmul.mubr.f32.gmra.mrb[0].mxu0 %v2074
          %v2076 = vpop.f32.mrb[0].mxu0
          %v2077 = vadd.f32 %v1847, %v2076
          %v2078 = vpop.f32.mrb[0].mxu0
          %2079 = vmatprep.mubr.f32.mxu0 0.0
          %v2080 = vand.u32 %v1825, 4294901760
          %v2081 = vsub.f32 %v1825, %v2080
          %v2082 = vand.u32 %v2081, 4294901760
          %v2083 = vsub.f32 %v2081, %v2082
          %v2084 = vand.u32 %v2083, 4294901760
          %2085 = vmatmul.mubr.f32.gmra.mrb[0].mxu0 %v2084
          %v2086 = vpop.f32.mrb[0].mxu0
          %v2087 = vadd.f32 %v1847, %v2086
          %v2088 = vpop.f32.mrb[0].mxu0
          %2089 = vdwg.mxu0
          %2090 = vmatprep.subr.mxu0 0.0
          %v2091 = vand.u32 %v1826, 4294901760
          %v2092 = vsub.f32 %v1826, %v2091
          %v2093 = vand.u32 %v2092, 4294901760
          %v2094 = vsub.f32 %v2092, %v2093
          %v2095 = vand.u32 %v2094, 4294901760
          %2096 = vmatpush1.msra.mxu0 %v2095
          %2097 = vmatprep.subr.mxu0 0.0
          %v2098 = vand.u32 %v1827, 4294901760
          %v2099 = vsub.f32 %v1827, %v2098
          %v2100 = vand.u32 %v2099, 4294901760
          %v2101 = vsub.f32 %v2099, %v2100
          %v2102 = vand.u32 %v2101, 4294901760
          %2103 = vmatpush1.msra.mxu0 %v2102
          %2104 = vmatprep.subr.mxu0 0.0
          %v2105 = vand.u32 %v1828, 4294901760
          %v2106 = vsub.f32 %v1828, %v2105
          %v2107 = vand.u32 %v2106, 4294901760
          %v2108 = vsub.f32 %v2106, %v2107
          %v2109 = vand.u32 %v2108, 4294901760
          %2110 = vmatpush1.msra.mxu0 %v2109
          %2111 = vmatprep.subr.mxu0 0.0
          %v2112 = vand.u32 %v1829, 4294901760
          %v2113 = vsub.f32 %v1829, %v2112
          %v2114 = vand.u32 %v2113, 4294901760
          %v2115 = vsub.f32 %v2113, %v2114
          %v2116 = vand.u32 %v2115, 4294901760
          %2117 = vmatpush1.msra.mxu0 %v2116
          %2118 = vmatprep.subr.mxu0 0.0
          %v2119 = vand.u32 %v1830, 4294901760
          %v2120 = vsub.f32 %v1830, %v2119
          %v2121 = vand.u32 %v2120, 4294901760
          %v2122 = vsub.f32 %v2120, %v2121
          %v2123 = vand.u32 %v2122, 4294901760
          %2124 = vmatpush1.msra.mxu0 %v2123
          %2125 = vmatprep.subr.mxu0 0.0
          %v2126 = vand.u32 %v1831, 4294901760
          %v2127 = vsub.f32 %v1831, %v2126
          %v2128 = vand.u32 %v2127, 4294901760
          %v2129 = vsub.f32 %v2127, %v2128
          %v2130 = vand.u32 %v2129, 4294901760
          %2131 = vmatpush1.msra.mxu0 %v2130
          %2132 = vmatprep.subr.mxu0 0.0
          %v2133 = vand.u32 %v1832, 4294901760
          %v2134 = vsub.f32 %v1832, %v2133
          %v2135 = vand.u32 %v2134, 4294901760
          %v2136 = vsub.f32 %v2134, %v2135
          %v2137 = vand.u32 %v2136, 4294901760
          %2138 = vmatpush1.msra.mxu0 %v2137
          %2139 = vmatprep.subr.mxu0 0.0
          %v2140 = vand.u32 %v1833, 4294901760
          %v2141 = vsub.f32 %v1833, %v2140
          %v2142 = vand.u32 %v2141, 4294901760
          %v2143 = vsub.f32 %v2141, %v2142
          %v2144 = vand.u32 %v2143, 4294901760
          %2145 = vmatpush1.msra.mxu0 %v2144
          %2146 = vmatprep.subr.mxu0 0.0
          %v2147 = vand.u32 %v1834, 4294901760
          %v2148 = vsub.f32 %v1834, %v2147
          %v2149 = vand.u32 %v2148, 4294901760
          %v2150 = vsub.f32 %v2148, %v2149
          %v2151 = vand.u32 %v2150, 4294901760
          %2152 = vmatpush1.msra.mxu0 %v2151
          %2153 = vmatprep.subr.mxu0 0.0
          %v2154 = vand.u32 %v1835, 4294901760
          %v2155 = vsub.f32 %v1835, %v2154
          %v2156 = vand.u32 %v2155, 4294901760
          %v2157 = vsub.f32 %v2155, %v2156
          %v2158 = vand.u32 %v2157, 4294901760
          %2159 = vmatpush1.msra.mxu0 %v2158
          %2160 = vmatprep.subr.mxu0 0.0
          %v2161 = vand.u32 %v1836, 4294901760
          %v2162 = vsub.f32 %v1836, %v2161
          %v2163 = vand.u32 %v2162, 4294901760
          %v2164 = vsub.f32 %v2162, %v2163
          %v2165 = vand.u32 %v2164, 4294901760
          %2166 = vmatpush1.msra.mxu0 %v2165
          %2167 = vmatprep.subr.mxu0 0.0
          %v2168 = vand.u32 %v1837, 4294901760
          %v2169 = vsub.f32 %v1837, %v2168
          %v2170 = vand.u32 %v2169, 4294901760
          %v2171 = vsub.f32 %v2169, %v2170
          %v2172 = vand.u32 %v2171, 4294901760
          %2173 = vmatpush1.msra.mxu0 %v2172
          %2174 = vmatprep.subr.mxu0 0.0
          %v2175 = vand.u32 %v1838, 4294901760
          %v2176 = vsub.f32 %v1838, %v2175
          %v2177 = vand.u32 %v2176, 4294901760
          %v2178 = vsub.f32 %v2176, %v2177
          %v2179 = vand.u32 %v2178, 4294901760
          %2180 = vmatpush1.msra.mxu0 %v2179
          %2181 = vmatprep.subr.mxu0 0.0
          %v2182 = vand.u32 %v1839, 4294901760
          %v2183 = vsub.f32 %v1839, %v2182
          %v2184 = vand.u32 %v2183, 4294901760
          %v2185 = vsub.f32 %v2183, %v2184
          %v2186 = vand.u32 %v2185, 4294901760
          %2187 = vmatpush1.msra.mxu0 %v2186
          %2188 = vmatprep.subr.mxu0 0.0
          %v2189 = vand.u32 %v1840, 4294901760
          %v2190 = vsub.f32 %v1840, %v2189
          %v2191 = vand.u32 %v2190, 4294901760
          %v2192 = vsub.f32 %v2190, %v2191
          %v2193 = vand.u32 %v2192, 4294901760
          %2194 = vmatpush1.msra.mxu0 %v2193
          %2195 = vmatprep.subr.mxu0 0.0
          %v2196 = vand.u32 %v1841, 4294901760
          %v2197 = vsub.f32 %v1841, %v2196
          %v2198 = vand.u32 %v2197, 4294901760
          %v2199 = vsub.f32 %v2197, %v2198
          %v2200 = vand.u32 %v2199, 4294901760
          %2201 = vmatpush1.msra.mxu0 %v2200
          %2202 = vmatprep.subr.mxu0 0.0
          %2203 = vmatpush1.msra.mxu0 0.0
          %2204 = vmatprep.subr.mxu0 0.0
          %2205 = vmatpush1.msra.mxu0 0.0
          %2206 = vmatprep.subr.mxu0 0.0
          %2207 = vmatpush1.msra.mxu0 0.0
          %2208 = vmatprep.subr.mxu0 0.0
          %2209 = vmatpush1.msra.mxu0 0.0
          %2210 = vmatprep.subr.mxu0 0.0
          %2211 = vmatpush1.msra.mxu0 0.0
          %2212 = vmatprep.subr.mxu0 0.0
          %2213 = vmatpush1.msra.mxu0 0.0
          %2214 = vmatprep.subr.mxu0 0.0
          %2215 = vmatpush1.msra.mxu0 0.0
          %2216 = vmatprep.subr.mxu0 0.0
          %2217 = vmatpush1.msra.mxu0 0.0
          %2218 = vmatprep.subr.mxu0 0.0
          %2219 = vmatpush1.msra.mxu0 0.0
          %2220 = vmatprep.subr.mxu0 0.0
          %2221 = vmatpush1.msra.mxu0 0.0
          %2222 = vmatprep.subr.mxu0 0.0
          %2223 = vmatpush1.msra.mxu0 0.0
          %2224 = vmatprep.subr.mxu0 0.0
          %2225 = vmatpush1.msra.mxu0 0.0
          %2226 = vmatprep.subr.mxu0 0.0
          %2227 = vmatpush1.msra.mxu0 0.0
          %2228 = vmatprep.subr.mxu0 0.0
          %2229 = vmatpush1.msra.mxu0 0.0
          %2230 = vmatprep.subr.mxu0 0.0
          %2231 = vmatpush1.msra.mxu0 0.0
          %2232 = vmatprep.subr.mxu0 0.0
          %2233 = vmatpush1.msra.mxu0 0.0
          %2234 = vmatprep.mubr.f32.mxu0 0.0
          %v2235 = vand.u32 %v1810, 4294901760
          %2236 = vmatmul.mubr.f32.gmra.mrb[0].mxu0 %v2235
          %v2237 = vpop.f32.mrb[0].mxu0
          %v2238 = vadd.f32 %v1937, %v2237
          %v2239 = vpop.f32.mrb[0].mxu0
          %2240 = vmatprep.mubr.f32.mxu0 0.0
          %v2241 = vand.u32 %v1811, 4294901760
          %2242 = vmatmul.mubr.f32.gmra.mrb[0].mxu0 %v2241
          %v2243 = vpop.f32.mrb[0].mxu0
          %v2244 = vadd.f32 %v1947, %v2243
          %v2245 = vpop.f32.mrb[0].mxu0
          %2246 = vmatprep.mubr.f32.mxu0 0.0
          %v2247 = vand.u32 %v1812, 4294901760
          %2248 = vmatmul.mubr.f32.gmra.mrb[0].mxu0 %v2247
          %v2249 = vpop.f32.mrb[0].mxu0
          %v2250 = vadd.f32 %v1957, %v2249
          %v2251 = vpop.f32.mrb[0].mxu0
          %2252 = vmatprep.mubr.f32.mxu0 0.0
          %v2253 = vand.u32 %v1813, 4294901760
          %2254 = vmatmul.mubr.f32.gmra.mrb[0].mxu0 %v2253
          %v2255 = vpop.f32.mrb[0].mxu0
          %v2256 = vadd.f32 %v1967, %v2255
          %v2257 = vpop.f32.mrb[0].mxu0
          %2258 = vmatprep.mubr.f32.mxu0 0.0
          %v2259 = vand.u32 %v1814, 4294901760
          %2260 = vmatmul.mubr.f32.gmra.mrb[0].mxu0 %v2259
          %v2261 = vpop.f32.mrb[0].mxu0
          %v2262 = vadd.f32 %v1977, %v2261
          %v2263 = vpop.f32.mrb[0].mxu0
          %2264 = vmatprep.mubr.f32.mxu0 0.0
          %v2265 = vand.u32 %v1815, 4294901760
          %2266 = vmatmul.mubr.f32.gmra.mrb[0].mxu0 %v2265
          %v2267 = vpop.f32.mrb[0].mxu0
          %v2268 = vadd.f32 %v1987, %v2267
          %v2269 = vpop.f32.mrb[0].mxu0
          %2270 = vmatprep.mubr.f32.mxu0 0.0
          %v2271 = vand.u32 %v1816, 4294901760
          %2272 = vmatmul.mubr.f32.gmra.mrb[0].mxu0 %v2271
          %v2273 = vpop.f32.mrb[0].mxu0
          %v2274 = vadd.f32 %v1997, %v2273
          %v2275 = vpop.f32.mrb[0].mxu0
          %2276 = vmatprep.mubr.f32.mxu0 0.0
          %v2277 = vand.u32 %v1817, 4294901760
          %2278 = vmatmul.mubr.f32.gmra.mrb[0].mxu0 %v2277
          %v2279 = vpop.f32.mrb[0].mxu0
          %v2280 = vadd.f32 %v2007, %v2279
          %v2281 = vpop.f32.mrb[0].mxu0
          %2282 = vmatprep.mubr.f32.mxu0 0.0
          %v2283 = vand.u32 %v1818, 4294901760
          %2284 = vmatmul.mubr.f32.gmra.mrb[0].mxu0 %v2283
          %v2285 = vpop.f32.mrb[0].mxu0
          %v2286 = vadd.f32 %v2017, %v2285
          %v2287 = vpop.f32.mrb[0].mxu0
          %2288 = vmatprep.mubr.f32.mxu0 0.0
          %v2289 = vand.u32 %v1819, 4294901760
          %2290 = vmatmul.mubr.f32.gmra.mrb[0].mxu0 %v2289
          %v2291 = vpop.f32.mrb[0].mxu0
          %v2292 = vadd.f32 %v2027, %v2291
          %v2293 = vpop.f32.mrb[0].mxu0
          %2294 = vmatprep.mubr.f32.mxu0 0.0
          %v2295 = vand.u32 %v1820, 4294901760
          %2296 = vmatmul.mubr.f32.gmra.mrb[0].mxu0 %v2295
          %v2297 = vpop.f32.mrb[0].mxu0
          %v2298 = vadd.f32 %v2037, %v2297
          %v2299 = vpop.f32.mrb[0].mxu0
          %2300 = vmatprep.mubr.f32.mxu0 0.0
          %v2301 = vand.u32 %v1821, 4294901760
          %2302 = vmatmul.mubr.f32.gmra.mrb[0].mxu0 %v2301
          %v2303 = vpop.f32.mrb[0].mxu0
          %v2304 = vadd.f32 %v2047, %v2303
          %v2305 = vpop.f32.mrb[0].mxu0
          %2306 = vmatprep.mubr.f32.mxu0 0.0
          %v2307 = vand.u32 %v1822, 4294901760
          %2308 = vmatmul.mubr.f32.gmra.mrb[0].mxu0 %v2307
          %v2309 = vpop.f32.mrb[0].mxu0
          %v2310 = vadd.f32 %v2057, %v2309
          %v2311 = vpop.f32.mrb[0].mxu0
          %2312 = vmatprep.mubr.f32.mxu0 0.0
          %v2313 = vand.u32 %v1823, 4294901760
          %2314 = vmatmul.mubr.f32.gmra.mrb[0].mxu0 %v2313
          %v2315 = vpop.f32.mrb[0].mxu0
          %v2316 = vadd.f32 %v2067, %v2315
          %v2317 = vpop.f32.mrb[0].mxu0
          %2318 = vmatprep.mubr.f32.mxu0 0.0
          %v2319 = vand.u32 %v1824, 4294901760
          %2320 = vmatmul.mubr.f32.gmra.mrb[0].mxu0 %v2319
          %v2321 = vpop.f32.mrb[0].mxu0
          %v2322 = vadd.f32 %v2077, %v2321
          %v2323 = vpop.f32.mrb[0].mxu0
          %2324 = vmatprep.mubr.f32.mxu0 0.0
          %v2325 = vand.u32 %v1825, 4294901760
          %2326 = vmatmul.mubr.f32.gmra.mrb[0].mxu0 %v2325
          %v2327 = vpop.f32.mrb[0].mxu0
          %v2328 = vadd.f32 %v2087, %v2327
          %v2329 = vpop.f32.mrb[0].mxu0
          %2330 = vdwg.mxu0
          %2331 = vmatprep.subr.mxu0 0.0
          %v2332 = vand.u32 %v1826, 4294901760
          %v2333 = vsub.f32 %v1826, %v2332
          %2334 = vmatpush1.msra.mxu0 %v2333
          %2335 = vmatprep.subr.mxu0 0.0
          %v2336 = vand.u32 %v1827, 4294901760
          %v2337 = vsub.f32 %v1827, %v2336
          %2338 = vmatpush1.msra.mxu0 %v2337
          %2339 = vmatprep.subr.mxu0 0.0
          %v2340 = vand.u32 %v1828, 4294901760
          %v2341 = vsub.f32 %v1828, %v2340
          %2342 = vmatpush1.msra.mxu0 %v2341
          %2343 = vmatprep.subr.mxu0 0.0
          %v2344 = vand.u32 %v1829, 4294901760
          %v2345 = vsub.f32 %v1829, %v2344
          %2346 = vmatpush1.msra.mxu0 %v2345
          %2347 = vmatprep.subr.mxu0 0.0
          %v2348 = vand.u32 %v1830, 4294901760
          %v2349 = vsub.f32 %v1830, %v2348
          %2350 = vmatpush1.msra.mxu0 %v2349
          %2351 = vmatprep.subr.mxu0 0.0
          %v2352 = vand.u32 %v1831, 4294901760
          %v2353 = vsub.f32 %v1831, %v2352
          %2354 = vmatpush1.msra.mxu0 %v2353
          %2355 = vmatprep.subr.mxu0 0.0
          %v2356 = vand.u32 %v1832, 4294901760
          %v2357 = vsub.f32 %v1832, %v2356
          %2358 = vmatpush1.msra.mxu0 %v2357
          %2359 = vmatprep.subr.mxu0 0.0
          %v2360 = vand.u32 %v1833, 4294901760
          %v2361 = vsub.f32 %v1833, %v2360
          %2362 = vmatpush1.msra.mxu0 %v2361
          %2363 = vmatprep.subr.mxu0 0.0
          %v2364 = vand.u32 %v1834, 4294901760
          %v2365 = vsub.f32 %v1834, %v2364
          %2366 = vmatpush1.msra.mxu0 %v2365
          %2367 = vmatprep.subr.mxu0 0.0
          %v2368 = vand.u32 %v1835, 4294901760
          %v2369 = vsub.f32 %v1835, %v2368
          %2370 = vmatpush1.msra.mxu0 %v2369
          %2371 = vmatprep.subr.mxu0 0.0
          %v2372 = vand.u32 %v1836, 4294901760
          %v2373 = vsub.f32 %v1836, %v2372
          %2374 = vmatpush1.msra.mxu0 %v2373
          %2375 = vmatprep.subr.mxu0 0.0
          %v2376 = vand.u32 %v1837, 4294901760
          %v2377 = vsub.f32 %v1837, %v2376
          %2378 = vmatpush1.msra.mxu0 %v2377
          %2379 = vmatprep.subr.mxu0 0.0
          %v2380 = vand.u32 %v1838, 4294901760
          %v2381 = vsub.f32 %v1838, %v2380
          %2382 = vmatpush1.msra.mxu0 %v2381
          %2383 = vmatprep.subr.mxu0 0.0
          %v2384 = vand.u32 %v1839, 4294901760
          %v2385 = vsub.f32 %v1839, %v2384
          %2386 = vmatpush1.msra.mxu0 %v2385
          %2387 = vmatprep.subr.mxu0 0.0
          %v2388 = vand.u32 %v1840, 4294901760
          %v2389 = vsub.f32 %v1840, %v2388
          %2390 = vmatpush1.msra.mxu0 %v2389
          %2391 = vmatprep.subr.mxu0 0.0
          %v2392 = vand.u32 %v1841, 4294901760
          %v2393 = vsub.f32 %v1841, %v2392
          %2394 = vmatpush1.msra.mxu0 %v2393
          %2395 = vmatprep.subr.mxu0 0.0
          %2396 = vmatpush1.msra.mxu0 0.0
          %2397 = vmatprep.subr.mxu0 0.0
          %2398 = vmatpush1.msra.mxu0 0.0
          %2399 = vmatprep.subr.mxu0 0.0
          %2400 = vmatpush1.msra.mxu0 0.0
          %2401 = vmatprep.subr.mxu0 0.0
          %2402 = vmatpush1.msra.mxu0 0.0
          %2403 = vmatprep.subr.mxu0 0.0
          %2404 = vmatpush1.msra.mxu0 0.0
          %2405 = vmatprep.subr.mxu0 0.0
          %2406 = vmatpush1.msra.mxu0 0.0
          %2407 = vmatprep.subr.mxu0 0.0
          %2408 = vmatpush1.msra.mxu0 0.0
          %2409 = vmatprep.subr.mxu0 0.0
          %2410 = vmatpush1.msra.mxu0 0.0
          %2411 = vmatprep.subr.mxu0 0.0
          %2412 = vmatpush1.msra.mxu0 0.0
          %2413 = vmatprep.subr.mxu0 0.0
          %2414 = vmatpush1.msra.mxu0 0.0
          %2415 = vmatprep.subr.mxu0 0.0
          %2416 = vmatpush1.msra.mxu0 0.0
          %2417 = vmatprep.subr.mxu0 0.0
          %2418 = vmatpush1.msra.mxu0 0.0
          %2419 = vmatprep.subr.mxu0 0.0
          %2420 = vmatpush1.msra.mxu0 0.0
          %2421 = vmatprep.subr.mxu0 0.0
          %2422 = vmatpush1.msra.mxu0 0.0
          %2423 = vmatprep.subr.mxu0 0.0
          %2424 = vmatpush1.msra.mxu0 0.0
          %2425 = vmatprep.subr.mxu0 0.0
          %2426 = vmatpush1.msra.mxu0 0.0
          %2427 = vmatprep.mubr.f32.mxu0 0.0
          %v2428 = vand.u32 %v1810, 4294901760
          %v2429 = vsub.f32 %v1810, %v2428
          %2430 = vmatmul.mubr.f32.gmra.mrb[0].mxu0 %v2429
          %v2431 = vpop.f32.mrb[0].mxu0
          %v2432 = vadd.f32 %v2238, %v2431
          %v2433 = vpop.f32.mrb[0].mxu0
          %2434 = vmatprep.mubr.f32.mxu0 0.0
          %v2435 = vand.u32 %v1811, 4294901760
          %v2436 = vsub.f32 %v1811, %v2435
          %2437 = vmatmul.mubr.f32.gmra.mrb[0].mxu0 %v2436
          %v2438 = vpop.f32.mrb[0].mxu0
          %v2439 = vadd.f32 %v2244, %v2438
          %v2440 = vpop.f32.mrb[0].mxu0
          %2441 = vmatprep.mubr.f32.mxu0 0.0
          %v2442 = vand.u32 %v1812, 4294901760
          %v2443 = vsub.f32 %v1812, %v2442
          %2444 = vmatmul.mubr.f32.gmra.mrb[0].mxu0 %v2443
          %v2445 = vpop.f32.mrb[0].mxu0
          %v2446 = vadd.f32 %v2250, %v2445
          %v2447 = vpop.f32.mrb[0].mxu0
          %2448 = vmatprep.mubr.f32.mxu0 0.0
          %v2449 = vand.u32 %v1813, 4294901760
          %v2450 = vsub.f32 %v1813, %v2449
          %2451 = vmatmul.mubr.f32.gmra.mrb[0].mxu0 %v2450
          %v2452 = vpop.f32.mrb[0].mxu0
          %v2453 = vadd.f32 %v2256, %v2452
          %v2454 = vpop.f32.mrb[0].mxu0
          %2455 = vmatprep.mubr.f32.mxu0 0.0
          %v2456 = vand.u32 %v1814, 4294901760
          %v2457 = vsub.f32 %v1814, %v2456
          %2458 = vmatmul.mubr.f32.gmra.mrb[0].mxu0 %v2457
          %v2459 = vpop.f32.mrb[0].mxu0
          %v2460 = vadd.f32 %v2262, %v2459
          %v2461 = vpop.f32.mrb[0].mxu0
          %2462 = vmatprep.mubr.f32.mxu0 0.0
          %v2463 = vand.u32 %v1815, 4294901760
          %v2464 = vsub.f32 %v1815, %v2463
          %2465 = vmatmul.mubr.f32.gmra.mrb[0].mxu0 %v2464
          %v2466 = vpop.f32.mrb[0].mxu0
          %v2467 = vadd.f32 %v2268, %v2466
          %v2468 = vpop.f32.mrb[0].mxu0
          %2469 = vmatprep.mubr.f32.mxu0 0.0
          %v2470 = vand.u32 %v1816, 4294901760
          %v2471 = vsub.f32 %v1816, %v2470
          %2472 = vmatmul.mubr.f32.gmra.mrb[0].mxu0 %v2471
          %v2473 = vpop.f32.mrb[0].mxu0
          %v2474 = vadd.f32 %v2274, %v2473
          %v2475 = vpop.f32.mrb[0].mxu0
          %2476 = vmatprep.mubr.f32.mxu0 0.0
          %v2477 = vand.u32 %v1817, 4294901760
          %v2478 = vsub.f32 %v1817, %v2477
          %2479 = vmatmul.mubr.f32.gmra.mrb[0].mxu0 %v2478
          %v2480 = vpop.f32.mrb[0].mxu0
          %v2481 = vadd.f32 %v2280, %v2480
          %v2482 = vpop.f32.mrb[0].mxu0
          %2483 = vmatprep.mubr.f32.mxu0 0.0
          %v2484 = vand.u32 %v1818, 4294901760
          %v2485 = vsub.f32 %v1818, %v2484
          %2486 = vmatmul.mubr.f32.gmra.mrb[0].mxu0 %v2485
          %v2487 = vpop.f32.mrb[0].mxu0
          %v2488 = vadd.f32 %v2286, %v2487
          %v2489 = vpop.f32.mrb[0].mxu0
          %2490 = vmatprep.mubr.f32.mxu0 0.0
          %v2491 = vand.u32 %v1819, 4294901760
          %v2492 = vsub.f32 %v1819, %v2491
          %2493 = vmatmul.mubr.f32.gmra.mrb[0].mxu0 %v2492
          %v2494 = vpop.f32.mrb[0].mxu0
          %v2495 = vadd.f32 %v2292, %v2494
          %v2496 = vpop.f32.mrb[0].mxu0
          %2497 = vmatprep.mubr.f32.mxu0 0.0
          %v2498 = vand.u32 %v1820, 4294901760
          %v2499 = vsub.f32 %v1820, %v2498
          %2500 = vmatmul.mubr.f32.gmra.mrb[0].mxu0 %v2499
          %v2501 = vpop.f32.mrb[0].mxu0
          %v2502 = vadd.f32 %v2298, %v2501
          %v2503 = vpop.f32.mrb[0].mxu0
          %2504 = vmatprep.mubr.f32.mxu0 0.0
          %v2505 = vand.u32 %v1821, 4294901760
          %v2506 = vsub.f32 %v1821, %v2505
          %2507 = vmatmul.mubr.f32.gmra.mrb[0].mxu0 %v2506
          %v2508 = vpop.f32.mrb[0].mxu0
          %v2509 = vadd.f32 %v2304, %v2508
          %v2510 = vpop.f32.mrb[0].mxu0
          %2511 = vmatprep.mubr.f32.mxu0 0.0
          %v2512 = vand.u32 %v1822, 4294901760
          %v2513 = vsub.f32 %v1822, %v2512
          %2514 = vmatmul.mubr.f32.gmra.mrb[0].mxu0 %v2513
          %v2515 = vpop.f32.mrb[0].mxu0
          %v2516 = vadd.f32 %v2310, %v2515
          %v2517 = vpop.f32.mrb[0].mxu0
          %2518 = vmatprep.mubr.f32.mxu0 0.0
          %v2519 = vand.u32 %v1823, 4294901760
          %v2520 = vsub.f32 %v1823, %v2519
          %2521 = vmatmul.mubr.f32.gmra.mrb[0].mxu0 %v2520
          %v2522 = vpop.f32.mrb[0].mxu0
          %v2523 = vadd.f32 %v2316, %v2522
          %v2524 = vpop.f32.mrb[0].mxu0
          %2525 = vmatprep.mubr.f32.mxu0 0.0
          %v2526 = vand.u32 %v1824, 4294901760
          %v2527 = vsub.f32 %v1824, %v2526
          %2528 = vmatmul.mubr.f32.gmra.mrb[0].mxu0 %v2527
          %v2529 = vpop.f32.mrb[0].mxu0
          %v2530 = vadd.f32 %v2322, %v2529
          %v2531 = vpop.f32.mrb[0].mxu0
          %2532 = vmatprep.mubr.f32.mxu0 0.0
          %v2533 = vand.u32 %v1825, 4294901760
          %v2534 = vsub.f32 %v1825, %v2533
          %2535 = vmatmul.mubr.f32.gmra.mrb[0].mxu0 %v2534
          %v2536 = vpop.f32.mrb[0].mxu0
          %v2537 = vadd.f32 %v2328, %v2536
          %v2538 = vpop.f32.mrb[0].mxu0
          %2539 = vdwg.mxu0
          %2540 = vmatprep.subr.mxu0 0.0
          %v2541 = vand.u32 %v1826, 4294901760
          %2542 = vmatpush1.msra.mxu0 %v2541
          %2543 = vmatprep.subr.mxu0 0.0
          %v2544 = vand.u32 %v1827, 4294901760
          %2545 = vmatpush1.msra.mxu0 %v2544
          %2546 = vmatprep.subr.mxu0 0.0
          %v2547 = vand.u32 %v1828, 4294901760
          %2548 = vmatpush1.msra.mxu0 %v2547
          %2549 = vmatprep.subr.mxu0 0.0
          %v2550 = vand.u32 %v1829, 4294901760
          %2551 = vmatpush1.msra.mxu0 %v2550
          %2552 = vmatprep.subr.mxu0 0.0
          %v2553 = vand.u32 %v1830, 4294901760
          %2554 = vmatpush1.msra.mxu0 %v2553
          %2555 = vmatprep.subr.mxu0 0.0
          %v2556 = vand.u32 %v1831, 4294901760
          %2557 = vmatpush1.msra.mxu0 %v2556
          %2558 = vmatprep.subr.mxu0 0.0
          %v2559 = vand.u32 %v1832, 4294901760
          %2560 = vmatpush1.msra.mxu0 %v2559
          %2561 = vmatprep.subr.mxu0 0.0
          %v2562 = vand.u32 %v1833, 4294901760
          %2563 = vmatpush1.msra.mxu0 %v2562
          %2564 = vmatprep.subr.mxu0 0.0
          %v2565 = vand.u32 %v1834, 4294901760
          %2566 = vmatpush1.msra.mxu0 %v2565
          %2567 = vmatprep.subr.mxu0 0.0
          %v2568 = vand.u32 %v1835, 4294901760
          %2569 = vmatpush1.msra.mxu0 %v2568
          %2570 = vmatprep.subr.mxu0 0.0
          %v2571 = vand.u32 %v1836, 4294901760
          %2572 = vmatpush1.msra.mxu0 %v2571
          %2573 = vmatprep.subr.mxu0 0.0
          %v2574 = vand.u32 %v1837, 4294901760
          %2575 = vmatpush1.msra.mxu0 %v2574
          %2576 = vmatprep.subr.mxu0 0.0
          %v2577 = vand.u32 %v1838, 4294901760
          %2578 = vmatpush1.msra.mxu0 %v2577
          %2579 = vmatprep.subr.mxu0 0.0
          %v2580 = vand.u32 %v1839, 4294901760
          %2581 = vmatpush1.msra.mxu0 %v2580
          %2582 = vmatprep.subr.mxu0 0.0
          %v2583 = vand.u32 %v1840, 4294901760
          %2584 = vmatpush1.msra.mxu0 %v2583
          %2585 = vmatprep.subr.mxu0 0.0
          %v2586 = vand.u32 %v1841, 4294901760
          %2587 = vmatpush1.msra.mxu0 %v2586
          %2588 = vmatprep.subr.mxu0 0.0
          %2589 = vmatpush1.msra.mxu0 0.0
          %2590 = vmatprep.subr.mxu0 0.0
          %2591 = vmatpush1.msra.mxu0 0.0
          %2592 = vmatprep.subr.mxu0 0.0
          %2593 = vmatpush1.msra.mxu0 0.0
          %2594 = vmatprep.subr.mxu0 0.0
          %2595 = vmatpush1.msra.mxu0 0.0
          %2596 = vmatprep.subr.mxu0 0.0
          %2597 = vmatpush1.msra.mxu0 0.0
          %2598 = vmatprep.subr.mxu0 0.0
          %2599 = vmatpush1.msra.mxu0 0.0
          %2600 = vmatprep.subr.mxu0 0.0
          %2601 = vmatpush1.msra.mxu0 0.0
          %2602 = vmatprep.subr.mxu0 0.0
          %2603 = vmatpush1.msra.mxu0 0.0
          %2604 = vmatprep.subr.mxu0 0.0
          %2605 = vmatpush1.msra.mxu0 0.0
          %2606 = vmatprep.subr.mxu0 0.0
          %2607 = vmatpush1.msra.mxu0 0.0
          %2608 = vmatprep.subr.mxu0 0.0
          %2609 = vmatpush1.msra.mxu0 0.0
          %2610 = vmatprep.subr.mxu0 0.0
          %2611 = vmatpush1.msra.mxu0 0.0
          %2612 = vmatprep.subr.mxu0 0.0
          %2613 = vmatpush1.msra.mxu0 0.0
          %2614 = vmatprep.subr.mxu0 0.0
          %2615 = vmatpush1.msra.mxu0 0.0
          %2616 = vmatprep.subr.mxu0 0.0
          %2617 = vmatpush1.msra.mxu0 0.0
          %2618 = vmatprep.subr.mxu0 0.0
          %2619 = vmatpush1.msra.mxu0 0.0
          %2620 = vmatprep.mubr.f32.mxu0 0.0
          %v2621 = vand.u32 %v1810, 4294901760
          %v2622 = vsub.f32 %v1810, %v2621
          %v2623 = vand.u32 %v2622, 4294901760
          %2624 = vmatmul.mubr.f32.gmra.mrb[0].mxu0 %v2623
          %v2625 = vpop.f32.mrb[0].mxu0
          %v2626 = vadd.f32 %v2432, %v2625
          %v2627 = vpop.f32.mrb[0].mxu0
          %2628 = vmatprep.mubr.f32.mxu0 0.0
          %v2629 = vand.u32 %v1811, 4294901760
          %v2630 = vsub.f32 %v1811, %v2629
          %v2631 = vand.u32 %v2630, 4294901760
          %2632 = vmatmul.mubr.f32.gmra.mrb[0].mxu0 %v2631
          %v2633 = vpop.f32.mrb[0].mxu0
          %v2634 = vadd.f32 %v2439, %v2633
          %v2635 = vpop.f32.mrb[0].mxu0
          %2636 = vmatprep.mubr.f32.mxu0 0.0
          %v2637 = vand.u32 %v1812, 4294901760
          %v2638 = vsub.f32 %v1812, %v2637
          %v2639 = vand.u32 %v2638, 4294901760
          %2640 = vmatmul.mubr.f32.gmra.mrb[0].mxu0 %v2639
          %v2641 = vpop.f32.mrb[0].mxu0
          %v2642 = vadd.f32 %v2446, %v2641
          %v2643 = vpop.f32.mrb[0].mxu0
          %2644 = vmatprep.mubr.f32.mxu0 0.0
          %v2645 = vand.u32 %v1813, 4294901760
          %v2646 = vsub.f32 %v1813, %v2645
          %v2647 = vand.u32 %v2646, 4294901760
          %2648 = vmatmul.mubr.f32.gmra.mrb[0].mxu0 %v2647
          %v2649 = vpop.f32.mrb[0].mxu0
          %v2650 = vadd.f32 %v2453, %v2649
          %v2651 = vpop.f32.mrb[0].mxu0
          %2652 = vmatprep.mubr.f32.mxu0 0.0
          %v2653 = vand.u32 %v1814, 4294901760
          %v2654 = vsub.f32 %v1814, %v2653
          %v2655 = vand.u32 %v2654, 4294901760
          %2656 = vmatmul.mubr.f32.gmra.mrb[0].mxu0 %v2655
          %v2657 = vpop.f32.mrb[0].mxu0
          %v2658 = vadd.f32 %v2460, %v2657
          %v2659 = vpop.f32.mrb[0].mxu0
          %2660 = vmatprep.mubr.f32.mxu0 0.0
          %v2661 = vand.u32 %v1815, 4294901760
          %v2662 = vsub.f32 %v1815, %v2661
          %v2663 = vand.u32 %v2662, 4294901760
          %2664 = vmatmul.mubr.f32.gmra.mrb[0].mxu0 %v2663
          %v2665 = vpop.f32.mrb[0].mxu0
          %v2666 = vadd.f32 %v2467, %v2665
          %v2667 = vpop.f32.mrb[0].mxu0
          %2668 = vmatprep.mubr.f32.mxu0 0.0
          %v2669 = vand.u32 %v1816, 4294901760
          %v2670 = vsub.f32 %v1816, %v2669
          %v2671 = vand.u32 %v2670, 4294901760
          %2672 = vmatmul.mubr.f32.gmra.mrb[0].mxu0 %v2671
          %v2673 = vpop.f32.mrb[0].mxu0
          %v2674 = vadd.f32 %v2474, %v2673
          %v2675 = vpop.f32.mrb[0].mxu0
          %2676 = vmatprep.mubr.f32.mxu0 0.0
          %v2677 = vand.u32 %v1817, 4294901760
          %v2678 = vsub.f32 %v1817, %v2677
          %v2679 = vand.u32 %v2678, 4294901760
          %2680 = vmatmul.mubr.f32.gmra.mrb[0].mxu0 %v2679
          %v2681 = vpop.f32.mrb[0].mxu0
          %v2682 = vadd.f32 %v2481, %v2681
          %v2683 = vpop.f32.mrb[0].mxu0
          %2684 = vmatprep.mubr.f32.mxu0 0.0
          %v2685 = vand.u32 %v1818, 4294901760
          %v2686 = vsub.f32 %v1818, %v2685
          %v2687 = vand.u32 %v2686, 4294901760
          %2688 = vmatmul.mubr.f32.gmra.mrb[0].mxu0 %v2687
          %v2689 = vpop.f32.mrb[0].mxu0
          %v2690 = vadd.f32 %v2488, %v2689
          %v2691 = vpop.f32.mrb[0].mxu0
          %2692 = vmatprep.mubr.f32.mxu0 0.0
          %v2693 = vand.u32 %v1819, 4294901760
          %v2694 = vsub.f32 %v1819, %v2693
          %v2695 = vand.u32 %v2694, 4294901760
          %2696 = vmatmul.mubr.f32.gmra.mrb[0].mxu0 %v2695
          %v2697 = vpop.f32.mrb[0].mxu0
          %v2698 = vadd.f32 %v2495, %v2697
          %v2699 = vpop.f32.mrb[0].mxu0
          %2700 = vmatprep.mubr.f32.mxu0 0.0
          %v2701 = vand.u32 %v1820, 4294901760
          %v2702 = vsub.f32 %v1820, %v2701
          %v2703 = vand.u32 %v2702, 4294901760
          %2704 = vmatmul.mubr.f32.gmra.mrb[0].mxu0 %v2703
          %v2705 = vpop.f32.mrb[0].mxu0
          %v2706 = vadd.f32 %v2502, %v2705
          %v2707 = vpop.f32.mrb[0].mxu0
          %2708 = vmatprep.mubr.f32.mxu0 0.0
          %v2709 = vand.u32 %v1821, 4294901760
          %v2710 = vsub.f32 %v1821, %v2709
          %v2711 = vand.u32 %v2710, 4294901760
          %2712 = vmatmul.mubr.f32.gmra.mrb[0].mxu0 %v2711
          %v2713 = vpop.f32.mrb[0].mxu0
          %v2714 = vadd.f32 %v2509, %v2713
          %v2715 = vpop.f32.mrb[0].mxu0
          %2716 = vmatprep.mubr.f32.mxu0 0.0
          %v2717 = vand.u32 %v1822, 4294901760
          %v2718 = vsub.f32 %v1822, %v2717
          %v2719 = vand.u32 %v2718, 4294901760
          %2720 = vmatmul.mubr.f32.gmra.mrb[0].mxu0 %v2719
          %v2721 = vpop.f32.mrb[0].mxu0
          %v2722 = vadd.f32 %v2516, %v2721
          %v2723 = vpop.f32.mrb[0].mxu0
          %2724 = vmatprep.mubr.f32.mxu0 0.0
          %v2725 = vand.u32 %v1823, 4294901760
          %v2726 = vsub.f32 %v1823, %v2725
          %v2727 = vand.u32 %v2726, 4294901760
          %2728 = vmatmul.mubr.f32.gmra.mrb[0].mxu0 %v2727
          %v2729 = vpop.f32.mrb[0].mxu0
          %v2730 = vadd.f32 %v2523, %v2729
          %v2731 = vpop.f32.mrb[0].mxu0
          %2732 = vmatprep.mubr.f32.mxu0 0.0
          %v2733 = vand.u32 %v1824, 4294901760
          %v2734 = vsub.f32 %v1824, %v2733
          %v2735 = vand.u32 %v2734, 4294901760
          %2736 = vmatmul.mubr.f32.gmra.mrb[0].mxu0 %v2735
          %v2737 = vpop.f32.mrb[0].mxu0
          %v2738 = vadd.f32 %v2530, %v2737
          %v2739 = vpop.f32.mrb[0].mxu0
          %2740 = vmatprep.mubr.f32.mxu0 0.0
          %v2741 = vand.u32 %v1825, 4294901760
          %v2742 = vsub.f32 %v1825, %v2741
          %v2743 = vand.u32 %v2742, 4294901760
          %2744 = vmatmul.mubr.f32.gmra.mrb[0].mxu0 %v2743
          %v2745 = vpop.f32.mrb[0].mxu0
          %v2746 = vadd.f32 %v2537, %v2745
          %v2747 = vpop.f32.mrb[0].mxu0
          %2748 = vdwg.mxu0
          %2749 = vmatprep.subr.mxu0 0.0
          %v2750 = vand.u32 %v1826, 4294901760
          %v2751 = vsub.f32 %v1826, %v2750
          %v2752 = vand.u32 %v2751, 4294901760
          %2753 = vmatpush1.msra.mxu0 %v2752
          %2754 = vmatprep.subr.mxu0 0.0
          %v2755 = vand.u32 %v1827, 4294901760
          %v2756 = vsub.f32 %v1827, %v2755
          %v2757 = vand.u32 %v2756, 4294901760
          %2758 = vmatpush1.msra.mxu0 %v2757
          %2759 = vmatprep.subr.mxu0 0.0
          %v2760 = vand.u32 %v1828, 4294901760
          %v2761 = vsub.f32 %v1828, %v2760
          %v2762 = vand.u32 %v2761, 4294901760
          %2763 = vmatpush1.msra.mxu0 %v2762
          %2764 = vmatprep.subr.mxu0 0.0
          %v2765 = vand.u32 %v1829, 4294901760
          %v2766 = vsub.f32 %v1829, %v2765
          %v2767 = vand.u32 %v2766, 4294901760
          %2768 = vmatpush1.msra.mxu0 %v2767
          %2769 = vmatprep.subr.mxu0 0.0
          %v2770 = vand.u32 %v1830, 4294901760
          %v2771 = vsub.f32 %v1830, %v2770
          %v2772 = vand.u32 %v2771, 4294901760
          %2773 = vmatpush1.msra.mxu0 %v2772
          %2774 = vmatprep.subr.mxu0 0.0
          %v2775 = vand.u32 %v1831, 4294901760
          %v2776 = vsub.f32 %v1831, %v2775
          %v2777 = vand.u32 %v2776, 4294901760
          %2778 = vmatpush1.msra.mxu0 %v2777
          %2779 = vmatprep.subr.mxu0 0.0
          %v2780 = vand.u32 %v1832, 4294901760
          %v2781 = vsub.f32 %v1832, %v2780
          %v2782 = vand.u32 %v2781, 4294901760
          %2783 = vmatpush1.msra.mxu0 %v2782
          %2784 = vmatprep.subr.mxu0 0.0
          %v2785 = vand.u32 %v1833, 4294901760
          %v2786 = vsub.f32 %v1833, %v2785
          %v2787 = vand.u32 %v2786, 4294901760
          %2788 = vmatpush1.msra.mxu0 %v2787
          %2789 = vmatprep.subr.mxu0 0.0
          %v2790 = vand.u32 %v1834, 4294901760
          %v2791 = vsub.f32 %v1834, %v2790
          %v2792 = vand.u32 %v2791, 4294901760
          %2793 = vmatpush1.msra.mxu0 %v2792
          %2794 = vmatprep.subr.mxu0 0.0
          %v2795 = vand.u32 %v1835, 4294901760
          %v2796 = vsub.f32 %v1835, %v2795
          %v2797 = vand.u32 %v2796, 4294901760
          %2798 = vmatpush1.msra.mxu0 %v2797
          %2799 = vmatprep.subr.mxu0 0.0
          %v2800 = vand.u32 %v1836, 4294901760
          %v2801 = vsub.f32 %v1836, %v2800
          %v2802 = vand.u32 %v2801, 4294901760
          %2803 = vmatpush1.msra.mxu0 %v2802
          %2804 = vmatprep.subr.mxu0 0.0
          %v2805 = vand.u32 %v1837, 4294901760
          %v2806 = vsub.f32 %v1837, %v2805
          %v2807 = vand.u32 %v2806, 4294901760
          %2808 = vmatpush1.msra.mxu0 %v2807
          %2809 = vmatprep.subr.mxu0 0.0
          %v2810 = vand.u32 %v1838, 4294901760
          %v2811 = vsub.f32 %v1838, %v2810
          %v2812 = vand.u32 %v2811, 4294901760
          %2813 = vmatpush1.msra.mxu0 %v2812
          %2814 = vmatprep.subr.mxu0 0.0
          %v2815 = vand.u32 %v1839, 4294901760
          %v2816 = vsub.f32 %v1839, %v2815
          %v2817 = vand.u32 %v2816, 4294901760
          %2818 = vmatpush1.msra.mxu0 %v2817
          %2819 = vmatprep.subr.mxu0 0.0
          %v2820 = vand.u32 %v1840, 4294901760
          %v2821 = vsub.f32 %v1840, %v2820
          %v2822 = vand.u32 %v2821, 4294901760
          %2823 = vmatpush1.msra.mxu0 %v2822
          %2824 = vmatprep.subr.mxu0 0.0
          %v2825 = vand.u32 %v1841, 4294901760
          %v2826 = vsub.f32 %v1841, %v2825
          %v2827 = vand.u32 %v2826, 4294901760
          %2828 = vmatpush1.msra.mxu0 %v2827
          %2829 = vmatprep.subr.mxu0 0.0
          %2830 = vmatpush1.msra.mxu0 0.0
          %2831 = vmatprep.subr.mxu0 0.0
          %2832 = vmatpush1.msra.mxu0 0.0
          %2833 = vmatprep.subr.mxu0 0.0
          %2834 = vmatpush1.msra.mxu0 0.0
          %2835 = vmatprep.subr.mxu0 0.0
          %2836 = vmatpush1.msra.mxu0 0.0
          %2837 = vmatprep.subr.mxu0 0.0
          %2838 = vmatpush1.msra.mxu0 0.0
          %2839 = vmatprep.subr.mxu0 0.0
          %2840 = vmatpush1.msra.mxu0 0.0
          %2841 = vmatprep.subr.mxu0 0.0
          %2842 = vmatpush1.msra.mxu0 0.0
          %2843 = vmatprep.subr.mxu0 0.0
          %2844 = vmatpush1.msra.mxu0 0.0
          %2845 = vmatprep.subr.mxu0 0.0
          %2846 = vmatpush1.msra.mxu0 0.0
          %2847 = vmatprep.subr.mxu0 0.0
          %2848 = vmatpush1.msra.mxu0 0.0
          %2849 = vmatprep.subr.mxu0 0.0
          %2850 = vmatpush1.msra.mxu0 0.0
          %2851 = vmatprep.subr.mxu0 0.0
          %2852 = vmatpush1.msra.mxu0 0.0
          %2853 = vmatprep.subr.mxu0 0.0
          %2854 = vmatpush1.msra.mxu0 0.0
          %2855 = vmatprep.subr.mxu0 0.0
          %2856 = vmatpush1.msra.mxu0 0.0
          %2857 = vmatprep.subr.mxu0 0.0
          %2858 = vmatpush1.msra.mxu0 0.0
          %2859 = vmatprep.subr.mxu0 0.0
          %2860 = vmatpush1.msra.mxu0 0.0
          %2861 = vmatprep.mubr.f32.mxu0 0.0
          %v2862 = vand.u32 %v1810, 4294901760
          %2863 = vmatmul.mubr.f32.gmra.mrb[0].mxu0 %v2862
          %v2864 = vpop.f32.mrb[0].mxu0
          %v2865 = vadd.f32 %v2626, %v2864
          %v2866 = vpop.f32.mrb[0].mxu0
          %2867 = vmatprep.mubr.f32.mxu0 0.0
          %v2868 = vand.u32 %v1811, 4294901760
          %2869 = vmatmul.mubr.f32.gmra.mrb[0].mxu0 %v2868
          %v2870 = vpop.f32.mrb[0].mxu0
          %v2871 = vadd.f32 %v2634, %v2870
          %v2872 = vpop.f32.mrb[0].mxu0
          %2873 = vmatprep.mubr.f32.mxu0 0.0
          %v2874 = vand.u32 %v1812, 4294901760
          %2875 = vmatmul.mubr.f32.gmra.mrb[0].mxu0 %v2874
          %v2876 = vpop.f32.mrb[0].mxu0
          %v2877 = vadd.f32 %v2642, %v2876
          %v2878 = vpop.f32.mrb[0].mxu0
          %2879 = vmatprep.mubr.f32.mxu0 0.0
          %v2880 = vand.u32 %v1813, 4294901760
          %2881 = vmatmul.mubr.f32.gmra.mrb[0].mxu0 %v2880
          %v2882 = vpop.f32.mrb[0].mxu0
          %v2883 = vadd.f32 %v2650, %v2882
          %v2884 = vpop.f32.mrb[0].mxu0
          %2885 = vmatprep.mubr.f32.mxu0 0.0
          %v2886 = vand.u32 %v1814, 4294901760
          %2887 = vmatmul.mubr.f32.gmra.mrb[0].mxu0 %v2886
          %v2888 = vpop.f32.mrb[0].mxu0
          %v2889 = vadd.f32 %v2658, %v2888
          %v2890 = vpop.f32.mrb[0].mxu0
          %2891 = vmatprep.mubr.f32.mxu0 0.0
          %v2892 = vand.u32 %v1815, 4294901760
          %2893 = vmatmul.mubr.f32.gmra.mrb[0].mxu0 %v2892
          %v2894 = vpop.f32.mrb[0].mxu0
          %v2895 = vadd.f32 %v2666, %v2894
          %v2896 = vpop.f32.mrb[0].mxu0
          %2897 = vmatprep.mubr.f32.mxu0 0.0
          %v2898 = vand.u32 %v1816, 4294901760
          %2899 = vmatmul.mubr.f32.gmra.mrb[0].mxu0 %v2898
          %v2900 = vpop.f32.mrb[0].mxu0
          %v2901 = vadd.f32 %v2674, %v2900
          %v2902 = vpop.f32.mrb[0].mxu0
          %2903 = vmatprep.mubr.f32.mxu0 0.0
          %v2904 = vand.u32 %v1817, 4294901760
          %2905 = vmatmul.mubr.f32.gmra.mrb[0].mxu0 %v2904
          %v2906 = vpop.f32.mrb[0].mxu0
          %v2907 = vadd.f32 %v2682, %v2906
          %v2908 = vpop.f32.mrb[0].mxu0
          %2909 = vmatprep.mubr.f32.mxu0 0.0
          %v2910 = vand.u32 %v1818, 4294901760
          %2911 = vmatmul.mubr.f32.gmra.mrb[0].mxu0 %v2910
          %v2912 = vpop.f32.mrb[0].mxu0
          %v2913 = vadd.f32 %v2690, %v2912
          %v2914 = vpop.f32.mrb[0].mxu0
          %2915 = vmatprep.mubr.f32.mxu0 0.0
          %v2916 = vand.u32 %v1819, 4294901760
          %2917 = vmatmul.mubr.f32.gmra.mrb[0].mxu0 %v2916
          %v2918 = vpop.f32.mrb[0].mxu0
          %v2919 = vadd.f32 %v2698, %v2918
          %v2920 = vpop.f32.mrb[0].mxu0
          %2921 = vmatprep.mubr.f32.mxu0 0.0
          %v2922 = vand.u32 %v1820, 4294901760
          %2923 = vmatmul.mubr.f32.gmra.mrb[0].mxu0 %v2922
          %v2924 = vpop.f32.mrb[0].mxu0
          %v2925 = vadd.f32 %v2706, %v2924
          %v2926 = vpop.f32.mrb[0].mxu0
          %2927 = vmatprep.mubr.f32.mxu0 0.0
          %v2928 = vand.u32 %v1821, 4294901760
          %2929 = vmatmul.mubr.f32.gmra.mrb[0].mxu0 %v2928
          %v2930 = vpop.f32.mrb[0].mxu0
          %v2931 = vadd.f32 %v2714, %v2930
          %v2932 = vpop.f32.mrb[0].mxu0
          %2933 = vmatprep.mubr.f32.mxu0 0.0
          %v2934 = vand.u32 %v1822, 4294901760
          %2935 = vmatmul.mubr.f32.gmra.mrb[0].mxu0 %v2934
          %v2936 = vpop.f32.mrb[0].mxu0
          %v2937 = vadd.f32 %v2722, %v2936
          %v2938 = vpop.f32.mrb[0].mxu0
          %2939 = vmatprep.mubr.f32.mxu0 0.0
          %v2940 = vand.u32 %v1823, 4294901760
          %2941 = vmatmul.mubr.f32.gmra.mrb[0].mxu0 %v2940
          %v2942 = vpop.f32.mrb[0].mxu0
          %v2943 = vadd.f32 %v2730, %v2942
          %v2944 = vpop.f32.mrb[0].mxu0
          %2945 = vmatprep.mubr.f32.mxu0 0.0
          %v2946 = vand.u32 %v1824, 4294901760
          %2947 = vmatmul.mubr.f32.gmra.mrb[0].mxu0 %v2946
          %v2948 = vpop.f32.mrb[0].mxu0
          %v2949 = vadd.f32 %v2738, %v2948
          %v2950 = vpop.f32.mrb[0].mxu0
          %2951 = vmatprep.mubr.f32.mxu0 0.0
          %v2952 = vand.u32 %v1825, 4294901760
          %2953 = vmatmul.mubr.f32.gmra.mrb[0].mxu0 %v2952
          %v2954 = vpop.f32.mrb[0].mxu0
          %v2955 = vadd.f32 %v2746, %v2954
          %v2956 = vpop.f32.mrb[0].mxu0
          %2957 = vdwg.mxu0
          %2958 = vmatprep.subr.mxu0 0.0
          %v2959 = vand.u32 %v1826, 4294901760
          %2960 = vmatpush1.msra.mxu0 %v2959
          %2961 = vmatprep.subr.mxu0 0.0
          %v2962 = vand.u32 %v1827, 4294901760
          %2963 = vmatpush1.msra.mxu0 %v2962
          %2964 = vmatprep.subr.mxu0 0.0
          %v2965 = vand.u32 %v1828, 4294901760
          %2966 = vmatpush1.msra.mxu0 %v2965
          %2967 = vmatprep.subr.mxu0 0.0
          %v2968 = vand.u32 %v1829, 4294901760
          %2969 = vmatpush1.msra.mxu0 %v2968
          %2970 = vmatprep.subr.mxu0 0.0
          %v2971 = vand.u32 %v1830, 4294901760
          %2972 = vmatpush1.msra.mxu0 %v2971
          %2973 = vmatprep.subr.mxu0 0.0
          %v2974 = vand.u32 %v1831, 4294901760
          %2975 = vmatpush1.msra.mxu0 %v2974
          %2976 = vmatprep.subr.mxu0 0.0
          %v2977 = vand.u32 %v1832, 4294901760
          %2978 = vmatpush1.msra.mxu0 %v2977
          %2979 = vmatprep.subr.mxu0 0.0
          %v2980 = vand.u32 %v1833, 4294901760
          %2981 = vmatpush1.msra.mxu0 %v2980
          %2982 = vmatprep.subr.mxu0 0.0
          %v2983 = vand.u32 %v1834, 4294901760
          %2984 = vmatpush1.msra.mxu0 %v2983
          %2985 = vmatprep.subr.mxu0 0.0
          %v2986 = vand.u32 %v1835, 4294901760
          %2987 = vmatpush1.msra.mxu0 %v2986
          %2988 = vmatprep.subr.mxu0 0.0
          %v2989 = vand.u32 %v1836, 4294901760
          %2990 = vmatpush1.msra.mxu0 %v2989
          %2991 = vmatprep.subr.mxu0 0.0
          %v2992 = vand.u32 %v1837, 4294901760
          %2993 = vmatpush1.msra.mxu0 %v2992
          %2994 = vmatprep.subr.mxu0 0.0
          %v2995 = vand.u32 %v1838, 4294901760
          %2996 = vmatpush1.msra.mxu0 %v2995
          %2997 = vmatprep.subr.mxu0 0.0
          %v2998 = vand.u32 %v1839, 4294901760
          %2999 = vmatpush1.msra.mxu0 %v2998
          %3000 = vmatprep.subr.mxu0 0.0
          %v3001 = vand.u32 %v1840, 4294901760
          %3002 = vmatpush1.msra.mxu0 %v3001
          %3003 = vmatprep.subr.mxu0 0.0
          %v3004 = vand.u32 %v1841, 4294901760
          %3005 = vmatpush1.msra.mxu0 %v3004
          %3006 = vmatprep.subr.mxu0 0.0
          %3007 = vmatpush1.msra.mxu0 0.0
          %3008 = vmatprep.subr.mxu0 0.0
          %3009 = vmatpush1.msra.mxu0 0.0
          %3010 = vmatprep.subr.mxu0 0.0
          %3011 = vmatpush1.msra.mxu0 0.0
          %3012 = vmatprep.subr.mxu0 0.0
          %3013 = vmatpush1.msra.mxu0 0.0
          %3014 = vmatprep.subr.mxu0 0.0
          %3015 = vmatpush1.msra.mxu0 0.0
          %3016 = vmatprep.subr.mxu0 0.0
          %3017 = vmatpush1.msra.mxu0 0.0
          %3018 = vmatprep.subr.mxu0 0.0
          %3019 = vmatpush1.msra.mxu0 0.0
          %3020 = vmatprep.subr.mxu0 0.0
          %3021 = vmatpush1.msra.mxu0 0.0
          %3022 = vmatprep.subr.mxu0 0.0
          %3023 = vmatpush1.msra.mxu0 0.0
          %3024 = vmatprep.subr.mxu0 0.0
          %3025 = vmatpush1.msra.mxu0 0.0
          %3026 = vmatprep.subr.mxu0 0.0
          %3027 = vmatpush1.msra.mxu0 0.0
          %3028 = vmatprep.subr.mxu0 0.0
          %3029 = vmatpush1.msra.mxu0 0.0
          %3030 = vmatprep.subr.mxu0 0.0
          %3031 = vmatpush1.msra.mxu0 0.0
          %3032 = vmatprep.subr.mxu0 0.0
          %3033 = vmatpush1.msra.mxu0 0.0
          %3034 = vmatprep.subr.mxu0 0.0
          %3035 = vmatpush1.msra.mxu0 0.0
          %3036 = vmatprep.subr.mxu0 0.0
          %3037 = vmatpush1.msra.mxu0 0.0
          %3038 = vmatprep.mubr.f32.mxu0 0.0
          %v3039 = vand.u32 %v1810, 4294901760
          %3040 = vmatmul.mubr.f32.gmra.mrb[0].mxu0 %v3039
          %v3041 = vpop.f32.mrb[0].mxu0
          %v3042 = vadd.f32 %v2865, %v3041
          %v3043 = vpop.f32.mrb[0].mxu0
          %3044 = vmatprep.mubr.f32.mxu0 0.0
          %v3045 = vand.u32 %v1811, 4294901760
          %3046 = vmatmul.mubr.f32.gmra.mrb[0].mxu0 %v3045
          %v3047 = vpop.f32.mrb[0].mxu0
          %v3048 = vadd.f32 %v2871, %v3047
          %v3049 = vpop.f32.mrb[0].mxu0
          %3050 = vmatprep.mubr.f32.mxu0 0.0
          %v3051 = vand.u32 %v1812, 4294901760
          %3052 = vmatmul.mubr.f32.gmra.mrb[0].mxu0 %v3051
          %v3053 = vpop.f32.mrb[0].mxu0
          %v3054 = vadd.f32 %v2877, %v3053
          %v3055 = vpop.f32.mrb[0].mxu0
          %3056 = vmatprep.mubr.f32.mxu0 0.0
          %v3057 = vand.u32 %v1813, 4294901760
          %3058 = vmatmul.mubr.f32.gmra.mrb[0].mxu0 %v3057
          %v3059 = vpop.f32.mrb[0].mxu0
          %v3060 = vadd.f32 %v2883, %v3059
          %v3061 = vpop.f32.mrb[0].mxu0
          %3062 = vmatprep.mubr.f32.mxu0 0.0
          %v3063 = vand.u32 %v1814, 4294901760
          %3064 = vmatmul.mubr.f32.gmra.mrb[0].mxu0 %v3063
          %v3065 = vpop.f32.mrb[0].mxu0
          %v3066 = vadd.f32 %v2889, %v3065
          %v3067 = vpop.f32.mrb[0].mxu0
          %3068 = vmatprep.mubr.f32.mxu0 0.0
          %v3069 = vand.u32 %v1815, 4294901760
          %3070 = vmatmul.mubr.f32.gmra.mrb[0].mxu0 %v3069
          %v3071 = vpop.f32.mrb[0].mxu0
          %v3072 = vadd.f32 %v2895, %v3071
          %v3073 = vpop.f32.mrb[0].mxu0
          %3074 = vmatprep.mubr.f32.mxu0 0.0
          %v3075 = vand.u32 %v1816, 4294901760
          %3076 = vmatmul.mubr.f32.gmra.mrb[0].mxu0 %v3075
          %v3077 = vpop.f32.mrb[0].mxu0
          %v3078 = vadd.f32 %v2901, %v3077
          %v3079 = vpop.f32.mrb[0].mxu0
          %3080 = vmatprep.mubr.f32.mxu0 0.0
          %v3081 = vand.u32 %v1817, 4294901760
          %3082 = vmatmul.mubr.f32.gmra.mrb[0].mxu0 %v3081
          %v3083 = vpop.f32.mrb[0].mxu0
          %v3084 = vadd.f32 %v2907, %v3083
          %v3085 = vpop.f32.mrb[0].mxu0
          %3086 = vmatprep.mubr.f32.mxu0 0.0
          %v3087 = vand.u32 %v1818, 4294901760
          %3088 = vmatmul.mubr.f32.gmra.mrb[0].mxu0 %v3087
          %v3089 = vpop.f32.mrb[0].mxu0
          %v3090 = vadd.f32 %v2913, %v3089
          %v3091 = vpop.f32.mrb[0].mxu0
          %3092 = vmatprep.mubr.f32.mxu0 0.0
          %v3093 = vand.u32 %v1819, 4294901760
          %3094 = vmatmul.mubr.f32.gmra.mrb[0].mxu0 %v3093
          %v3095 = vpop.f32.mrb[0].mxu0
          %v3096 = vadd.f32 %v2919, %v3095
          %v3097 = vpop.f32.mrb[0].mxu0
          %3098 = vmatprep.mubr.f32.mxu0 0.0
          %v3099 = vand.u32 %v1820, 4294901760
          %3100 = vmatmul.mubr.f32.gmra.mrb[0].mxu0 %v3099
          %v3101 = vpop.f32.mrb[0].mxu0
          %v3102 = vadd.f32 %v2925, %v3101
          %v3103 = vpop.f32.mrb[0].mxu0
          %3104 = vmatprep.mubr.f32.mxu0 0.0
          %v3105 = vand.u32 %v1821, 4294901760
          %3106 = vmatmul.mubr.f32.gmra.mrb[0].mxu0 %v3105
          %v3107 = vpop.f32.mrb[0].mxu0
          %v3108 = vadd.f32 %v2931, %v3107
          %v3109 = vpop.f32.mrb[0].mxu0
          %3110 = vmatprep.mubr.f32.mxu0 0.0
          %v3111 = vand.u32 %v1822, 4294901760
          %3112 = vmatmul.mubr.f32.gmra.mrb[0].mxu0 %v3111
          %v3113 = vpop.f32.mrb[0].mxu0
          %v3114 = vadd.f32 %v2937, %v3113
          %v3115 = vpop.f32.mrb[0].mxu0
          %3116 = vmatprep.mubr.f32.mxu0 0.0
          %v3117 = vand.u32 %v1823, 4294901760
          %3118 = vmatmul.mubr.f32.gmra.mrb[0].mxu0 %v3117
          %v3119 = vpop.f32.mrb[0].mxu0
          %v3120 = vadd.f32 %v2943, %v3119
          %v3121 = vpop.f32.mrb[0].mxu0
          %3122 = vmatprep.mubr.f32.mxu0 0.0
          %v3123 = vand.u32 %v1824, 4294901760
          %3124 = vmatmul.mubr.f32.gmra.mrb[0].mxu0 %v3123
          %v3125 = vpop.f32.mrb[0].mxu0
          %v3126 = vadd.f32 %v2949, %v3125
          %v3127 = vpop.f32.mrb[0].mxu0
          %3128 = vmatprep.mubr.f32.mxu0 0.0
          %v3129 = vand.u32 %v1825, 4294901760
          %3130 = vmatmul.mubr.f32.gmra.mrb[0].mxu0 %v3129
          %v3131 = vpop.f32.mrb[0].mxu0
          %v3132 = vadd.f32 %v2955, %v3131
          %v3133 = vpop.f32.mrb[0].mxu0
          %3134 = vdwg.mxu0
          %v3135 = vmax.f32 %v3042, 0.0
          %v3136 = vmax.f32 %v3048, 0.0
          %v3137 = vmax.f32 %v3054, 0.0
          %v3138 = vmax.f32 %v3060, 0.0
          %v3139 = vmax.f32 %v3066, 0.0
          %v3140 = vmax.f32 %v3072, 0.0
          %v3141 = vmax.f32 %v3078, 0.0
          %v3142 = vmax.f32 %v3084, 0.0
          %v3143 = vmax.f32 %v3090, 0.0
          %v3144 = vmax.f32 %v3096, 0.0
          %v3145 = vmax.f32 %v3102, 0.0
          %v3146 = vmax.f32 %v3108, 0.0
          %v3147 = vmax.f32 %v3114, 0.0
          %v3148 = vmax.f32 %v3120, 0.0
          %v3149 = vmax.f32 %v3126, 0.0
          %v3150 = vmax.f32 %v3132, 0.0
          %3151 = vst [vmem:[%s414] sm:$0xff] %v3135
          %3152 = vst [vmem:[%s414 + $0x8] sm:$0xff] %v3136
          %3153 = vst [vmem:[%s414 + $0x10] sm:$0xff] %v3137
          %3154 = vst [vmem:[%s414 + $0x18] sm:$0xff] %v3138
          %3155 = vst [vmem:[%s414 + $0x20] sm:$0xff] %v3139
          %3156 = vst [vmem:[%s414 + $0x28] sm:$0xff] %v3140
          %3157 = vst [vmem:[%s414 + $0x30] sm:$0xff] %v3141
          %3158 = vst [vmem:[%s414 + $0x38] sm:$0xff] %v3142
          %3159 = vst [vmem:[%s414 + $0x40] sm:$0xff] %v3143
          %3160 = vst [vmem:[%s414 + $0x48] sm:$0xff] %v3144
          %3161 = vst [vmem:[%s414 + $0x50] sm:$0xff] %v3145
          %3162 = vst [vmem:[%s414 + $0x58] sm:$0xff] %v3146
          %3163 = vst [vmem:[%s414 + $0x60] sm:$0xff] %v3147
          %3164 = vst [vmem:[%s414 + $0x68] sm:$0xff] %v3148
          %3165 = vst [vmem:[%s414 + $0x70] sm:$0xff] %v3149
          %3166 = vst [vmem:[%s414 + $0x78] sm:$0xff] %v3150
          %v3167 = vld [vmem:[%s408] sm:$0xff]
          %v3168 = vld [vmem:[%s408 + $0x8] sm:$0xff]
          %v3169 = vld [vmem:[%s408 + $0x10] sm:$0xff]
          %v3170 = vld [vmem:[%s408 + $0x18] sm:$0xff]
          %v3171 = vld [vmem:[%s408 + $0x20] sm:$0xff]
          %v3172 = vld [vmem:[%s408 + $0x28] sm:$0xff]
          %v3173 = vld [vmem:[%s408 + $0x30] sm:$0xff]
          %v3174 = vld [vmem:[%s408 + $0x38] sm:$0xff]
          %v3175 = vld [vmem:[%s408 + $0x40] sm:$0xff]
          %v3176 = vld [vmem:[%s408 + $0x48] sm:$0xff]
          %v3177 = vld [vmem:[%s408 + $0x50] sm:$0xff]
          %v3178 = vld [vmem:[%s408 + $0x58] sm:$0xff]
          %v3179 = vld [vmem:[%s408 + $0x60] sm:$0xff]
          %v3180 = vld [vmem:[%s408 + $0x68] sm:$0xff]
          %v3181 = vld [vmem:[%s408 + $0x70] sm:$0xff]
          %v3182 = vld [vmem:[%s408 + $0x78] sm:$0xff]
          %3184 = vset.pattern.permute.xlu0 0
          %3185 = vperm.xlu0 %3184, %v3167
          %v3186 = vpop.permute.xlu0 %3185
          %3189 = vset.pattern.permute.xlu0 0
          %3190 = vperm.xlu0 %3189, %v3168
          %v3191 = vpop.permute.xlu0 %3190
          %3194 = vset.pattern.permute.xlu0 0
          %3195 = vperm.xlu0 %3194, %v3169
          %v3196 = vpop.permute.xlu0 %3195
          %3199 = vset.pattern.permute.xlu0 0
          %3200 = vperm.xlu0 %3199, %v3170
          %v3201 = vpop.permute.xlu0 %3200
          %3204 = vset.pattern.permute.xlu0 0
          %3205 = vperm.xlu0 %3204, %v3171
          %v3206 = vpop.permute.xlu0 %3205
          %3209 = vset.pattern.permute.xlu0 0
          %3210 = vperm.xlu0 %3209, %v3172
          %v3211 = vpop.permute.xlu0 %3210
          %3214 = vset.pattern.permute.xlu0 0
          %3215 = vperm.xlu0 %3214, %v3173
          %v3216 = vpop.permute.xlu0 %3215
          %3219 = vset.pattern.permute.xlu0 0
          %3220 = vperm.xlu0 %3219, %v3174
          %v3221 = vpop.permute.xlu0 %3220
          %3224 = vset.pattern.permute.xlu0 0
          %3225 = vperm.xlu0 %3224, %v3175
          %v3226 = vpop.permute.xlu0 %3225
          %3229 = vset.pattern.permute.xlu0 0
          %3230 = vperm.xlu0 %3229, %v3176
          %v3231 = vpop.permute.xlu0 %3230
          %3234 = vset.pattern.permute.xlu0 0
          %3235 = vperm.xlu0 %3234, %v3177
          %v3236 = vpop.permute.xlu0 %3235
          %3239 = vset.pattern.permute.xlu0 0
          %3240 = vperm.xlu0 %3239, %v3178
          %v3241 = vpop.permute.xlu0 %3240
          %3244 = vset.pattern.permute.xlu0 0
          %3245 = vperm.xlu0 %3244, %v3179
          %v3246 = vpop.permute.xlu0 %3245
          %3249 = vset.pattern.permute.xlu0 0
          %3250 = vperm.xlu0 %3249, %v3180
          %v3251 = vpop.permute.xlu0 %3250
          %3254 = vset.pattern.permute.xlu0 0
          %3255 = vperm.xlu0 %3254, %v3181
          %v3256 = vpop.permute.xlu0 %3255
          %3259 = vset.pattern.permute.xlu0 0
          %3260 = vperm.xlu0 %3259, %v3182
          %v3261 = vpop.permute.xlu0 %3260
          %v3263 = vmul.f32 %v3135, %v3186
          %v3264 = vmul.f32 %v3136, %v3191
          %v3265 = vmul.f32 %v3137, %v3196
          %v3266 = vmul.f32 %v3138, %v3201
          %v3267 = vmul.f32 %v3139, %v3206
          %v3268 = vmul.f32 %v3140, %v3211
          %v3269 = vmul.f32 %v3141, %v3216
          %v3270 = vmul.f32 %v3142, %v3221
          %v3271 = vmul.f32 %v3143, %v3226
          %v3272 = vmul.f32 %v3144, %v3231
          %v3273 = vmul.f32 %v3145, %v3236
          %v3274 = vmul.f32 %v3146, %v3241
          %v3275 = vmul.f32 %v3147, %v3246
          %v3276 = vmul.f32 %v3148, %v3251
          %v3277 = vmul.f32 %v3149, %v3256
          %v3278 = vmul.f32 %v3150, %v3261
          %v3279 = vadd.f32 %v3263, %v3264
          %v3280 = vadd.f32 %v3279, %v3265
          %v3281 = vadd.f32 %v3280, %v3266
          %v3282 = vadd.f32 %v3281, %v3267
          %v3283 = vadd.f32 %v3282, %v3268
          %v3284 = vadd.f32 %v3283, %v3269
          %v3285 = vadd.f32 %v3284, %v3270
          %v3286 = vadd.f32 %v3285, %v3271
          %v3287 = vadd.f32 %v3286, %v3272
          %v3288 = vadd.f32 %v3287, %v3273
          %v3289 = vadd.f32 %v3288, %v3274
          %v3290 = vadd.f32 %v3289, %v3275
          %v3291 = vadd.f32 %v3290, %v3276
          %v3292 = vadd.f32 %v3291, %v3277
          %v3293 = vadd.f32 %v3292, %v3278
          %v3294 = vrot.slane %v3293, 4
          %v3295 = vadd.f32 %v3293, %v3294
          %v3296 = vrot.slane %v3295, 2
          %v3297 = vadd.f32 %v3295, %v3296
          %v3298 = vrot.slane %v3297, 1
          %v3299 = vadd.f32 %v3297, %v3298
          %v3300 = vmul.f32 %v3263, %v3263
          %v3301 = vmul.f32 %v3264, %v3264
          %v3302 = vmul.f32 %v3265, %v3265
          %v3303 = vmul.f32 %v3266, %v3266
          %v3304 = vmul.f32 %v3267, %v3267
          %v3305 = vmul.f32 %v3268, %v3268
          %v3306 = vmul.f32 %v3269, %v3269
          %v3307 = vmul.f32 %v3270, %v3270
          %v3308 = vmul.f32 %v3271, %v3271
          %v3309 = vmul.f32 %v3272, %v3272
          %v3310 = vmul.f32 %v3273, %v3273
          %v3311 = vmul.f32 %v3274, %v3274
          %v3312 = vmul.f32 %v3275, %v3275
          %v3313 = vmul.f32 %v3276, %v3276
          %v3314 = vmul.f32 %v3277, %v3277
          %v3315 = vmul.f32 %v3278, %v3278
          %v3316 = vadd.f32 %v3300, %v3301
          %v3317 = vadd.f32 %v3316, %v3302
          %v3318 = vadd.f32 %v3317, %v3303
          %v3319 = vadd.f32 %v3318, %v3304
          %v3320 = vadd.f32 %v3319, %v3305
          %v3321 = vadd.f32 %v3320, %v3306
          %v3322 = vadd.f32 %v3321, %v3307
          %v3323 = vadd.f32 %v3322, %v3308
          %v3324 = vadd.f32 %v3323, %v3309
          %v3325 = vadd.f32 %v3324, %v3310
          %v3326 = vadd.f32 %v3325, %v3311
          %v3327 = vadd.f32 %v3326, %v3312
          %v3328 = vadd.f32 %v3327, %v3313
          %v3329 = vadd.f32 %v3328, %v3314
          %v3330 = vadd.f32 %v3329, %v3315
          %v3331 = vrot.slane %v3330, 4
          %v3332 = vadd.f32 %v3330, %v3331
          %v3333 = vrot.slane %v3332, 2
          %v3334 = vadd.f32 %v3332, %v3333
          %v3335 = vrot.slane %v3334, 1
          %v3336 = vadd.f32 %v3334, %v3335
          %vm3337 = vcmask 1040384
          %v3338 = vsel %vm3337, %v3299, %v3336
          %3339 = vst [vmem:[%s419] sm:$0x3] %v3338
        $region86: #{_lambda_.3} parent=73 // pred_fallthru
          _
        %s3340 = smul.u32 16, %s22
        %p3341 = scmp.lt.s32.totalorder %s3340, 31
        %s3342 = scalar_select %p3341, %s3340, 31
        %s3343 = smul.addr %s3342, 8
        %s3344 = scalar_lea.vmem %s5, %s3343
        %p3345 = scmp.lt.s32.totalorder %s22, 1
        %s3346 = scalar_select %p3345, %s22, 1
        %s3347 = smul.addr %s3346, 2
        %s3348 = scalar_lea.vmem %s6, %s3347
        // Predicated region
        $region87: #{_lambda_.3} parent=73 // pred_check
          %p3349 = pneg %p170
        $region88: #{_lambda_.3} parent=73 // pred_check_branch
          %3351 = sbr.rel (%p3349) target = $region90
        $region89: #{_lambda_.3} parent=73 // pred_region
          %s3352 = smul.u32 16, %s22
        $region90: #{_lambda_.3} parent=73 // pred_fallthru
          _
        // Predicated region
        $region91: #{_lambda_.3} parent=73 // pred_check
          %p3353 = pneg %p196
        $region92: #{_lambda_.3} parent=73 // pred_check_branch
          %3355 = sbr.rel (%p3353) target = $region94
        $region93: #{_lambda_.3} parent=73 // pred_region
          _
        $region94: #{_lambda_.3} parent=73 // pred_fallthru
          _
      $region74: #{_lambda_.3} parent=5 // pred_fallthru
        _
      %p3356 = scmp.le.s32.totalorder 2, %s13
      // Predicated region
      $region95: #{_lambda_.3} parent=5 // pred_check
        %p3357 = pneg %p3356
      $region96: #{_lambda_.3} parent=5 // pred_check_branch
        %3359 = sbr.rel (%p3357) target = $region98
      $region97: #{_lambda_.3} parent=5 // pred_region
        %s3360 = ssub.s32 %s13, 2
        // Predicated region
        $region99: #{_lambda_.3} parent=97 // pred_check
          %p3361 = pneg %p176
        $region100: #{_lambda_.3} parent=97 // pred_check_branch
          %3363 = sbr.rel (%p3361) target = $region102
        $region101: #{_lambda_.3} parent=97 // pred_region
          %s3364 = smul.u32 16, %s24
          %p3365 = scmp.lt.s32.totalorder %s3364, 31
          %s3366 = scalar_select %p3365, %s3364, 31
          %s3367 = smul.addr %s3366, 8
          %s3368 = scalar_lea.vmem %s5, %s3367
        $region102: #{_lambda_.3} parent=97 // pred_fallthru
          _
        // Predicated region
        $region103: #{_lambda_.3} parent=97 // pred_check
          %p3369 = pneg %p202
        $region104: #{_lambda_.3} parent=97 // pred_check_branch
          %3371 = sbr.rel (%p3369) target = $region106
        $region105: #{_lambda_.3} parent=97 // pred_region
          %p3372 = scmp.lt.s32.totalorder %s24, 1
          %s3373 = scalar_select %p3372, %s24, 1
          %s3374 = smul.addr %s3373, 2
          %s3375 = scalar_lea.vmem %s6, %s3374
        $region106: #{_lambda_.3} parent=97 // pred_fallthru
          _
      $region98: #{_lambda_.3} parent=5 // pred_fallthru
        _
    $region6: #{_lambda_.3} parent=1 // loop_footer
      %s17 = sadd.s32 1, %s13
    $region7: #{_lambda_.3} parent=1 // loop_footer_branch
      %12 = sbr.rel target = $region3
    $region8: #{_lambda_.3} parent=1 // loop_exit
      _

</llo_original>
